<compile_context>
chip_gen: v6e
topology: v6e:2x2x1
jax: 0.10.0
libtpu: 0.0.40
codegen_flags: <defaults>
</compile_context>

<pallas_src>
import math

import jax
import jax.numpy as jnp
import numpy as np
from jax import lax
from jax.experimental import pallas as pl
from jax.experimental.pallas import tpu as pltpu


# ----------------------------- shared math ----------------------------------

def _layer_norm(x, g, b, eps=1e-5):
    mu = jnp.mean(x, axis=-1, keepdims=True)
    var = jnp.mean((x - mu) ** 2, axis=-1, keepdims=True)
    return (x - mu) * jax.lax.rsqrt(var + eps) * g + b


def _erf(x):
    # Abramowitz & Stegun 7.1.26 polynomial (max abs err ~1.5e-7).  Used inside
    # the kernel so exact-erf GELU (PyTorch nn.GELU default) only needs exp,
    # which has a guaranteed Mosaic/EUP lowering.
    a1, a2, a3, a4, a5 = (0.254829592, -0.284496736, 1.421413741,
                          -1.453152027, 1.061405429)
    p = 0.3275911
    ax = jnp.abs(x)
    t = 1.0 / (1.0 + p * ax)
    poly = ((((a5 * t + a4) * t + a3) * t + a2) * t + a1) * t
    y = 1.0 - poly * jnp.exp(-ax * ax)
    return jnp.where(x < 0, -y, y)


def _gelu_exact(x):
    # Matches PyTorch nn.GELU() (exact erf form), unlike jax.nn.gelu's default
    # tanh approximation.
    return 0.5 * x * (1.0 + _erf(x * (1.0 / math.sqrt(2.0))))


# ----------------------------- parameter packing -----------------------------

class _ParamSlab:
    """Packs every weight / bias / LN param into one (rows, width) f32 slab.

    Each entry starts at a sublane-aligned row (multiple of 8) and at lane 0,
    so in-kernel reads are plain static slices with no relayout.  One slab ==
    one DMA descriptor + one (8,128)-tiled VMEM buffer instead of ~29.
    """

    def __init__(self, width):
        self.width = width
        self.rows = []
        self.index = {}

    def add(self, name, mat):
        mat = np.asarray(mat, np.float32)
        if mat.ndim == 1:
            mat = mat[None, :]
        r, c = mat.shape
        assert c <= self.width, (name, c, self.width)
        while len(self.rows) % 8:                       # sublane-align
            self.rows.append(np.zeros((self.width,), np.float32))
        off = len(self.rows)
        padded = np.zeros((r, self.width), np.float32)
        padded[:, :c] = mat
        self.rows.extend(list(padded))
        self.index[name] = (off, r, c)

    def finalize(self):
        while len(self.rows) % 8:
            self.rows.append(np.zeros((self.width,), np.float32))
        return np.stack(self.rows, axis=0)


def _pack_params(layer_params, head_params, num_heads, seq):
    E = int(layer_params[0][0].shape[0])
    dh = E // num_heads
    fa = int(layer_params[0][6].shape[1])               # attention FFN dim
    wf1, bf1, wf2, bf2 = head_params
    f = int(wf1.shape[1])
    width = 128 * int(pl.cdiv(max(E, fa, f, 3 * dh), 128))
    slab = _ParamSlab(width)

    for li, (wqkv, bqkv, wo, bo, g1, be1,
             w1, b1, w2, b2, g2, be2) in enumerate(layer_params):
        wqkv_np = np.asarray(wqkv, np.float32)
        bqkv_np = np.asarray(bqkv, np.float32).reshape(-1)
        wq, wk, wv = wqkv_np[:, :E], wqkv_np[:, E:2 * E], wqkv_np[:, 2 * E:]
        bq, bk, bv = bqkv_np[:E], bqkv_np[E:2 * E], bqkv_np[2 * E:]

        # Head-major fused QKV weight: rows h*E:(h+1)*E hold [Wq_h | Wk_h | Wv_h]
        # so every head's projection output starts at lane 0 inside the kernel.
        w_hm = np.concatenate([
            np.concatenate([wq[:, h * dh:(h + 1) * dh],
                            wk[:, h * dh:(h + 1) * dh],
                            wv[:, h * dh:(h + 1) * dh]], axis=1)
            for h in range(num_heads)], axis=0)                   # (H*E, 3*dh)
        # Matching bias, pre-broadcast over the sequence dim so the in-kernel
        # add is a plain (H,S,3dh) + (H,S,3dh) with no broadcast reshape.
        b_hm = np.concatenate([
            np.tile(np.concatenate([bq[h * dh:(h + 1) * dh],
                                    bk[h * dh:(h + 1) * dh],
                                    bv[h * dh:(h + 1) * dh]])[None, :],
                    (seq, 1))
            for h in range(num_heads)], axis=0)                   # (H*S, 3*dh)

        slab.add(f"l{li}_wqkv_hm", w_hm)
        slab.add(f"l{li}_bqkv_hm", b_hm)
        slab.add(f"l{li}_wo", wo)
        slab.add(f"l{li}_bo", bo)
        slab.add(f"l{li}_g1", g1)
        slab.add(f"l{li}_be1", be1)
        slab.add(f"l{li}_w1", w1)
        slab.add(f"l{li}_b1", b1)
        slab.add(f"l{li}_w2", w2)
        slab.add(f"l{li}_b2", b2)
        slab.add(f"l{li}_g2", g2)
        slab.add(f"l{li}_be2", be2)

    slab.add("wf1", wf1)
    slab.add("bf1", bf1)
    slab.add("wf2_row", np.asarray(wf2, np.float32).reshape(-1))  # (1, F) = fc2.T
    slab.add("bf2", np.asarray(bf2, np.float32).reshape(1, 1))
    return slab.finalize(), slab.index


# ----------------------------- fused Pallas kernel ---------------------------

def _make_kernel(index, layer_num, num_heads, pre_ln, seq, emb):
    dh = emb // num_heads
    scale = 1.0 / math.sqrt(dh)
    H = num_heads

    def kernel(x_ref, p_ref, o_ref):
        def get(name):
            off, r, c = index[name]
            return p_ref[off:off + r, 0:c]

        x = x_ref[0]                                      # (S, E), f32 input

        for li in range(layer_num):
            # Hoisted per-layer parameter loads (read once per layer).
            w_qkv_hm = get(f"l{li}_wqkv_hm").reshape(H, emb, 3 * dh)
            b_qkv_hm = get(f"l{li}_bqkv_hm").reshape(H, seq, 3 * dh)
            wo, bo = get(f"l{li}_wo"), get(f"l{li}_bo")
            g1, be1 = get(f"l{li}_g1"), get(f"l{li}_be1")
            w1, b1 = get(f"l{li}_w1"), get(f"l{li}_b1")
            w2, b2 = get(f"l{li}_w2"), get(f"l{li}_b2")
            g2, be2 = get(f"l{li}_g2"), get(f"l{li}_be2")

            def mha(h):
                # One head-major batched projection: head dim is a major axis,
                # so no per-head lane-offset slices.
                hb = jnp.broadcast_to(h[None, :, :], (H, seq, emb))
                qkv = jnp.einsum('hse,hef->hsf', hb, w_qkv_hm,
                                 preferred_element_type=jnp.float32) + b_qkv_hm
                q = qkv[..., 0:dh]
                k = qkv[..., dh:2 * dh]
                v = qkv[..., 2 * dh:3 * dh]
                # Per-batch attention (grid over B): no block-diagonal mask.
                s = jnp.einsum('hqd,hkd->hqk', q, k,
                               preferred_element_type=jnp.float32) * scale
                s = s - jnp.max(s, axis=-1, keepdims=True)
                e = jnp.exp(s)
                # Exact divide (the approx EUP reciprocal caused the previous
                # tolerance failure).
                p = e / jnp.sum(e, axis=-1, keepdims=True)
                o = jnp.einsum('hqk,hkd->hqd', p, v,
                               preferred_element_type=jnp.float32)  # (H,S,dh)
                # Single (S,E)x(E,E) output projection instead of per-head folds.
                o_cat = jnp.concatenate([o[hd] for hd in range(H)], axis=-1)
                return jnp.dot(o_cat, wo,
                               preferred_element_type=jnp.float32) + bo

            def ffn(h):
                z = jnp.dot(h, w1, preferred_element_type=jnp.float32) + b1
                z = _gelu_exact(z)
                return jnp.dot(z, w2, preferred_element_type=jnp.float32) + b2

            if pre_ln:
                x = x + mha(_layer_norm(x, g1, be1))
                x = x + ffn(_layer_norm(x, g2, be2))
            else:
                x = _layer_norm(x + mha(x), g1, be1)
                x = _layer_norm(x + ffn(x), g2, be2)

        # Head: fc1 -> (encoder dropout result is discarded in the spec) -> fc2.
        re = jnp.dot(x, get("wf1"),
                     preferred_element_type=jnp.float32) + get("bf1")
        # fc2 expressed as (1,F) x (S,F)^T so the output row keeps S on lanes.
        # TODO(synk): this is only a truly lane-dense store when S >= 128; at
        # S=8 it is a single masked vreg write (negligible).
        out_row = lax.dot_general(get("wf2_row"), re,
                                  (((1,), (1,)), ((), ())),
                                  preferred_element_type=jnp.float32) + get("bf2")
        o_ref[0] = out_row.astype(o_ref.dtype)            # (1, S)

    return kernel


# ----------------------------- wrapper ---------------------------------------

def infl_transformer_encoder(x, layer_params, head_params, num_heads, pre_ln):
    """x: (B, S, E) float32. Returns (B, S, 1)."""
    B, S, E = x.shape
    assert E % num_heads == 0

    slab, index = _pack_params(layer_params, head_params, num_heads, S)
    R, W = slab.shape
    kernel = _make_kernel(index, len(layer_params), num_heads, pre_ln, S, E)

    out = pl.pallas_call(
        kernel,
        out_shape=jax.ShapeDtypeStruct((B, 1, S), x.dtype),
        grid=(B,),
        in_specs=[
            # Per-batch activation block.
            pl.BlockSpec((1, S, E), lambda b: (b, 0, 0)),
            # Whole packed parameter slab; same block every step -> one fetch.
            pl.BlockSpec((R, W), lambda b: (0, 0)),
        ],
        out_specs=pl.BlockSpec((1, 1, S), lambda b: (b, 0, 0)),
        compiler_params=pltpu.CompilerParams(
            # "parallel" batch axis: shards across both TensorCores on v7x and
            # removes the old (B*S)^2 masked attention.  On v5e/v6e (1 TC) the
            # extra grid steps cost ~0.35us each — negligible here.
            dimension_semantics=("parallel",),
            # Explicit scoped-VMEM request (v5e default is only 16 MiB); the
            # whole model (<1 MiB of params + activations) fits trivially on
            # v5e / v6e / v7x.
            vmem_limit_bytes=32 * 1024 * 1024,
        ),
    )(x, jnp.asarray(slab))

    # (B, 1, S) and (B, S, 1) share the same linear layout.
    return out.reshape(B, S, 1)


# ----------------------------- parameters -----------------------------------

def _init_linear(key, fan_in, fan_out):
    k1, k2 = jax.random.split(key)
    w = jax.random.normal(k1, (fan_in, fan_out), jnp.float32) / math.sqrt(fan_in)
    b = jax.random.normal(k2, (1, fan_out), jnp.float32) * 0.02
    return w, b


def init_params(key, layer_num, embedding_dim, attn_ffn_dim, ffn_dim):
    E = embedding_dim
    keys = jax.random.split(key, layer_num + 1)
    layer_params = []
    for l in range(layer_num):
        ks = jax.random.split(keys[l], 4)
        wqkv, bqkv = _init_linear(ks[0], E, 3 * E)      # fused Q/K/V projection
        wo, bo = _init_linear(ks[1], E, E)
        w1, b1 = _init_linear(ks[2], E, attn_ffn_dim)
        w2, b2 = _init_linear(ks[3], attn_ffn_dim, E)
        g1, be1 = jnp.ones((1, E), jnp.float32), jnp.zeros((1, E), jnp.float32)
        g2, be2 = jnp.ones((1, E), jnp.float32), jnp.zeros((1, E), jnp.float32)
        layer_params.append((wqkv, bqkv, wo, bo, g1, be1,
                             w1, b1, w2, b2, g2, be2))
    ks = jax.random.split(keys[-1], 2)
    wf1, bf1 = _init_linear(ks[0], E, ffn_dim)
    wf2, bf2 = _init_linear(ks[1], ffn_dim, 1)
    return layer_params, (wf1, bf1, wf2, bf2)


# ----------------------------- pure-JAX reference ----------------------------

def ref_forward(x, layer_params, head_params, num_heads, pre_ln):
    P = jax.lax.Precision.HIGHEST
    B, S, E = x.shape
    dh = E // num_heads
    scale = 1.0 / math.sqrt(dh)

    for (wqkv, bqkv, wo, bo, g1, be1, w1, b1, w2, b2, g2, be2) in layer_params:

        def mha(h):
            qkv = jnp.dot(h, wqkv, precision=P) + bqkv      # (B, S, 3E)
            q, k, v = jnp.split(qkv, 3, axis=-1)
            q = q.reshape(B, S, num_heads, dh)
            k = k.reshape(B, S, num_heads, dh)
            v = v.reshape(B, S, num_heads, dh)
            s = jnp.einsum('bqhd,bkhd->bhqk', q, k, precision=P) * scale
            p = jax.nn.softmax(s, axis=-1)
            o = jnp.einsum('bhqk,bkhd->bqhd', p, v,
                           precision=P).reshape(B, S, E)
            return jnp.dot(o, wo, precision=P) + bo

        def ffn(h):
            z = jax.nn.gelu(jnp.dot(h, w1, precision=P) + b1, approximate=False)
            return jnp.dot(z, w2, precision=P) + b2

        if pre_ln:
            x = x + mha(_layer_norm(x, g1, be1))
            x = x + ffn(_layer_norm(x, g2, be2))
        else:
            x = _layer_norm(x + mha(x), g1, be1)
            x = _layer_norm(x + ffn(x), g2, be2)

    wf1, bf1, wf2, bf2 = head_params
    re = jnp.dot(x, wf1, precision=P) + bf1
    return jnp.dot(re, wf2, precision=P) + bf2


# ----------------------------- main ------------------------------------------

if __name__ == "__main__":
    B, S, E = 2, 8, 32          # batch, sequence, embedding_dim
    NUM_HEADS = 4
    ATTN_FFN_DIM = 64           # attention_ffn_embedding_dim (per-layer FFN)
    FFN_DIM = 48                # ffn_embedding_dim (final fc1 width)
    LAYER_NUM = 2
    PRE_LN = False              # attention_pre_layernorm

    key = jax.random.PRNGKey(0)
    kx, kp = jax.random.split(key)
    x = jax.random.normal(kx, (B, S, E), jnp.float32)
    layer_params, head_params = init_params(kp, LAYER_NUM, E,
                                            ATTN_FFN_DIM, FFN_DIM)

    out = infl_transformer_encoder(x, layer_params, head_params,
                                   NUM_HEADS, PRE_LN)
    out = jax.block_until_ready(out)

    ref = ref_forward(x, layer_params, head_params, NUM_HEADS, PRE_LN)
    assert out.shape == (B, S, 1), out.shape
    # Compiled Mosaic f32 matmuls agree with the HIGHEST-precision reference to
    # ~1e-5; the looser bound also covers interpret-mode runs where the
    # kernel's matmuls execute at XLA DEFAULT (bf16-pass) precision.
    np.testing.assert_allclose(np.asarray(out), np.asarray(ref),
                               atol=1e-2, rtol=1e-2)

    print("KERNEL_OK")
</pallas_src>

<mosaic_0001>
module attributes {stable_mosaic.version = 11 : i64} {
  func.func @kernel(%arg0: i32, %arg1: memref<1x8x32xf32, #tpu.memory_space<vmem>>, %arg2: memref<744x128xf32, #tpu.memory_space<vmem>>, %arg3: memref<1x1x8xf32, #tpu.memory_space<vmem>>) attributes {dimension_semantics = [#tpu.dimension_semantics<parallel>], iteration_bounds = array<i64: 2>, scalar_prefetch = 0 : i64, scratch_operands = 0 : i64, tpu.core_type = #tpu.core_type<tc>, window_params = [{transform_indices = @transform_0, window_bounds = array<i64: 1, 8, 32>}, {pipeline_mode = #tpu.pipeline_mode<synchronous>, transform_indices = @transform_1, window_bounds = array<i64: 744, 128>}, {transform_indices = @transform_2, window_bounds = array<i64: 1, 1, 8>}]} {
    %c0 = arith.constant 0 : index
    %c0_0 = arith.constant 0 : index
    %c0_1 = arith.constant 0 : index
    %0 = vector.load %arg1[%c0, %c0_0, %c0_1] : memref<1x8x32xf32, #tpu.memory_space<vmem>>, vector<1x8x32xf32>
    %1 = vector.shape_cast %0 : vector<1x8x32xf32> to vector<8x32xf32>
    %c0_2 = arith.constant 0 : index
    %c0_3 = arith.constant 0 : index
    %2 = vector.load %arg2[%c0_2, %c0_3] : memref<744x128xf32, #tpu.memory_space<vmem>>, vector<128x24xf32>
    %3 = vector.shape_cast %2 : vector<128x24xf32> to vector<4x32x24xf32>
    %c128 = arith.constant 128 : index
    %c0_4 = arith.constant 0 : index
    %4 = vector.load %arg2[%c128, %c0_4] : memref<744x128xf32, #tpu.memory_space<vmem>>, vector<32x24xf32>
    %5 = vector.shape_cast %4 : vector<32x24xf32> to vector<4x8x24xf32>
    %c160 = arith.constant 160 : index
    %c0_5 = arith.constant 0 : index
    %6 = vector.load %arg2[%c160, %c0_5] : memref<744x128xf32, #tpu.memory_space<vmem>>, vector<32x32xf32>
    %c192 = arith.constant 192 : index
    %c0_6 = arith.constant 0 : index
    %7 = vector.load %arg2[%c192, %c0_6] : memref<744x128xf32, #tpu.memory_space<vmem>>, vector<1x32xf32>
    %c200 = arith.constant 200 : index
    %c0_7 = arith.constant 0 : index
    %8 = vector.load %arg2[%c200, %c0_7] : memref<744x128xf32, #tpu.memory_space<vmem>>, vector<1x32xf32>
    %c208 = arith.constant 208 : index
    %c0_8 = arith.constant 0 : index
    %9 = vector.load %arg2[%c208, %c0_8] : memref<744x128xf32, #tpu.memory_space<vmem>>, vector<1x32xf32>
    %c216 = arith.constant 216 : index
    %c0_9 = arith.constant 0 : index
    %10 = vector.load %arg2[%c216, %c0_9] : memref<744x128xf32, #tpu.memory_space<vmem>>, vector<32x64xf32>
    %c248 = arith.constant 248 : index
    %c0_10 = arith.constant 0 : index
    %11 = vector.load %arg2[%c248, %c0_10] : memref<744x128xf32, #tpu.memory_space<vmem>>, vector<1x64xf32>
    %c256 = arith.constant 256 : index
    %c0_11 = arith.constant 0 : index
    %12 = vector.load %arg2[%c256, %c0_11] : memref<744x128xf32, #tpu.memory_space<vmem>>, vector<64x32xf32>
    %c320 = arith.constant 320 : index
    %c0_12 = arith.constant 0 : index
    %13 = vector.load %arg2[%c320, %c0_12] : memref<744x128xf32, #tpu.memory_space<vmem>>, vector<1x32xf32>
    %c328 = arith.constant 328 : index
    %c0_13 = arith.constant 0 : index
    %14 = vector.load %arg2[%c328, %c0_13] : memref<744x128xf32, #tpu.memory_space<vmem>>, vector<1x32xf32>
    %c336 = arith.constant 336 : index
    %c0_14 = arith.constant 0 : index
    %15 = vector.load %arg2[%c336, %c0_14] : memref<744x128xf32, #tpu.memory_space<vmem>>, vector<1x32xf32>
    %16 = vector.shape_cast %1 : vector<8x32xf32> to vector<1x8x32xf32>
    %17 = vector.shape_cast %16 : vector<1x8x32xf32> to vector<1x8x32xf32>
    %18 = vector.broadcast %17 : vector<1x8x32xf32> to vector<4x8x32xf32>
    "tpu.trace_start"() <{level = 10 : i32, message = "hse,hef->hsf"}> : () -> ()
    %cst = arith.constant dense<0.000000e+00> : vector<4x8x24xf32>
    %19 = tpu.matmul %18, %3, %cst {dimension_numbers = #tpu.dot_dimension_numbers<[2], [1], [1], [2], [0, 0, 0, 1, 1, 2], [0], [0]>} : vector<4x8x32xf32>, vector<4x32x24xf32>, vector<4x8x24xf32> -> vector<4x8x24xf32>
    "tpu.trace_stop"() : () -> ()
    %20 = arith.addf %19, %5 : vector<4x8x24xf32>
    %21 = vector.extract_strided_slice %20 {offsets = [0, 0, 0], sizes = [4, 8, 8], strides = [1, 1, 1]} : vector<4x8x24xf32> to vector<4x8x8xf32>
    %22 = vector.extract_strided_slice %20 {offsets = [0, 0, 8], sizes = [4, 8, 8], strides = [1, 1, 1]} : vector<4x8x24xf32> to vector<4x8x8xf32>
    %23 = vector.extract_strided_slice %20 {offsets = [0, 0, 16], sizes = [4, 8, 8], strides = [1, 1, 1]} : vector<4x8x24xf32> to vector<4x8x8xf32>
    "tpu.trace_start"() <{level = 10 : i32, message = "hqd,hkd->hqk"}> : () -> ()
    %cst_15 = arith.constant dense<0.000000e+00> : vector<4x8x8xf32>
    %24 = tpu.matmul %21, %22, %cst_15 {dimension_numbers = #tpu.dot_dimension_numbers<[2], [2], [1], [1], [0, 0, 0, 1, 1, 1], [0], [0]>} : vector<4x8x8xf32>, vector<4x8x8xf32>, vector<4x8x8xf32> -> vector<4x8x8xf32>
    "tpu.trace_stop"() : () -> ()
    %cst_16 = arith.constant 0.353553385 : f32
    %25 = vector.broadcast %cst_16 : f32 to vector<4x8x8xf32>
    %26 = arith.mulf %24, %25 : vector<4x8x8xf32>
    %cst_17 = arith.constant dense<0xFF800000> : vector<4x8xf32>
    %27 = vector.multi_reduction <maximumf>, %26, %cst_17 [2] : vector<4x8x8xf32> to vector<4x8xf32>
    %28 = vector.shape_cast %27 : vector<4x8xf32> to vector<4x8x1xf32>
    %29 = vector.broadcast %28 : vector<4x8x1xf32> to vector<4x8x8xf32>
    %30 = arith.subf %26, %29 : vector<4x8x8xf32>
    %31 = math.exp %30 : vector<4x8x8xf32>
    %cst_18 = arith.constant dense<0.000000e+00> : vector<4x8xf32>
    %32 = vector.multi_reduction <add>, %31, %cst_18 [2] : vector<4x8x8xf32> to vector<4x8xf32>
    %33 = vector.shape_cast %32 : vector<4x8xf32> to vector<4x8x1xf32>
    %34 = vector.broadcast %33 : vector<4x8x1xf32> to vector<4x8x8xf32>
    %35 = arith.divf %31, %34 : vector<4x8x8xf32>
    "tpu.trace_start"() <{level = 10 : i32, message = "hqk,hkd->hqd"}> : () -> ()
    %cst_19 = arith.constant dense<0.000000e+00> : vector<4x8x8xf32>
    %36 = tpu.matmul %35, %23, %cst_19 {dimension_numbers = #tpu.dot_dimension_numbers<[2], [1], [1], [2], [0, 0, 0, 1, 1, 2], [0], [0]>} : vector<4x8x8xf32>, vector<4x8x8xf32>, vector<4x8x8xf32> -> vector<4x8x8xf32>
    "tpu.trace_stop"() : () -> ()
    %37 = vector.extract_strided_slice %36 {offsets = [0, 0, 0], sizes = [1, 8, 8], strides = [1, 1, 1]} : vector<4x8x8xf32> to vector<1x8x8xf32>
    %38 = vector.shape_cast %37 : vector<1x8x8xf32> to vector<8x8xf32>
    %39 = vector.extract_strided_slice %36 {offsets = [1, 0, 0], sizes = [1, 8, 8], strides = [1, 1, 1]} : vector<4x8x8xf32> to vector<1x8x8xf32>
    %40 = vector.shape_cast %39 : vector<1x8x8xf32> to vector<8x8xf32>
    %41 = vector.extract_strided_slice %36 {offsets = [2, 0, 0], sizes = [1, 8, 8], strides = [1, 1, 1]} : vector<4x8x8xf32> to vector<1x8x8xf32>
    %42 = vector.shape_cast %41 : vector<1x8x8xf32> to vector<8x8xf32>
    %43 = vector.extract_strided_slice %36 {offsets = [3, 0, 0], sizes = [1, 8, 8], strides = [1, 1, 1]} : vector<4x8x8xf32> to vector<1x8x8xf32>
    %44 = vector.shape_cast %43 : vector<1x8x8xf32> to vector<8x8xf32>
    %45 = tpu.concatenate %38, %40, %42, %44 in 1 : vector<8x8xf32>, vector<8x8xf32>, vector<8x8xf32>, vector<8x8xf32> -> vector<8x32xf32>
    %cst_20 = arith.constant dense<0.000000e+00> : vector<8x32xf32>
    %46 = tpu.matmul %45, %6, %cst_20 {dimension_numbers = #tpu.dot_dimension_numbers<[1], [0], [0], [1], [0, 0, 1, 1], [], []>} : vector<8x32xf32>, vector<32x32xf32>, vector<8x32xf32> -> vector<8x32xf32>
    %47 = vector.broadcast %7 : vector<1x32xf32> to vector<8x32xf32>
    %48 = arith.addf %46, %47 : vector<8x32xf32>
    %49 = arith.addf %1, %48 : vector<8x32xf32>
    %cst_21 = arith.constant dense<0.000000e+00> : vector<8xf32>
    %50 = vector.multi_reduction <add>, %49, %cst_21 [1] : vector<8x32xf32> to vector<8xf32>
    %51 = vector.shape_cast %50 : vector<8xf32> to vector<8x1xf32>
    %cst_22 = arith.constant 3.200000e+01 : f32
    %52 = vector.broadcast %cst_22 : f32 to vector<8x1xf32>
    %53 = arith.divf %51, %52 : vector<8x1xf32>
    %54 = vector.broadcast %53 : vector<8x1xf32> to vector<8x32xf32>
    %55 = arith.subf %49, %54 : vector<8x32xf32>
    %56 = arith.mulf %55, %55 : vector<8x32xf32>
    %cst_23 = arith.constant dense<0.000000e+00> : vector<8xf32>
    %57 = vector.multi_reduction <add>, %56, %cst_23 [1] : vector<8x32xf32> to vector<8xf32>
    %58 = vector.shape_cast %57 : vector<8xf32> to vector<8x1xf32>
    %cst_24 = arith.constant 3.200000e+01 : f32
    %59 = vector.broadcast %cst_24 : f32 to vector<8x1xf32>
    %60 = arith.divf %58, %59 : vector<8x1xf32>
    %61 = vector.broadcast %53 : vector<8x1xf32> to vector<8x32xf32>
    %62 = arith.subf %49, %61 : vector<8x32xf32>
    %cst_25 = arith.constant 9.99999974E-6 : f32
    %63 = vector.broadcast %cst_25 : f32 to vector<8x1xf32>
    %64 = arith.addf %60, %63 : vector<8x1xf32>
    %65 = math.rsqrt %64 : vector<8x1xf32>
    %66 = vector.broadcast %65 : vector<8x1xf32> to vector<8x32xf32>
    %67 = arith.mulf %62, %66 : vector<8x32xf32>
    %68 = vector.broadcast %8 : vector<1x32xf32> to vector<8x32xf32>
    %69 = arith.mulf %67, %68 : vector<8x32xf32>
    %70 = vector.broadcast %9 : vector<1x32xf32> to vector<8x32xf32>
    %71 = arith.addf %69, %70 : vector<8x32xf32>
    %cst_26 = arith.constant dense<0.000000e+00> : vector<8x64xf32>
    %72 = tpu.matmul %71, %10, %cst_26 {dimension_numbers = #tpu.dot_dimension_numbers<[1], [0], [0], [1], [0, 0, 1, 1], [], []>} : vector<8x32xf32>, vector<32x64xf32>, vector<8x64xf32> -> vector<8x64xf32>
    %73 = vector.broadcast %11 : vector<1x64xf32> to vector<8x64xf32>
    %74 = arith.addf %72, %73 : vector<8x64xf32>
    %cst_27 = arith.constant 5.000000e-01 : f32
    %75 = vector.broadcast %cst_27 : f32 to vector<8x64xf32>
    %76 = arith.mulf %75, %74 : vector<8x64xf32>
    %cst_28 = arith.constant 0.707106769 : f32
    %77 = vector.broadcast %cst_28 : f32 to vector<8x64xf32>
    %78 = arith.mulf %74, %77 : vector<8x64xf32>
    %79 = math.absf %78 : vector<8x64xf32>
    %cst_29 = arith.constant 0.327591091 : f32
    %80 = vector.broadcast %cst_29 : f32 to vector<8x64xf32>
    %81 = arith.mulf %80, %79 : vector<8x64xf32>
    %cst_30 = arith.constant 1.000000e+00 : f32
    %82 = vector.broadcast %cst_30 : f32 to vector<8x64xf32>
    %83 = arith.addf %82, %81 : vector<8x64xf32>
    %cst_31 = arith.constant 1.000000e+00 : f32
    %84 = vector.broadcast %cst_31 : f32 to vector<8x64xf32>
    %85 = arith.divf %84, %83 : vector<8x64xf32>
    %cst_32 = arith.constant 1.06140542 : f32
    %86 = vector.broadcast %cst_32 : f32 to vector<8x64xf32>
    %87 = arith.mulf %86, %85 : vector<8x64xf32>
    %cst_33 = arith.constant -1.45315206 : f32
    %88 = vector.broadcast %cst_33 : f32 to vector<8x64xf32>
    %89 = arith.addf %87, %88 : vector<8x64xf32>
    %90 = arith.mulf %89, %85 : vector<8x64xf32>
    %cst_34 = arith.constant 1.42141378 : f32
    %91 = vector.broadcast %cst_34 : f32 to vector<8x64xf32>
    %92 = arith.addf %90, %91 : vector<8x64xf32>
    %93 = arith.mulf %92, %85 : vector<8x64xf32>
    %cst_35 = arith.constant -0.284496725 : f32
    %94 = vector.broadcast %cst_35 : f32 to vector<8x64xf32>
    %95 = arith.addf %93, %94 : vector<8x64xf32>
    %96 = arith.mulf %95, %85 : vector<8x64xf32>
    %cst_36 = arith.constant 0.254829586 : f32
    %97 = vector.broadcast %cst_36 : f32 to vector<8x64xf32>
    %98 = arith.addf %96, %97 : vector<8x64xf32>
    %99 = arith.mulf %98, %85 : vector<8x64xf32>
    %cst_37 = arith.constant 0.000000e+00 : f32
    %100 = vector.broadcast %cst_37 : f32 to vector<8x64xf32>
    %101 = arith.subf %100, %79 : vector<8x64xf32>
    %102 = arith.mulf %101, %79 : vector<8x64xf32>
    %103 = math.exp %102 : vector<8x64xf32>
    %104 = arith.mulf %99, %103 : vector<8x64xf32>
    %cst_38 = arith.constant 1.000000e+00 : f32
    %105 = vector.broadcast %cst_38 : f32 to vector<8x64xf32>
    %106 = arith.subf %105, %104 : vector<8x64xf32>
    %cst_39 = arith.constant 0.000000e+00 : f32
    %107 = vector.broadcast %cst_39 : f32 to vector<8x64xf32>
    %108 = arith.cmpf olt, %78, %107 : vector<8x64xf32>
    %cst_40 = arith.constant 0.000000e+00 : f32
    %109 = vector.broadcast %cst_40 : f32 to vector<8x64xf32>
    %110 = arith.subf %109, %106 : vector<8x64xf32>
    %111 = arith.select %108, %110, %106 : vector<8x64xi1>, vector<8x64xf32>
    %cst_41 = arith.constant 1.000000e+00 : f32
    %112 = vector.broadcast %cst_41 : f32 to vector<8x64xf32>
    %113 = arith.addf %112, %111 : vector<8x64xf32>
    %114 = arith.mulf %76, %113 : vector<8x64xf32>
    %cst_42 = arith.constant dense<0.000000e+00> : vector<8x32xf32>
    %115 = tpu.matmul %114, %12, %cst_42 {dimension_numbers = #tpu.dot_dimension_numbers<[1], [0], [0], [1], [0, 0, 1, 1], [], []>} : vector<8x64xf32>, vector<64x32xf32>, vector<8x32xf32> -> vector<8x32xf32>
    %116 = vector.broadcast %13 : vector<1x32xf32> to vector<8x32xf32>
    %117 = arith.addf %115, %116 : vector<8x32xf32>
    %118 = arith.addf %71, %117 : vector<8x32xf32>
    %cst_43 = arith.constant dense<0.000000e+00> : vector<8xf32>
    %119 = vector.multi_reduction <add>, %118, %cst_43 [1] : vector<8x32xf32> to vector<8xf32>
    %120 = vector.shape_cast %119 : vector<8xf32> to vector<8x1xf32>
    %cst_44 = arith.constant 3.200000e+01 : f32
    %121 = vector.broadcast %cst_44 : f32 to vector<8x1xf32>
    %122 = arith.divf %120, %121 : vector<8x1xf32>
    %123 = vector.broadcast %122 : vector<8x1xf32> to vector<8x32xf32>
    %124 = arith.subf %118, %123 : vector<8x32xf32>
    %125 = arith.mulf %124, %124 : vector<8x32xf32>
    %cst_45 = arith.constant dense<0.000000e+00> : vector<8xf32>
    %126 = vector.multi_reduction <add>, %125, %cst_45 [1] : vector<8x32xf32> to vector<8xf32>
    %127 = vector.shape_cast %126 : vector<8xf32> to vector<8x1xf32>
    %cst_46 = arith.constant 3.200000e+01 : f32
    %128 = vector.broadcast %cst_46 : f32 to vector<8x1xf32>
    %129 = arith.divf %127, %128 : vector<8x1xf32>
    %130 = vector.broadcast %122 : vector<8x1xf32> to vector<8x32xf32>
    %131 = arith.subf %118, %130 : vector<8x32xf32>
    %cst_47 = arith.constant 9.99999974E-6 : f32
    %132 = vector.broadcast %cst_47 : f32 to vector<8x1xf32>
    %133 = arith.addf %129, %132 : vector<8x1xf32>
    %134 = math.rsqrt %133 : vector<8x1xf32>
    %135 = vector.broadcast %134 : vector<8x1xf32> to vector<8x32xf32>
    %136 = arith.mulf %131, %135 : vector<8x32xf32>
    %137 = vector.broadcast %14 : vector<1x32xf32> to vector<8x32xf32>
    %138 = arith.mulf %136, %137 : vector<8x32xf32>
    %139 = vector.broadcast %15 : vector<1x32xf32> to vector<8x32xf32>
    %140 = arith.addf %138, %139 : vector<8x32xf32>
    %c344 = arith.constant 344 : index
    %c0_48 = arith.constant 0 : index
    %141 = vector.load %arg2[%c344, %c0_48] : memref<744x128xf32, #tpu.memory_space<vmem>>, vector<128x24xf32>
    %142 = vector.shape_cast %141 : vector<128x24xf32> to vector<4x32x24xf32>
    %c472 = arith.constant 472 : index
    %c0_49 = arith.constant 0 : index
    %143 = vector.load %arg2[%c472, %c0_49] : memref<744x128xf32, #tpu.memory_space<vmem>>, vector<32x24xf32>
    %144 = vector.shape_cast %143 : vector<32x24xf32> to vector<4x8x24xf32>
    %c504 = arith.constant 504 : index
    %c0_50 = arith.constant 0 : index
    %145 = vector.load %arg2[%c504, %c0_50] : memref<744x128xf32, #tpu.memory_space<vmem>>, vector<32x32xf32>
    %c536 = arith.constant 536 : index
    %c0_51 = arith.constant 0 : index
    %146 = vector.load %arg2[%c536, %c0_51] : memref<744x128xf32, #tpu.memory_space<vmem>>, vector<1x32xf32>
    %c544 = arith.constant 544 : index
    %c0_52 = arith.constant 0 : index
    %147 = vector.load %arg2[%c544, %c0_52] : memref<744x128xf32, #tpu.memory_space<vmem>>, vector<1x32xf32>
    %c552 = arith.constant 552 : index
    %c0_53 = arith.constant 0 : index
    %148 = vector.load %arg2[%c552, %c0_53] : memref<744x128xf32, #tpu.memory_space<vmem>>, vector<1x32xf32>
    %c560 = arith.constant 560 : index
    %c0_54 = arith.constant 0 : index
    %149 = vector.load %arg2[%c560, %c0_54] : memref<744x128xf32, #tpu.memory_space<vmem>>, vector<32x64xf32>
    %c592 = arith.constant 592 : index
    %c0_55 = arith.constant 0 : index
    %150 = vector.load %arg2[%c592, %c0_55] : memref<744x128xf32, #tpu.memory_space<vmem>>, vector<1x64xf32>
    %c600 = arith.constant 600 : index
    %c0_56 = arith.constant 0 : index
    %151 = vector.load %arg2[%c600, %c0_56] : memref<744x128xf32, #tpu.memory_space<vmem>>, vector<64x32xf32>
    %c664 = arith.constant 664 : index
    %c0_57 = arith.constant 0 : index
    %152 = vector.load %arg2[%c664, %c0_57] : memref<744x128xf32, #tpu.memory_space<vmem>>, vector<1x32xf32>
    %c672 = arith.constant 672 : index
    %c0_58 = arith.constant 0 : index
    %153 = vector.load %arg2[%c672, %c0_58] : memref<744x128xf32, #tpu.memory_space<vmem>>, vector<1x32xf32>
    %c680 = arith.constant 680 : index
    %c0_59 = arith.constant 0 : index
    %154 = vector.load %arg2[%c680, %c0_59] : memref<744x128xf32, #tpu.memory_space<vmem>>, vector<1x32xf32>
    %155 = vector.shape_cast %140 : vector<8x32xf32> to vector<1x8x32xf32>
    %156 = vector.shape_cast %155 : vector<1x8x32xf32> to vector<1x8x32xf32>
    %157 = vector.broadcast %156 : vector<1x8x32xf32> to vector<4x8x32xf32>
    "tpu.trace_start"() <{level = 10 : i32, message = "hse,hef->hsf"}> : () -> ()
    %cst_60 = arith.constant dense<0.000000e+00> : vector<4x8x24xf32>
    %158 = tpu.matmul %157, %142, %cst_60 {dimension_numbers = #tpu.dot_dimension_numbers<[2], [1], [1], [2], [0, 0, 0, 1, 1, 2], [0], [0]>} : vector<4x8x32xf32>, vector<4x32x24xf32>, vector<4x8x24xf32> -> vector<4x8x24xf32>
    "tpu.trace_stop"() : () -> ()
    %159 = arith.addf %158, %144 : vector<4x8x24xf32>
    %160 = vector.extract_strided_slice %159 {offsets = [0, 0, 0], sizes = [4, 8, 8], strides = [1, 1, 1]} : vector<4x8x24xf32> to vector<4x8x8xf32>
    %161 = vector.extract_strided_slice %159 {offsets = [0, 0, 8], sizes = [4, 8, 8], strides = [1, 1, 1]} : vector<4x8x24xf32> to vector<4x8x8xf32>
    %162 = vector.extract_strided_slice %159 {offsets = [0, 0, 16], sizes = [4, 8, 8], strides = [1, 1, 1]} : vector<4x8x24xf32> to vector<4x8x8xf32>
    "tpu.trace_start"() <{level = 10 : i32, message = "hqd,hkd->hqk"}> : () -> ()
    %cst_61 = arith.constant dense<0.000000e+00> : vector<4x8x8xf32>
    %163 = tpu.matmul %160, %161, %cst_61 {dimension_numbers = #tpu.dot_dimension_numbers<[2], [2], [1], [1], [0, 0, 0, 1, 1, 1], [0], [0]>} : vector<4x8x8xf32>, vector<4x8x8xf32>, vector<4x8x8xf32> -> vector<4x8x8xf32>
    "tpu.trace_stop"() : () -> ()
    %cst_62 = arith.constant 0.353553385 : f32
    %164 = vector.broadcast %cst_62 : f32 to vector<4x8x8xf32>
    %165 = arith.mulf %163, %164 : vector<4x8x8xf32>
    %cst_63 = arith.constant dense<0xFF800000> : vector<4x8xf32>
    %166 = vector.multi_reduction <maximumf>, %165, %cst_63 [2] : vector<4x8x8xf32> to vector<4x8xf32>
    %167 = vector.shape_cast %166 : vector<4x8xf32> to vector<4x8x1xf32>
    %168 = vector.broadcast %167 : vector<4x8x1xf32> to vector<4x8x8xf32>
    %169 = arith.subf %165, %168 : vector<4x8x8xf32>
    %170 = math.exp %169 : vector<4x8x8xf32>
    %cst_64 = arith.constant dense<0.000000e+00> : vector<4x8xf32>
    %171 = vector.multi_reduction <add>, %170, %cst_64 [2] : vector<4x8x8xf32> to vector<4x8xf32>
    %172 = vector.shape_cast %171 : vector<4x8xf32> to vector<4x8x1xf32>
    %173 = vector.broadcast %172 : vector<4x8x1xf32> to vector<4x8x8xf32>
    %174 = arith.divf %170, %173 : vector<4x8x8xf32>
    "tpu.trace_start"() <{level = 10 : i32, message = "hqk,hkd->hqd"}> : () -> ()
    %cst_65 = arith.constant dense<0.000000e+00> : vector<4x8x8xf32>
    %175 = tpu.matmul %174, %162, %cst_65 {dimension_numbers = #tpu.dot_dimension_numbers<[2], [1], [1], [2], [0, 0, 0, 1, 1, 2], [0], [0]>} : vector<4x8x8xf32>, vector<4x8x8xf32>, vector<4x8x8xf32> -> vector<4x8x8xf32>
    "tpu.trace_stop"() : () -> ()
    %176 = vector.extract_strided_slice %175 {offsets = [0, 0, 0], sizes = [1, 8, 8], strides = [1, 1, 1]} : vector<4x8x8xf32> to vector<1x8x8xf32>
    %177 = vector.shape_cast %176 : vector<1x8x8xf32> to vector<8x8xf32>
    %178 = vector.extract_strided_slice %175 {offsets = [1, 0, 0], sizes = [1, 8, 8], strides = [1, 1, 1]} : vector<4x8x8xf32> to vector<1x8x8xf32>
    %179 = vector.shape_cast %178 : vector<1x8x8xf32> to vector<8x8xf32>
    %180 = vector.extract_strided_slice %175 {offsets = [2, 0, 0], sizes = [1, 8, 8], strides = [1, 1, 1]} : vector<4x8x8xf32> to vector<1x8x8xf32>
    %181 = vector.shape_cast %180 : vector<1x8x8xf32> to vector<8x8xf32>
    %182 = vector.extract_strided_slice %175 {offsets = [3, 0, 0], sizes = [1, 8, 8], strides = [1, 1, 1]} : vector<4x8x8xf32> to vector<1x8x8xf32>
    %183 = vector.shape_cast %182 : vector<1x8x8xf32> to vector<8x8xf32>
    %184 = tpu.concatenate %177, %179, %181, %183 in 1 : vector<8x8xf32>, vector<8x8xf32>, vector<8x8xf32>, vector<8x8xf32> -> vector<8x32xf32>
    %cst_66 = arith.constant dense<0.000000e+00> : vector<8x32xf32>
    %185 = tpu.matmul %184, %145, %cst_66 {dimension_numbers = #tpu.dot_dimension_numbers<[1], [0], [0], [1], [0, 0, 1, 1], [], []>} : vector<8x32xf32>, vector<32x32xf32>, vector<8x32xf32> -> vector<8x32xf32>
    %186 = vector.broadcast %146 : vector<1x32xf32> to vector<8x32xf32>
    %187 = arith.addf %185, %186 : vector<8x32xf32>
    %188 = arith.addf %140, %187 : vector<8x32xf32>
    %cst_67 = arith.constant dense<0.000000e+00> : vector<8xf32>
    %189 = vector.multi_reduction <add>, %188, %cst_67 [1] : vector<8x32xf32> to vector<8xf32>
    %190 = vector.shape_cast %189 : vector<8xf32> to vector<8x1xf32>
    %cst_68 = arith.constant 3.200000e+01 : f32
    %191 = vector.broadcast %cst_68 : f32 to vector<8x1xf32>
    %192 = arith.divf %190, %191 : vector<8x1xf32>
    %193 = vector.broadcast %192 : vector<8x1xf32> to vector<8x32xf32>
    %194 = arith.subf %188, %193 : vector<8x32xf32>
    %195 = arith.mulf %194, %194 : vector<8x32xf32>
    %cst_69 = arith.constant dense<0.000000e+00> : vector<8xf32>
    %196 = vector.multi_reduction <add>, %195, %cst_69 [1] : vector<8x32xf32> to vector<8xf32>
    %197 = vector.shape_cast %196 : vector<8xf32> to vector<8x1xf32>
    %cst_70 = arith.constant 3.200000e+01 : f32
    %198 = vector.broadcast %cst_70 : f32 to vector<8x1xf32>
    %199 = arith.divf %197, %198 : vector<8x1xf32>
    %200 = vector.broadcast %192 : vector<8x1xf32> to vector<8x32xf32>
    %201 = arith.subf %188, %200 : vector<8x32xf32>
    %cst_71 = arith.constant 9.99999974E-6 : f32
    %202 = vector.broadcast %cst_71 : f32 to vector<8x1xf32>
    %203 = arith.addf %199, %202 : vector<8x1xf32>
    %204 = math.rsqrt %203 : vector<8x1xf32>
    %205 = vector.broadcast %204 : vector<8x1xf32> to vector<8x32xf32>
    %206 = arith.mulf %201, %205 : vector<8x32xf32>
    %207 = vector.broadcast %147 : vector<1x32xf32> to vector<8x32xf32>
    %208 = arith.mulf %206, %207 : vector<8x32xf32>
    %209 = vector.broadcast %148 : vector<1x32xf32> to vector<8x32xf32>
    %210 = arith.addf %208, %209 : vector<8x32xf32>
    %cst_72 = arith.constant dense<0.000000e+00> : vector<8x64xf32>
    %211 = tpu.matmul %210, %149, %cst_72 {dimension_numbers = #tpu.dot_dimension_numbers<[1], [0], [0], [1], [0, 0, 1, 1], [], []>} : vector<8x32xf32>, vector<32x64xf32>, vector<8x64xf32> -> vector<8x64xf32>
    %212 = vector.broadcast %150 : vector<1x64xf32> to vector<8x64xf32>
    %213 = arith.addf %211, %212 : vector<8x64xf32>
    %cst_73 = arith.constant 5.000000e-01 : f32
    %214 = vector.broadcast %cst_73 : f32 to vector<8x64xf32>
    %215 = arith.mulf %214, %213 : vector<8x64xf32>
    %cst_74 = arith.constant 0.707106769 : f32
    %216 = vector.broadcast %cst_74 : f32 to vector<8x64xf32>
    %217 = arith.mulf %213, %216 : vector<8x64xf32>
    %218 = math.absf %217 : vector<8x64xf32>
    %cst_75 = arith.constant 0.327591091 : f32
    %219 = vector.broadcast %cst_75 : f32 to vector<8x64xf32>
    %220 = arith.mulf %219, %218 : vector<8x64xf32>
    %cst_76 = arith.constant 1.000000e+00 : f32
    %221 = vector.broadcast %cst_76 : f32 to vector<8x64xf32>
    %222 = arith.addf %221, %220 : vector<8x64xf32>
    %cst_77 = arith.constant 1.000000e+00 : f32
    %223 = vector.broadcast %cst_77 : f32 to vector<8x64xf32>
    %224 = arith.divf %223, %222 : vector<8x64xf32>
    %cst_78 = arith.constant 1.06140542 : f32
    %225 = vector.broadcast %cst_78 : f32 to vector<8x64xf32>
    %226 = arith.mulf %225, %224 : vector<8x64xf32>
    %cst_79 = arith.constant -1.45315206 : f32
    %227 = vector.broadcast %cst_79 : f32 to vector<8x64xf32>
    %228 = arith.addf %226, %227 : vector<8x64xf32>
    %229 = arith.mulf %228, %224 : vector<8x64xf32>
    %cst_80 = arith.constant 1.42141378 : f32
    %230 = vector.broadcast %cst_80 : f32 to vector<8x64xf32>
    %231 = arith.addf %229, %230 : vector<8x64xf32>
    %232 = arith.mulf %231, %224 : vector<8x64xf32>
    %cst_81 = arith.constant -0.284496725 : f32
    %233 = vector.broadcast %cst_81 : f32 to vector<8x64xf32>
    %234 = arith.addf %232, %233 : vector<8x64xf32>
    %235 = arith.mulf %234, %224 : vector<8x64xf32>
    %cst_82 = arith.constant 0.254829586 : f32
    %236 = vector.broadcast %cst_82 : f32 to vector<8x64xf32>
    %237 = arith.addf %235, %236 : vector<8x64xf32>
    %238 = arith.mulf %237, %224 : vector<8x64xf32>
    %cst_83 = arith.constant 0.000000e+00 : f32
    %239 = vector.broadcast %cst_83 : f32 to vector<8x64xf32>
    %240 = arith.subf %239, %218 : vector<8x64xf32>
    %241 = arith.mulf %240, %218 : vector<8x64xf32>
    %242 = math.exp %241 : vector<8x64xf32>
    %243 = arith.mulf %238, %242 : vector<8x64xf32>
    %cst_84 = arith.constant 1.000000e+00 : f32
    %244 = vector.broadcast %cst_84 : f32 to vector<8x64xf32>
    %245 = arith.subf %244, %243 : vector<8x64xf32>
    %cst_85 = arith.constant 0.000000e+00 : f32
    %246 = vector.broadcast %cst_85 : f32 to vector<8x64xf32>
    %247 = arith.cmpf olt, %217, %246 : vector<8x64xf32>
    %cst_86 = arith.constant 0.000000e+00 : f32
    %248 = vector.broadcast %cst_86 : f32 to vector<8x64xf32>
    %249 = arith.subf %248, %245 : vector<8x64xf32>
    %250 = arith.select %247, %249, %245 : vector<8x64xi1>, vector<8x64xf32>
    %cst_87 = arith.constant 1.000000e+00 : f32
    %251 = vector.broadcast %cst_87 : f32 to vector<8x64xf32>
    %252 = arith.addf %251, %250 : vector<8x64xf32>
    %253 = arith.mulf %215, %252 : vector<8x64xf32>
    %cst_88 = arith.constant dense<0.000000e+00> : vector<8x32xf32>
    %254 = tpu.matmul %253, %151, %cst_88 {dimension_numbers = #tpu.dot_dimension_numbers<[1], [0], [0], [1], [0, 0, 1, 1], [], []>} : vector<8x64xf32>, vector<64x32xf32>, vector<8x32xf32> -> vector<8x32xf32>
    %255 = vector.broadcast %152 : vector<1x32xf32> to vector<8x32xf32>
    %256 = arith.addf %254, %255 : vector<8x32xf32>
    %257 = arith.addf %210, %256 : vector<8x32xf32>
    %cst_89 = arith.constant dense<0.000000e+00> : vector<8xf32>
    %258 = vector.multi_reduction <add>, %257, %cst_89 [1] : vector<8x32xf32> to vector<8xf32>
    %259 = vector.shape_cast %258 : vector<8xf32> to vector<8x1xf32>
    %cst_90 = arith.constant 3.200000e+01 : f32
    %260 = vector.broadcast %cst_90 : f32 to vector<8x1xf32>
    %261 = arith.divf %259, %260 : vector<8x1xf32>
    %262 = vector.broadcast %261 : vector<8x1xf32> to vector<8x32xf32>
    %263 = arith.subf %257, %262 : vector<8x32xf32>
    %264 = arith.mulf %263, %263 : vector<8x32xf32>
    %cst_91 = arith.constant dense<0.000000e+00> : vector<8xf32>
    %265 = vector.multi_reduction <add>, %264, %cst_91 [1] : vector<8x32xf32> to vector<8xf32>
    %266 = vector.shape_cast %265 : vector<8xf32> to vector<8x1xf32>
    %cst_92 = arith.constant 3.200000e+01 : f32
    %267 = vector.broadcast %cst_92 : f32 to vector<8x1xf32>
    %268 = arith.divf %266, %267 : vector<8x1xf32>
    %269 = vector.broadcast %261 : vector<8x1xf32> to vector<8x32xf32>
    %270 = arith.subf %257, %269 : vector<8x32xf32>
    %cst_93 = arith.constant 9.99999974E-6 : f32
    %271 = vector.broadcast %cst_93 : f32 to vector<8x1xf32>
    %272 = arith.addf %268, %271 : vector<8x1xf32>
    %273 = math.rsqrt %272 : vector<8x1xf32>
    %274 = vector.broadcast %273 : vector<8x1xf32> to vector<8x32xf32>
    %275 = arith.mulf %270, %274 : vector<8x32xf32>
    %276 = vector.broadcast %153 : vector<1x32xf32> to vector<8x32xf32>
    %277 = arith.mulf %275, %276 : vector<8x32xf32>
    %278 = vector.broadcast %154 : vector<1x32xf32> to vector<8x32xf32>
    %279 = arith.addf %277, %278 : vector<8x32xf32>
    %c688 = arith.constant 688 : index
    %c0_94 = arith.constant 0 : index
    %280 = vector.load %arg2[%c688, %c0_94] : memref<744x128xf32, #tpu.memory_space<vmem>>, vector<32x48xf32>
    %cst_95 = arith.constant dense<0.000000e+00> : vector<8x48xf32>
    %281 = tpu.matmul %279, %280, %cst_95 {dimension_numbers = #tpu.dot_dimension_numbers<[1], [0], [0], [1], [0, 0, 1, 1], [], []>} : vector<8x32xf32>, vector<32x48xf32>, vector<8x48xf32> -> vector<8x48xf32>
    %c720 = arith.constant 720 : index
    %c0_96 = arith.constant 0 : index
    %282 = vector.load %arg2[%c720, %c0_96] : memref<744x128xf32, #tpu.memory_space<vmem>>, vector<1x48xf32>
    %283 = vector.broadcast %282 : vector<1x48xf32> to vector<8x48xf32>
    %284 = arith.addf %281, %283 : vector<8x48xf32>
    %c728 = arith.constant 728 : index
    %c0_97 = arith.constant 0 : index
    %285 = vector.load %arg2[%c728, %c0_97] : memref<744x128xf32, #tpu.memory_space<vmem>>, vector<1x48xf32>
    %cst_98 = arith.constant dense<0.000000e+00> : vector<1x8xf32>
    %286 = tpu.matmul %285, %284, %cst_98 {dimension_numbers = #tpu.dot_dimension_numbers<[1], [1], [0], [0], [0, 0, 1, 0], [], []>} : vector<1x48xf32>, vector<8x48xf32>, vector<1x8xf32> -> vector<1x8xf32>
    %c736 = arith.constant 736 : index
    %c0_99 = arith.constant 0 : index
    %287 = vector.load %arg2[%c736, %c0_99] : memref<744x128xf32, #tpu.memory_space<vmem>>, vector<1x1xf32>
    %288 = vector.broadcast %287 : vector<1x1xf32> to vector<1x8xf32>
    %289 = arith.addf %286, %288 : vector<1x8xf32>
    %c0_100 = arith.constant 0 : index
    %c0_101 = arith.constant 0 : index
    %c0_102 = arith.constant 0 : index
    %290 = vector.load %arg3[%c0_100, %c0_101, %c0_102] : memref<1x1x8xf32, #tpu.memory_space<vmem>>, vector<1x1x8xf32>
    %291 = vector.shape_cast %290 : vector<1x1x8xf32> to vector<1x8xf32>
    %292 = vector.shape_cast %289 : vector<1x8xf32> to vector<1x1x8xf32>
    tpu.vector_store %arg3[%c0_100, %c0_101, %c0_102], %292 {strides = array<i32>} : memref<1x1x8xf32, #tpu.memory_space<vmem>>, vector<1x1x8xf32>,
    return
  }
  func.func @transform_0(%arg0: i32) -> (i32, i32, i32) {
    %c0_i32 = arith.constant 0 : i32
    %c0_i32_0 = arith.constant 0 : i32
    %c0_i32_1 = arith.constant 0 : i32
    return %arg0, %c0_i32, %c0_i32_0 : i32, i32, i32
  }
  func.func @transform_1(%arg0: i32) -> (i32, i32) {
    %c0_i32 = arith.constant 0 : i32
    %c0_i32_0 = arith.constant 0 : i32
    %c0_i32_1 = arith.constant 0 : i32
    return %c0_i32, %c0_i32_0 : i32, i32
  }
  func.func @transform_2(%arg0: i32) -> (i32, i32, i32) {
    %c0_i32 = arith.constant 0 : i32
    %c0_i32_0 = arith.constant 0 : i32
    %c0_i32_1 = arith.constant 0 : i32
    return %arg0, %c0_i32, %c0_i32_0 : i32, i32, i32
  }
}

</mosaic_0001>

<llo_original>
// kernel: tpu_custom_call.1
$region0: #{tpu_custom_call.1}
  #allocation0 [shape = 'u32[]', space=smem, size = 0x4, offset = 0x4, fixed_abs, tag = 'smem constant byte address 0x4 - core index']
  #allocation1 [shape = 'u32[144,128]{1,0:T(1,128)}', space=vmem, size = 0x12000, scoped, tag = 'internal scratch']
  %s0 = inlined_call_operand.hbm [shape: f32[2,8,32], index: 0, kind: input, shape index: {}]
  %s1 = inlined_call_operand.hbm [shape: f32[744,128], index: 1, kind: input, shape index: {}]
  %s2 = inlined_call_operand.hbm [shape: f32[2,1,8], index: 2, kind: output, shape index: {}]
  %s3 = sld [smem:[#allocation0]]
  $region49: #{tpu_custom_call.1} parent=0
    _
  %s5 = ssub.s32 1, %s3
  %s6 = scalar_select 0, %s5, %s3
  $region1: #{tpu_custom_call.1} parent=0
    #allocation2 [shape = 'u8[8192]{0}', space=vmem, size = 0x2000, scoped, tag = 'input window, operand 0']
    #allocation3 [shape = 's32[2]{0}', space=sflag, size = 0x8, scoped, tag = 'scoped memory for tpu_custom_call.1']
    #allocation4 [shape = 's32[2]{0}', space=sflag, size = 0x8, scoped, tag = 'scoped memory for tpu_custom_call.1']
    #allocation5 [shape = 'u8[380928]{0}', space=vmem, size = 0x5d000, scoped, tag = 'input window, operand 1, single buffered']
    #allocation6 [shape = 's32[1]{0}', space=sflag, size = 0x4, scoped, tag = 'scoped memory for tpu_custom_call.1']
    #allocation7 [shape = 'u8[1024]{0}', space=vmem, size = 0x400, scoped, tag = 'output window, operand 0']
    %7 = vsyncpa [#allocation3], 0
    %s8 = scalar_lea.sflag [#allocation3], 1
    %9 = vsyncpa %s8, 0
    %10 = vsyncpa [#allocation6], 0
    %11 = vsyncpa [#allocation4], 0
    %s12 = scalar_lea.sflag [#allocation4], 1
    %13 = vsyncpa %s12, 0
    loop: start=0, step=1, limit=4
    $region2: #{tpu_custom_call.1} parent=1 // loop_pre_header
      _
    $region3: #{tpu_custom_call.1} parent=1 // loop_header
      %s15 = sphi 0, %s19
      %p16 = scmp.ge.s32.totalorder %s15, 4
      %s25 = sphi 0, %s27
      %s28 = sphi 0, %s25
      %s29 = sphi 0, %s28
      %s45 = sphi 0, %s29
      %s49 = sphi 0, %s49
      %s51 = sphi 0, %s49
      %s52 = sphi 0, %s51
      %s66 = sphi 0, %s52
      %s72 = sphi 0, %s74
      %s75 = sphi 0, %s72
      %s76 = sphi 0, %s75
      %s92 = sphi 0, %s76
    $region4: #{tpu_custom_call.1} parent=1 // loop_header_branch
      %18 = sbr.rel (%p16) target = $region8
    $region5: #{tpu_custom_call.1} parent=1 // loop_body
      %s20 = ssub.s32 %s15, 1
      %s21 = ssub.s32 %s15, 2
      %s22 = sadd.s32 %s15, 1
      %s23 = ssub.s32 %s15, %s22
      %p24 = scmp.eq.s32.totalorder %s23, 0
      %s26 = sadd.s32 %s25, 1
      %s27 = scalar_select %p24, %s25, %s26
      %p30 = pneg %p24
      %p31 = scmp.eq.s32.totalorder %s15, 1
      %p32 = por %p30, %p31
      %p33 = scmp.ne.s32.totalorder %s25, %s28
      %p34 = scmp.eq.s32.totalorder %s15, 0
      %p35 = por %p33, %p34
      %p36 = scmp.ne.s32.totalorder %s25, %s28
      %p37 = scmp.eq.s32.totalorder %s20, 1
      %p38 = por %p36, %p37
      %p39 = scmp.ne.s32.totalorder %s28, %s29
      %p40 = scmp.eq.s32.totalorder %s20, 0
      %p41 = por %p39, %p40
      %p42 = scmp.ne.s32.totalorder %s28, %s29
      %p43 = scmp.eq.s32.totalorder %s21, 1
      %p44 = por %p42, %p43
      %p46 = scmp.ne.s32.totalorder %s29, %s45
      %p47 = scmp.eq.s32.totalorder %s21, 0
      %p48 = por %p46, %p47
      %s50 = sadd.s32 %s49, 1
      %p53 = scmp.eq.s32.totalorder %s15, 1
      %p54 = scmp.ne.s32.totalorder %s49, %s51
      %p55 = scmp.eq.s32.totalorder %s15, 0
      %p56 = por %p54, %p55
      %p57 = scmp.ne.s32.totalorder %s49, %s51
      %p58 = scmp.eq.s32.totalorder %s20, 1
      %p59 = por %p57, %p58
      %p60 = scmp.ne.s32.totalorder %s51, %s52
      %p61 = scmp.eq.s32.totalorder %s20, 0
      %p62 = por %p60, %p61
      %p63 = scmp.ne.s32.totalorder %s51, %s52
      %p64 = scmp.eq.s32.totalorder %s21, 1
      %p65 = por %p63, %p64
      %p67 = scmp.ne.s32.totalorder %s52, %s66
      %p68 = scmp.eq.s32.totalorder %s21, 0
      %p69 = por %p67, %p68
      %s70 = ssub.s32 %s15, %s22
      %p71 = scmp.eq.s32.totalorder %s70, 0
      %s73 = sadd.s32 %s72, 1
      %s74 = scalar_select %p71, %s72, %s73
      %p77 = pneg %p71
      %p78 = scmp.eq.s32.totalorder %s15, 1
      %p79 = por %p77, %p78
      %p80 = scmp.ne.s32.totalorder %s72, %s75
      %p81 = scmp.eq.s32.totalorder %s15, 0
      %p82 = por %p80, %p81
      %p83 = scmp.ne.s32.totalorder %s72, %s75
      %p84 = scmp.eq.s32.totalorder %s20, 1
      %p85 = por %p83, %p84
      %p86 = scmp.ne.s32.totalorder %s75, %s76
      %p87 = scmp.eq.s32.totalorder %s20, 0
      %p88 = por %p86, %p87
      %p89 = scmp.ne.s32.totalorder %s75, %s76
      %p90 = scmp.eq.s32.totalorder %s21, 1
      %p91 = por %p89, %p90
      %p93 = scmp.ne.s32.totalorder %s76, %s92
      %p94 = scmp.eq.s32.totalorder %s21, 0
      %p95 = por %p93, %p94
      %p96 = scmp.le.s32.totalorder 1, %s15
      %p97 = scmp.lt.s32.totalorder %s15, 3
      %p98 = pnand %p96, %p97
      %p99 = pneg %p98
      // Predicated region
      $region9: #{tpu_custom_call.1} parent=5 // pred_check
        _
      $region10: #{tpu_custom_call.1} parent=5 // pred_check_branch
        %101 = sbr.rel (%p98) target = $region12
      $region11: #{tpu_custom_call.1} parent=5 // pred_region
        %s102 = ssub.s32 %s15, 1
        // Predicated region
        $region13: #{tpu_custom_call.1} parent=11 // pred_check
          %p103 = pneg %p62
        $region14: #{tpu_custom_call.1} parent=11 // pred_check_branch
          %105 = sbr.rel (%p103) target = $region16
        $region15: #{tpu_custom_call.1} parent=11 // pred_region
          %s107 = ssub.s32 11904, 11904
          %108 = vsyncadd [#allocation6], %s107
          %s109 = sshll.u32 [#allocation5], 4
          %s110 = int_to_ptr.vmem [resolvable:$true] %s109
          %115 = dma.hbm_to_vmem [thread:$0]  %s1, 11904, %s110, [#allocation6], 128, 128, 8
        $region16: #{tpu_custom_call.1} parent=11 // pred_fallthru
          _
      $region12: #{tpu_custom_call.1} parent=5 // pred_fallthru
        _
      %p116 = scmp.lt.s32.totalorder %s15, 2
      // Predicated region
      $region17: #{tpu_custom_call.1} parent=5 // pred_check
        %p117 = pneg %p116
      $region18: #{tpu_custom_call.1} parent=5 // pred_check_branch
        %119 = sbr.rel (%p117) target = $region20
      $region19: #{tpu_custom_call.1} parent=5 // pred_region
        // Predicated region
        $region21: #{tpu_custom_call.1} parent=19 // pred_check
          %p120 = pneg %p35
        $region22: #{tpu_custom_call.1} parent=19 // pred_check_branch
          %122 = sbr.rel (%p120) target = $region24
        $region23: #{tpu_custom_call.1} parent=19 // pred_region
          %s123 = sand.u32 %s25, 1
          %s124 = scalar_lea.sflag [#allocation3], %s123
          %s125 = sand.u32 %s25, 1
          %s126 = smul.addr %s125, 8
          %s127 = scalar_lea.vmem [#allocation2], %s126
          %s129 = ssub.s32 128, 128
          %130 = vsyncadd %s124, %s129
          %s131 = smul.addr %s15, 128
          %s132 = scalar_lea.hbm %s0, %s131
          %s134 = sshll.u32 %s127, 4
          %s135 = int_to_ptr.vmem [resolvable:$true] %s134
          %137 = dma.hbm_to_vmem [thread:$0]  %s132, 128, %s135, %s124
        $region24: #{tpu_custom_call.1} parent=19 // pred_fallthru
          _
      $region20: #{tpu_custom_call.1} parent=5 // pred_fallthru
        _
      %p138 = scmp.le.s32.totalorder 1, %s15
      %p139 = scmp.lt.s32.totalorder %s15, 3
      %p140 = pnand %p138, %p139
      %p141 = pneg %p140
      // Predicated region
      $region25: #{tpu_custom_call.1} parent=5 // pred_check
        _
      $region26: #{tpu_custom_call.1} parent=5 // pred_check_branch
        %143 = sbr.rel (%p140) target = $region28
      $region27: #{tpu_custom_call.1} parent=5 // pred_region
        %s144 = ssub.s32 %s15, 1
        %s145 = sand.u32 %s28, 1
        %s146 = scalar_lea.sflag [#allocation3], %s145
        %s147 = sand.u32 %s28, 1
        %s148 = smul.addr %s147, 8
        %s149 = scalar_lea.vmem [#allocation2], %s148
        // Predicated region
        $region29: #{tpu_custom_call.1} parent=27 // pred_check
          %p150 = pneg %p41
        $region30: #{tpu_custom_call.1} parent=27 // pred_check_branch
          %152 = sbr.rel (%p150) target = $region32
        $region31: #{tpu_custom_call.1} parent=27 // pred_region
          %153 = dma.done %s146, 128
        $region32: #{tpu_custom_call.1} parent=27 // pred_fallthru
          _
        // Predicated region
        $region33: #{tpu_custom_call.1} parent=27 // pred_check
          %p154 = pneg %p62
        $region34: #{tpu_custom_call.1} parent=27 // pred_check_branch
          %156 = sbr.rel (%p154) target = $region36
        $region35: #{tpu_custom_call.1} parent=27 // pred_region
          %157 = dma.done [#allocation6], 11904
        $region36: #{tpu_custom_call.1} parent=27 // pred_fallthru
          _
        %s158 = sand.u32 %s28, 1
        %s159 = scalar_lea.sflag [#allocation3], %s158
        %s160 = sand.u32 %s28, 1
        %s161 = smul.addr %s160, 8
        %s162 = scalar_lea.vmem [#allocation2], %s161
        %p163 = pneg %p41
        %p164 = pneg %p38
        %p165 = pneg %p62
        %p166 = pneg %p59
        %p167 = pneg %p88
        %p168 = pneg %p85
        %s169 = sand.u32 %s75, 1
        %s170 = scalar_lea.sflag [#allocation4], %s169
        %s171 = sand.u32 %s75, 1
        %s172 = scalar_lea.vmem [#allocation7], %s171
        %v173 = vld [vmem:[%s149] sm:$0xff]
        %v174 = vld [vmem:[#allocation5] sm:$0xff]
        %v175 = vld [vmem:[#allocation5 + $0x8] sm:$0xff]
        %v176 = vld [vmem:[#allocation5 + $0x10] sm:$0xff]
        %v177 = vld [vmem:[#allocation5 + $0x18] sm:$0xff]
        %v178 = vld [vmem:[#allocation5 + $0x20] sm:$0xff]
        %v179 = vld [vmem:[#allocation5 + $0x28] sm:$0xff]
        %v180 = vld [vmem:[#allocation5 + $0x30] sm:$0xff]
        %v181 = vld [vmem:[#allocation5 + $0x38] sm:$0xff]
        %v182 = vld [vmem:[#allocation5 + $0x40] sm:$0xff]
        %v183 = vld [vmem:[#allocation5 + $0x48] sm:$0xff]
        %v184 = vld [vmem:[#allocation5 + $0x50] sm:$0xff]
        %v185 = vld [vmem:[#allocation5 + $0x58] sm:$0xff]
        %v186 = vld [vmem:[#allocation5 + $0x60] sm:$0xff]
        %v187 = vld [vmem:[#allocation5 + $0x68] sm:$0xff]
        %v188 = vld [vmem:[#allocation5 + $0x70] sm:$0xff]
        %v189 = vld [vmem:[#allocation5 + $0x78] sm:$0xff]
        %v190 = vld [vmem:[#allocation5 + $0x80] sm:$0xff]
        %v191 = vld [vmem:[#allocation5 + $0x88] sm:$0xff]
        %v192 = vld [vmem:[#allocation5 + $0x90] sm:$0xff]
        %v193 = vld [vmem:[#allocation5 + $0x98] sm:$0xff]
        %v194 = vld [vmem:[#allocation5 + $0xa0] sm:$0xff]
        %v195 = vld [vmem:[#allocation5 + $0xa8] sm:$0xff]
        %v196 = vld [vmem:[#allocation5 + $0xb0] sm:$0xff]
        %v197 = vld [vmem:[#allocation5 + $0xb8] sm:$0xff]
        %v198 = vld [vmem:[#allocation5 + $0xc0] sm:$0x1]
        %v199 = vld [vmem:[#allocation5 + $0xc8] sm:$0x1]
        %v200 = vld [vmem:[#allocation5 + $0xd0] sm:$0x1]
        %v201 = vld [vmem:[#allocation5 + $0xd8] sm:$0xff]
        %v202 = vld [vmem:[#allocation5 + $0xe0] sm:$0xff]
        %v203 = vld [vmem:[#allocation5 + $0xe8] sm:$0xff]
        %v204 = vld [vmem:[#allocation5 + $0xf0] sm:$0xff]
        %v205 = vld [vmem:[#allocation5 + $0xf8] sm:$0x1]
        %v206 = vld [vmem:[#allocation5 + $0x100] sm:$0xff]
        %v207 = vld [vmem:[#allocation5 + $0x108] sm:$0xff]
        %v208 = vld [vmem:[#allocation5 + $0x110] sm:$0xff]
        %v209 = vld [vmem:[#allocation5 + $0x118] sm:$0xff]
        %v210 = vld [vmem:[#allocation5 + $0x120] sm:$0xff]
        %v211 = vld [vmem:[#allocation5 + $0x128] sm:$0xff]
        %v212 = vld [vmem:[#allocation5 + $0x130] sm:$0xff]
        %v213 = vld [vmem:[#allocation5 + $0x138] sm:$0xff]
        %v214 = vld [vmem:[#allocation5 + $0x140] sm:$0x1]
        %v215 = vld [vmem:[#allocation5 + $0x148] sm:$0x1]
        %v216 = vld [vmem:[#allocation5 + $0x150] sm:$0x1]
        %vm217 = vcmask 261120
        %v219 = vsel %vm217, %v173, 0
        %221 = vmatprep.subr.mxu0 0.0
        %222 = vmatpush1.msra.mxu0 0.0
        %223 = vmatprep.subr.mxu0 0.0
        %224 = vmatpush1.msra.mxu0 0.0
        %225 = vmatprep.subr.mxu0 0.0
        %226 = vmatpush1.msra.mxu0 0.0
        %227 = vmatprep.subr.mxu0 0.0
        %228 = vmatpush1.msra.mxu0 0.0
        %229 = vmatprep.subr.mxu0 0.0
        %230 = vmatpush1.msra.mxu0 0.0
        %231 = vmatprep.subr.mxu0 0.0
        %232 = vmatpush1.msra.mxu0 0.0
        %233 = vmatprep.subr.mxu0 0.0
        %234 = vmatpush1.msra.mxu0 0.0
        %235 = vmatprep.subr.mxu0 0.0
        %236 = vmatpush1.msra.mxu0 0.0
        %237 = vmatprep.subr.mxu0 0.0
        %238 = vmatpush1.msra.mxu0 0.0
        %239 = vmatprep.subr.mxu0 0.0
        %240 = vmatpush1.msra.mxu0 0.0
        %241 = vmatprep.subr.mxu0 0.0
        %242 = vmatpush1.msra.mxu0 0.0
        %243 = vmatprep.subr.mxu0 0.0
        %244 = vmatpush1.msra.mxu0 0.0
        %245 = vmatprep.subr.mxu0 0.0
        %246 = vmatpush1.msra.mxu0 %v177
        %247 = vmatprep.subr.mxu0 0.0
        %248 = vmatpush1.msra.mxu0 %v176
        %249 = vmatprep.subr.mxu0 0.0
        %250 = vmatpush1.msra.mxu0 %v175
        %251 = vmatprep.subr.mxu0 0.0
        %252 = vmatpush1.msra.mxu0 %v174
        %253 = vmatprep.subr.mxu0 0.0
        %254 = vmatpush2.msra.mxu0 0.0
        %255 = vmatprep.subr.mxu0 0.0
        %256 = vmatpush2.msra.mxu0 0.0
        %257 = vmatprep.subr.mxu0 0.0
        %258 = vmatpush2.msra.mxu0 0.0
        %259 = vmatprep.subr.mxu0 0.0
        %260 = vmatpush2.msra.mxu0 0.0
        %261 = vmatprep.subr.mxu0 0.0
        %262 = vmatpush2.msra.mxu0 0.0
        %263 = vmatprep.subr.mxu0 0.0
        %264 = vmatpush2.msra.mxu0 0.0
        %265 = vmatprep.subr.mxu0 0.0
        %266 = vmatpush2.msra.mxu0 0.0
        %267 = vmatprep.subr.mxu0 0.0
        %268 = vmatpush2.msra.mxu0 0.0
        %269 = vmatprep.subr.mxu0 0.0
        %270 = vmatpush2.msra.mxu0 0.0
        %271 = vmatprep.subr.mxu0 0.0
        %272 = vmatpush2.msra.mxu0 0.0
        %273 = vmatprep.subr.mxu0 0.0
        %274 = vmatpush2.msra.mxu0 0.0
        %275 = vmatprep.subr.mxu0 0.0
        %276 = vmatpush2.msra.mxu0 0.0
        %277 = vmatprep.subr.mxu0 0.0
        %278 = vmatpush2.msra.mxu0 0.0
        %279 = vmatprep.subr.mxu0 0.0
        %280 = vmatpush2.msra.mxu0 0.0
        %281 = vmatprep.subr.mxu0 0.0
        %282 = vmatpush2.msra.mxu0 0.0
        %283 = vmatprep.subr.mxu0 0.0
        %284 = vmatpush2.msra.mxu0 0.0
        %285 = vmatprep.mubr.f32.mxu0 0.0
        %286 = vmatmul.mubr.f32.gmra.mxu0 %v219
        %v287 = vpop.f32.mrf.mxu0
        %v288 = vadd.f32 %v190, %v287
        %v289 = vpop.f32.mrf.mxu0
        %290 = vdwg.mxu0
        %291 = vmatprep.subr.mxu0 0.0
        %292 = vmatpush1.msra.mxu0 0.0
        %293 = vmatprep.subr.mxu0 0.0
        %294 = vmatpush1.msra.mxu0 0.0
        %295 = vmatprep.subr.mxu0 0.0
        %296 = vmatpush1.msra.mxu0 0.0
        %297 = vmatprep.subr.mxu0 0.0
        %298 = vmatpush1.msra.mxu0 0.0
        %299 = vmatprep.subr.mxu0 0.0
        %300 = vmatpush1.msra.mxu0 0.0
        %301 = vmatprep.subr.mxu0 0.0
        %302 = vmatpush1.msra.mxu0 0.0
        %303 = vmatprep.subr.mxu0 0.0
        %304 = vmatpush1.msra.mxu0 0.0
        %305 = vmatprep.subr.mxu0 0.0
        %306 = vmatpush1.msra.mxu0 0.0
        %307 = vmatprep.subr.mxu0 0.0
        %308 = vmatpush1.msra.mxu0 0.0
        %309 = vmatprep.subr.mxu0 0.0
        %310 = vmatpush1.msra.mxu0 0.0
        %311 = vmatprep.subr.mxu0 0.0
        %312 = vmatpush1.msra.mxu0 0.0
        %313 = vmatprep.subr.mxu0 0.0
        %314 = vmatpush1.msra.mxu0 0.0
        %315 = vmatprep.subr.mxu0 0.0
        %316 = vmatpush1.msra.mxu0 %v181
        %317 = vmatprep.subr.mxu0 0.0
        %318 = vmatpush1.msra.mxu0 %v180
        %319 = vmatprep.subr.mxu0 0.0
        %320 = vmatpush1.msra.mxu0 %v179
        %321 = vmatprep.subr.mxu0 0.0
        %322 = vmatpush1.msra.mxu0 %v178
        %323 = vmatprep.subr.mxu0 0.0
        %324 = vmatpush2.msra.mxu0 0.0
        %325 = vmatprep.subr.mxu0 0.0
        %326 = vmatpush2.msra.mxu0 0.0
        %327 = vmatprep.subr.mxu0 0.0
        %328 = vmatpush2.msra.mxu0 0.0
        %329 = vmatprep.subr.mxu0 0.0
        %330 = vmatpush2.msra.mxu0 0.0
        %331 = vmatprep.subr.mxu0 0.0
        %332 = vmatpush2.msra.mxu0 0.0
        %333 = vmatprep.subr.mxu0 0.0
        %334 = vmatpush2.msra.mxu0 0.0
        %335 = vmatprep.subr.mxu0 0.0
        %336 = vmatpush2.msra.mxu0 0.0
        %337 = vmatprep.subr.mxu0 0.0
        %338 = vmatpush2.msra.mxu0 0.0
        %339 = vmatprep.subr.mxu0 0.0
        %340 = vmatpush2.msra.mxu0 0.0
        %341 = vmatprep.subr.mxu0 0.0
        %342 = vmatpush2.msra.mxu0 0.0
        %343 = vmatprep.subr.mxu0 0.0
        %344 = vmatpush2.msra.mxu0 0.0
        %345 = vmatprep.subr.mxu0 0.0
        %346 = vmatpush2.msra.mxu0 0.0
        %347 = vmatprep.subr.mxu0 0.0
        %348 = vmatpush2.msra.mxu0 0.0
        %349 = vmatprep.subr.mxu0 0.0
        %350 = vmatpush2.msra.mxu0 0.0
        %351 = vmatprep.subr.mxu0 0.0
        %352 = vmatpush2.msra.mxu0 0.0
        %353 = vmatprep.subr.mxu0 0.0
        %354 = vmatpush2.msra.mxu0 0.0
        %355 = vmatprep.mubr.f32.mxu0 0.0
        %356 = vmatmul.mubr.f32.gmra.mxu0 %v219
        %v357 = vpop.f32.mrf.mxu0
        %v358 = vadd.f32 %v191, %v357
        %v359 = vpop.f32.mrf.mxu0
        %360 = vdwg.mxu0
        %361 = vmatprep.subr.mxu0 0.0
        %362 = vmatpush1.msra.mxu0 0.0
        %363 = vmatprep.subr.mxu0 0.0
        %364 = vmatpush1.msra.mxu0 0.0
        %365 = vmatprep.subr.mxu0 0.0
        %366 = vmatpush1.msra.mxu0 0.0
        %367 = vmatprep.subr.mxu0 0.0
        %368 = vmatpush1.msra.mxu0 0.0
        %369 = vmatprep.subr.mxu0 0.0
        %370 = vmatpush1.msra.mxu0 0.0
        %371 = vmatprep.subr.mxu0 0.0
        %372 = vmatpush1.msra.mxu0 0.0
        %373 = vmatprep.subr.mxu0 0.0
        %374 = vmatpush1.msra.mxu0 0.0
        %375 = vmatprep.subr.mxu0 0.0
        %376 = vmatpush1.msra.mxu0 0.0
        %377 = vmatprep.subr.mxu0 0.0
        %378 = vmatpush1.msra.mxu0 0.0
        %379 = vmatprep.subr.mxu0 0.0
        %380 = vmatpush1.msra.mxu0 0.0
        %381 = vmatprep.subr.mxu0 0.0
        %382 = vmatpush1.msra.mxu0 0.0
        %383 = vmatprep.subr.mxu0 0.0
        %384 = vmatpush1.msra.mxu0 0.0
        %385 = vmatprep.subr.mxu0 0.0
        %386 = vmatpush1.msra.mxu0 %v185
        %387 = vmatprep.subr.mxu0 0.0
        %388 = vmatpush1.msra.mxu0 %v184
        %389 = vmatprep.subr.mxu0 0.0
        %390 = vmatpush1.msra.mxu0 %v183
        %391 = vmatprep.subr.mxu0 0.0
        %392 = vmatpush1.msra.mxu0 %v182
        %393 = vmatprep.subr.mxu0 0.0
        %394 = vmatpush2.msra.mxu0 0.0
        %395 = vmatprep.subr.mxu0 0.0
        %396 = vmatpush2.msra.mxu0 0.0
        %397 = vmatprep.subr.mxu0 0.0
        %398 = vmatpush2.msra.mxu0 0.0
        %399 = vmatprep.subr.mxu0 0.0
        %400 = vmatpush2.msra.mxu0 0.0
        %401 = vmatprep.subr.mxu0 0.0
        %402 = vmatpush2.msra.mxu0 0.0
        %403 = vmatprep.subr.mxu0 0.0
        %404 = vmatpush2.msra.mxu0 0.0
        %405 = vmatprep.subr.mxu0 0.0
        %406 = vmatpush2.msra.mxu0 0.0
        %407 = vmatprep.subr.mxu0 0.0
        %408 = vmatpush2.msra.mxu0 0.0
        %409 = vmatprep.subr.mxu0 0.0
        %410 = vmatpush2.msra.mxu0 0.0
        %411 = vmatprep.subr.mxu0 0.0
        %412 = vmatpush2.msra.mxu0 0.0
        %413 = vmatprep.subr.mxu0 0.0
        %414 = vmatpush2.msra.mxu0 0.0
        %415 = vmatprep.subr.mxu0 0.0
        %416 = vmatpush2.msra.mxu0 0.0
        %417 = vmatprep.subr.mxu0 0.0
        %418 = vmatpush2.msra.mxu0 0.0
        %419 = vmatprep.subr.mxu0 0.0
        %420 = vmatpush2.msra.mxu0 0.0
        %421 = vmatprep.subr.mxu0 0.0
        %422 = vmatpush2.msra.mxu0 0.0
        %423 = vmatprep.subr.mxu0 0.0
        %424 = vmatpush2.msra.mxu0 0.0
        %425 = vmatprep.mubr.f32.mxu0 0.0
        %426 = vmatmul.mubr.f32.gmra.mxu0 %v219
        %v427 = vpop.f32.mrf.mxu0
        %v428 = vadd.f32 %v192, %v427
        %v429 = vpop.f32.mrf.mxu0
        %430 = vdwg.mxu0
        %431 = vmatprep.subr.mxu0 0.0
        %432 = vmatpush1.msra.mxu0 0.0
        %433 = vmatprep.subr.mxu0 0.0
        %434 = vmatpush1.msra.mxu0 0.0
        %435 = vmatprep.subr.mxu0 0.0
        %436 = vmatpush1.msra.mxu0 0.0
        %437 = vmatprep.subr.mxu0 0.0
        %438 = vmatpush1.msra.mxu0 0.0
        %439 = vmatprep.subr.mxu0 0.0
        %440 = vmatpush1.msra.mxu0 0.0
        %441 = vmatprep.subr.mxu0 0.0
        %442 = vmatpush1.msra.mxu0 0.0
        %443 = vmatprep.subr.mxu0 0.0
        %444 = vmatpush1.msra.mxu0 0.0
        %445 = vmatprep.subr.mxu0 0.0
        %446 = vmatpush1.msra.mxu0 0.0
        %447 = vmatprep.subr.mxu0 0.0
        %448 = vmatpush1.msra.mxu0 0.0
        %449 = vmatprep.subr.mxu0 0.0
        %450 = vmatpush1.msra.mxu0 0.0
        %451 = vmatprep.subr.mxu0 0.0
        %452 = vmatpush1.msra.mxu0 0.0
        %453 = vmatprep.subr.mxu0 0.0
        %454 = vmatpush1.msra.mxu0 0.0
        %455 = vmatprep.subr.mxu0 0.0
        %456 = vmatpush1.msra.mxu0 %v189
        %457 = vmatprep.subr.mxu0 0.0
        %458 = vmatpush1.msra.mxu0 %v188
        %459 = vmatprep.subr.mxu0 0.0
        %460 = vmatpush1.msra.mxu0 %v187
        %461 = vmatprep.subr.mxu0 0.0
        %462 = vmatpush1.msra.mxu0 %v186
        %463 = vmatprep.subr.mxu0 0.0
        %464 = vmatpush2.msra.mxu0 0.0
        %465 = vmatprep.subr.mxu0 0.0
        %466 = vmatpush2.msra.mxu0 0.0
        %467 = vmatprep.subr.mxu0 0.0
        %468 = vmatpush2.msra.mxu0 0.0
        %469 = vmatprep.subr.mxu0 0.0
        %470 = vmatpush2.msra.mxu0 0.0
        %471 = vmatprep.subr.mxu0 0.0
        %472 = vmatpush2.msra.mxu0 0.0
        %473 = vmatprep.subr.mxu0 0.0
        %474 = vmatpush2.msra.mxu0 0.0
        %475 = vmatprep.subr.mxu0 0.0
        %476 = vmatpush2.msra.mxu0 0.0
        %477 = vmatprep.subr.mxu0 0.0
        %478 = vmatpush2.msra.mxu0 0.0
        %479 = vmatprep.subr.mxu0 0.0
        %480 = vmatpush2.msra.mxu0 0.0
        %481 = vmatprep.subr.mxu0 0.0
        %482 = vmatpush2.msra.mxu0 0.0
        %483 = vmatprep.subr.mxu0 0.0
        %484 = vmatpush2.msra.mxu0 0.0
        %485 = vmatprep.subr.mxu0 0.0
        %486 = vmatpush2.msra.mxu0 0.0
        %487 = vmatprep.subr.mxu0 0.0
        %488 = vmatpush2.msra.mxu0 0.0
        %489 = vmatprep.subr.mxu0 0.0
        %490 = vmatpush2.msra.mxu0 0.0
        %491 = vmatprep.subr.mxu0 0.0
        %492 = vmatpush2.msra.mxu0 0.0
        %493 = vmatprep.subr.mxu0 0.0
        %494 = vmatpush2.msra.mxu0 0.0
        %495 = vmatprep.mubr.f32.mxu0 0.0
        %496 = vmatmul.mubr.f32.gmra.mxu0 %v219
        %v497 = vpop.f32.mrf.mxu0
        %v498 = vadd.f32 %v193, %v497
        %v499 = vpop.f32.mrf.mxu0
        %500 = vdwg.mxu0
        %502 = vrot.lane.b32.xlu0 %v288, 120
        %v503 = vpop.permute.xlu0 %502
        %vm504 = vcmask 64512
        %v505 = vsel %vm504, %v288, 0
        %v507 = vsel %vm504, %v503, 0
        %509 = vmatprep.subr.mxu0 0.0
        %510 = vmatpush1.xpose.msra.mxu0 0.0
        %511 = vmatprep.subr.mxu0 0.0
        %512 = vmatpush1.xpose.msra.mxu0 0.0
        %513 = vmatprep.subr.mxu0 0.0
        %514 = vmatpush1.xpose.msra.mxu0 0.0
        %515 = vmatprep.subr.mxu0 0.0
        %516 = vmatpush1.xpose.msra.mxu0 0.0
        %517 = vmatprep.subr.mxu0 0.0
        %518 = vmatpush1.xpose.msra.mxu0 0.0
        %519 = vmatprep.subr.mxu0 0.0
        %520 = vmatpush1.xpose.msra.mxu0 0.0
        %521 = vmatprep.subr.mxu0 0.0
        %522 = vmatpush1.xpose.msra.mxu0 0.0
        %523 = vmatprep.subr.mxu0 0.0
        %524 = vmatpush1.xpose.msra.mxu0 0.0
        %525 = vmatprep.subr.mxu0 0.0
        %526 = vmatpush1.xpose.msra.mxu0 0.0
        %527 = vmatprep.subr.mxu0 0.0
        %528 = vmatpush1.xpose.msra.mxu0 0.0
        %529 = vmatprep.subr.mxu0 0.0
        %530 = vmatpush1.xpose.msra.mxu0 0.0
        %531 = vmatprep.subr.mxu0 0.0
        %532 = vmatpush1.xpose.msra.mxu0 0.0
        %533 = vmatprep.subr.mxu0 0.0
        %534 = vmatpush1.xpose.msra.mxu0 0.0
        %535 = vmatprep.subr.mxu0 0.0
        %536 = vmatpush1.xpose.msra.mxu0 0.0
        %537 = vmatprep.subr.mxu0 0.0
        %538 = vmatpush1.xpose.msra.mxu0 0.0
        %539 = vmatprep.subr.mxu0 0.0
        %540 = vmatpush1.xpose.msra.mxu0 %v507
        %541 = vmatprep.subr.mxu0 0.0
        %542 = vmatpush2.xpose.msra.mxu0 0.0
        %543 = vmatprep.subr.mxu0 0.0
        %544 = vmatpush2.xpose.msra.mxu0 0.0
        %545 = vmatprep.subr.mxu0 0.0
        %546 = vmatpush2.xpose.msra.mxu0 0.0
        %547 = vmatprep.subr.mxu0 0.0
        %548 = vmatpush2.xpose.msra.mxu0 0.0
        %549 = vmatprep.subr.mxu0 0.0
        %550 = vmatpush2.xpose.msra.mxu0 0.0
        %551 = vmatprep.subr.mxu0 0.0
        %552 = vmatpush2.xpose.msra.mxu0 0.0
        %553 = vmatprep.subr.mxu0 0.0
        %554 = vmatpush2.xpose.msra.mxu0 0.0
        %555 = vmatprep.subr.mxu0 0.0
        %556 = vmatpush2.xpose.msra.mxu0 0.0
        %557 = vmatprep.subr.mxu0 0.0
        %558 = vmatpush2.xpose.msra.mxu0 0.0
        %559 = vmatprep.subr.mxu0 0.0
        %560 = vmatpush2.xpose.msra.mxu0 0.0
        %561 = vmatprep.subr.mxu0 0.0
        %562 = vmatpush2.xpose.msra.mxu0 0.0
        %563 = vmatprep.subr.mxu0 0.0
        %564 = vmatpush2.xpose.msra.mxu0 0.0
        %565 = vmatprep.subr.mxu0 0.0
        %566 = vmatpush2.xpose.msra.mxu0 0.0
        %567 = vmatprep.subr.mxu0 0.0
        %568 = vmatpush2.xpose.msra.mxu0 0.0
        %569 = vmatprep.subr.mxu0 0.0
        %570 = vmatpush2.xpose.msra.mxu0 0.0
        %571 = vmatprep.subr.mxu0 0.0
        %572 = vmatpush2.xpose.msra.mxu0 0.0
        %573 = vmatprep.mubr.f32.mxu0 0.0
        %574 = vmatmul.mubr.f32.gmra.mxu0 %v505
        %v575 = vpop.f32.mrf.mxu0
        %v576 = vadd.f32 0.0, %v575
        %v577 = vpop.f32.mrf.mxu0
        %578 = vdwg.mxu0
        %580 = vrot.lane.b32.xlu0 %v358, 120
        %v581 = vpop.permute.xlu0 %580
        %v582 = vsel %vm504, %v358, 0
        %v584 = vsel %vm504, %v581, 0
        %586 = vmatprep.subr.mxu0 0.0
        %587 = vmatpush1.xpose.msra.mxu0 0.0
        %588 = vmatprep.subr.mxu0 0.0
        %589 = vmatpush1.xpose.msra.mxu0 0.0
        %590 = vmatprep.subr.mxu0 0.0
        %591 = vmatpush1.xpose.msra.mxu0 0.0
        %592 = vmatprep.subr.mxu0 0.0
        %593 = vmatpush1.xpose.msra.mxu0 0.0
        %594 = vmatprep.subr.mxu0 0.0
        %595 = vmatpush1.xpose.msra.mxu0 0.0
        %596 = vmatprep.subr.mxu0 0.0
        %597 = vmatpush1.xpose.msra.mxu0 0.0
        %598 = vmatprep.subr.mxu0 0.0
        %599 = vmatpush1.xpose.msra.mxu0 0.0
        %600 = vmatprep.subr.mxu0 0.0
        %601 = vmatpush1.xpose.msra.mxu0 0.0
        %602 = vmatprep.subr.mxu0 0.0
        %603 = vmatpush1.xpose.msra.mxu0 0.0
        %604 = vmatprep.subr.mxu0 0.0
        %605 = vmatpush1.xpose.msra.mxu0 0.0
        %606 = vmatprep.subr.mxu0 0.0
        %607 = vmatpush1.xpose.msra.mxu0 0.0
        %608 = vmatprep.subr.mxu0 0.0
        %609 = vmatpush1.xpose.msra.mxu0 0.0
        %610 = vmatprep.subr.mxu0 0.0
        %611 = vmatpush1.xpose.msra.mxu0 0.0
        %612 = vmatprep.subr.mxu0 0.0
        %613 = vmatpush1.xpose.msra.mxu0 0.0
        %614 = vmatprep.subr.mxu0 0.0
        %615 = vmatpush1.xpose.msra.mxu0 0.0
        %616 = vmatprep.subr.mxu0 0.0
        %617 = vmatpush1.xpose.msra.mxu0 %v584
        %618 = vmatprep.subr.mxu0 0.0
        %619 = vmatpush2.xpose.msra.mxu0 0.0
        %620 = vmatprep.subr.mxu0 0.0
        %621 = vmatpush2.xpose.msra.mxu0 0.0
        %622 = vmatprep.subr.mxu0 0.0
        %623 = vmatpush2.xpose.msra.mxu0 0.0
        %624 = vmatprep.subr.mxu0 0.0
        %625 = vmatpush2.xpose.msra.mxu0 0.0
        %626 = vmatprep.subr.mxu0 0.0
        %627 = vmatpush2.xpose.msra.mxu0 0.0
        %628 = vmatprep.subr.mxu0 0.0
        %629 = vmatpush2.xpose.msra.mxu0 0.0
        %630 = vmatprep.subr.mxu0 0.0
        %631 = vmatpush2.xpose.msra.mxu0 0.0
        %632 = vmatprep.subr.mxu0 0.0
        %633 = vmatpush2.xpose.msra.mxu0 0.0
        %634 = vmatprep.subr.mxu0 0.0
        %635 = vmatpush2.xpose.msra.mxu0 0.0
        %636 = vmatprep.subr.mxu0 0.0
        %637 = vmatpush2.xpose.msra.mxu0 0.0
        %638 = vmatprep.subr.mxu0 0.0
        %639 = vmatpush2.xpose.msra.mxu0 0.0
        %640 = vmatprep.subr.mxu0 0.0
        %641 = vmatpush2.xpose.msra.mxu0 0.0
        %642 = vmatprep.subr.mxu0 0.0
        %643 = vmatpush2.xpose.msra.mxu0 0.0
        %644 = vmatprep.subr.mxu0 0.0
        %645 = vmatpush2.xpose.msra.mxu0 0.0
        %646 = vmatprep.subr.mxu0 0.0
        %647 = vmatpush2.xpose.msra.mxu0 0.0
        %648 = vmatprep.subr.mxu0 0.0
        %649 = vmatpush2.xpose.msra.mxu0 0.0
        %650 = vmatprep.mubr.f32.mxu0 0.0
        %651 = vmatmul.mubr.f32.gmra.mxu0 %v582
        %v652 = vpop.f32.mrf.mxu0
        %v653 = vadd.f32 0.0, %v652
        %v654 = vpop.f32.mrf.mxu0
        %655 = vdwg.mxu0
        %657 = vrot.lane.b32.xlu0 %v428, 120
        %v658 = vpop.permute.xlu0 %657
        %v659 = vsel %vm504, %v428, 0
        %v661 = vsel %vm504, %v658, 0
        %663 = vmatprep.subr.mxu0 0.0
        %664 = vmatpush1.xpose.msra.mxu0 0.0
        %665 = vmatprep.subr.mxu0 0.0
        %666 = vmatpush1.xpose.msra.mxu0 0.0
        %667 = vmatprep.subr.mxu0 0.0
        %668 = vmatpush1.xpose.msra.mxu0 0.0
        %669 = vmatprep.subr.mxu0 0.0
        %670 = vmatpush1.xpose.msra.mxu0 0.0
        %671 = vmatprep.subr.mxu0 0.0
        %672 = vmatpush1.xpose.msra.mxu0 0.0
        %673 = vmatprep.subr.mxu0 0.0
        %674 = vmatpush1.xpose.msra.mxu0 0.0
        %675 = vmatprep.subr.mxu0 0.0
        %676 = vmatpush1.xpose.msra.mxu0 0.0
        %677 = vmatprep.subr.mxu0 0.0
        %678 = vmatpush1.xpose.msra.mxu0 0.0
        %679 = vmatprep.subr.mxu0 0.0
        %680 = vmatpush1.xpose.msra.mxu0 0.0
        %681 = vmatprep.subr.mxu0 0.0
        %682 = vmatpush1.xpose.msra.mxu0 0.0
        %683 = vmatprep.subr.mxu0 0.0
        %684 = vmatpush1.xpose.msra.mxu0 0.0
        %685 = vmatprep.subr.mxu0 0.0
        %686 = vmatpush1.xpose.msra.mxu0 0.0
        %687 = vmatprep.subr.mxu0 0.0
        %688 = vmatpush1.xpose.msra.mxu0 0.0
        %689 = vmatprep.subr.mxu0 0.0
        %690 = vmatpush1.xpose.msra.mxu0 0.0
        %691 = vmatprep.subr.mxu0 0.0
        %692 = vmatpush1.xpose.msra.mxu0 0.0
        %693 = vmatprep.subr.mxu0 0.0
        %694 = vmatpush1.xpose.msra.mxu0 %v661
        %695 = vmatprep.subr.mxu0 0.0
        %696 = vmatpush2.xpose.msra.mxu0 0.0
        %697 = vmatprep.subr.mxu0 0.0
        %698 = vmatpush2.xpose.msra.mxu0 0.0
        %699 = vmatprep.subr.mxu0 0.0
        %700 = vmatpush2.xpose.msra.mxu0 0.0
        %701 = vmatprep.subr.mxu0 0.0
        %702 = vmatpush2.xpose.msra.mxu0 0.0
        %703 = vmatprep.subr.mxu0 0.0
        %704 = vmatpush2.xpose.msra.mxu0 0.0
        %705 = vmatprep.subr.mxu0 0.0
        %706 = vmatpush2.xpose.msra.mxu0 0.0
        %707 = vmatprep.subr.mxu0 0.0
        %708 = vmatpush2.xpose.msra.mxu0 0.0
        %709 = vmatprep.subr.mxu0 0.0
        %710 = vmatpush2.xpose.msra.mxu0 0.0
        %711 = vmatprep.subr.mxu0 0.0
        %712 = vmatpush2.xpose.msra.mxu0 0.0
        %713 = vmatprep.subr.mxu0 0.0
        %714 = vmatpush2.xpose.msra.mxu0 0.0
        %715 = vmatprep.subr.mxu0 0.0
        %716 = vmatpush2.xpose.msra.mxu0 0.0
        %717 = vmatprep.subr.mxu0 0.0
        %718 = vmatpush2.xpose.msra.mxu0 0.0
        %719 = vmatprep.subr.mxu0 0.0
        %720 = vmatpush2.xpose.msra.mxu0 0.0
        %721 = vmatprep.subr.mxu0 0.0
        %722 = vmatpush2.xpose.msra.mxu0 0.0
        %723 = vmatprep.subr.mxu0 0.0
        %724 = vmatpush2.xpose.msra.mxu0 0.0
        %725 = vmatprep.subr.mxu0 0.0
        %726 = vmatpush2.xpose.msra.mxu0 0.0
        %727 = vmatprep.mubr.f32.mxu0 0.0
        %728 = vmatmul.mubr.f32.gmra.mxu0 %v659
        %v729 = vpop.f32.mrf.mxu0
        %v730 = vadd.f32 0.0, %v729
        %v731 = vpop.f32.mrf.mxu0
        %732 = vdwg.mxu0
        %734 = vrot.lane.b32.xlu0 %v498, 120
        %v735 = vpop.permute.xlu0 %734
        %v736 = vsel %vm504, %v498, 0
        %v738 = vsel %vm504, %v735, 0
        %740 = vmatprep.subr.mxu0 0.0
        %741 = vmatpush1.xpose.msra.mxu0 0.0
        %742 = vmatprep.subr.mxu0 0.0
        %743 = vmatpush1.xpose.msra.mxu0 0.0
        %744 = vmatprep.subr.mxu0 0.0
        %745 = vmatpush1.xpose.msra.mxu0 0.0
        %746 = vmatprep.subr.mxu0 0.0
        %747 = vmatpush1.xpose.msra.mxu0 0.0
        %748 = vmatprep.subr.mxu0 0.0
        %749 = vmatpush1.xpose.msra.mxu0 0.0
        %750 = vmatprep.subr.mxu0 0.0
        %751 = vmatpush1.xpose.msra.mxu0 0.0
        %752 = vmatprep.subr.mxu0 0.0
        %753 = vmatpush1.xpose.msra.mxu0 0.0
        %754 = vmatprep.subr.mxu0 0.0
        %755 = vmatpush1.xpose.msra.mxu0 0.0
        %756 = vmatprep.subr.mxu0 0.0
        %757 = vmatpush1.xpose.msra.mxu0 0.0
        %758 = vmatprep.subr.mxu0 0.0
        %759 = vmatpush1.xpose.msra.mxu0 0.0
        %760 = vmatprep.subr.mxu0 0.0
        %761 = vmatpush1.xpose.msra.mxu0 0.0
        %762 = vmatprep.subr.mxu0 0.0
        %763 = vmatpush1.xpose.msra.mxu0 0.0
        %764 = vmatprep.subr.mxu0 0.0
        %765 = vmatpush1.xpose.msra.mxu0 0.0
        %766 = vmatprep.subr.mxu0 0.0
        %767 = vmatpush1.xpose.msra.mxu0 0.0
        %768 = vmatprep.subr.mxu0 0.0
        %769 = vmatpush1.xpose.msra.mxu0 0.0
        %770 = vmatprep.subr.mxu0 0.0
        %771 = vmatpush1.xpose.msra.mxu0 %v738
        %772 = vmatprep.subr.mxu0 0.0
        %773 = vmatpush2.xpose.msra.mxu0 0.0
        %774 = vmatprep.subr.mxu0 0.0
        %775 = vmatpush2.xpose.msra.mxu0 0.0
        %776 = vmatprep.subr.mxu0 0.0
        %777 = vmatpush2.xpose.msra.mxu0 0.0
        %778 = vmatprep.subr.mxu0 0.0
        %779 = vmatpush2.xpose.msra.mxu0 0.0
        %780 = vmatprep.subr.mxu0 0.0
        %781 = vmatpush2.xpose.msra.mxu0 0.0
        %782 = vmatprep.subr.mxu0 0.0
        %783 = vmatpush2.xpose.msra.mxu0 0.0
        %784 = vmatprep.subr.mxu0 0.0
        %785 = vmatpush2.xpose.msra.mxu0 0.0
        %786 = vmatprep.subr.mxu0 0.0
        %787 = vmatpush2.xpose.msra.mxu0 0.0
        %788 = vmatprep.subr.mxu0 0.0
        %789 = vmatpush2.xpose.msra.mxu0 0.0
        %790 = vmatprep.subr.mxu0 0.0
        %791 = vmatpush2.xpose.msra.mxu0 0.0
        %792 = vmatprep.subr.mxu0 0.0
        %793 = vmatpush2.xpose.msra.mxu0 0.0
        %794 = vmatprep.subr.mxu0 0.0
        %795 = vmatpush2.xpose.msra.mxu0 0.0
        %796 = vmatprep.subr.mxu0 0.0
        %797 = vmatpush2.xpose.msra.mxu0 0.0
        %798 = vmatprep.subr.mxu0 0.0
        %799 = vmatpush2.xpose.msra.mxu0 0.0
        %800 = vmatprep.subr.mxu0 0.0
        %801 = vmatpush2.xpose.msra.mxu0 0.0
        %802 = vmatprep.subr.mxu0 0.0
        %803 = vmatpush2.xpose.msra.mxu0 0.0
        %804 = vmatprep.mubr.f32.mxu0 0.0
        %805 = vmatmul.mubr.f32.gmra.mxu0 %v736
        %v806 = vpop.f32.mrf.mxu0
        %v807 = vadd.f32 0.0, %v806
        %v808 = vpop.f32.mrf.mxu0
        %809 = vdwg.mxu0
        %v810 = vmul.f32 %v576, 0.35355338
        %v811 = vmul.f32 %v653, 0.35355338
        %v812 = vmul.f32 %v730, 0.35355338
        %v813 = vmul.f32 %v807, 0.35355338
        %v814 = vsel %vm504, %v810, -inf
        %815 = vmax.xlane.f32.xlu0 %v814
        %v816 = vpop.xlane.xlu0 %815
        %v817 = vsel %vm504, %v811, -inf
        %818 = vmax.xlane.f32.xlu0 %v817
        %v819 = vpop.xlane.xlu0 %818
        %v820 = vsel %vm504, %v812, -inf
        %821 = vmax.xlane.f32.xlu0 %v820
        %v822 = vpop.xlane.xlu0 %821
        %v823 = vsel %vm504, %v813, -inf
        %824 = vmax.xlane.f32.xlu0 %v823
        %v825 = vpop.xlane.xlu0 %824
        %v826 = vsub.f32 %v810, %v816
        %v827 = vsub.f32 %v811, %v819
        %v828 = vsub.f32 %v812, %v822
        %v829 = vsub.f32 %v813, %v825
        %v830 = vmul.f32 %v826, 1.442695
        %v831 = vpow.pop %v830
        %v832 = vmul.f32 %v827, 1.442695
        %v833 = vpow.pop %v832
        %v834 = vmul.f32 %v828, 1.442695
        %v835 = vpow.pop %v834
        %v836 = vmul.f32 %v829, 1.442695
        %v837 = vpow.pop %v836
        %v838 = vsel %vm504, %v831, 0.0
        %839 = vadd.xlane.f32.xlu0 %v838
        %v840 = vpop.xlane.xlu0 %839
        %v841 = vsel %vm504, %v833, 0.0
        %842 = vadd.xlane.f32.xlu0 %v841
        %v843 = vpop.xlane.xlu0 %842
        %v844 = vsel %vm504, %v835, 0.0
        %845 = vadd.xlane.f32.xlu0 %v844
        %v846 = vpop.xlane.xlu0 %845
        %v847 = vsel %vm504, %v837, 0.0
        %848 = vadd.xlane.f32.xlu0 %v847
        %v849 = vpop.xlane.xlu0 %848
        %v850 = vrcp.pop %v840
        %v851 = vmul.f32 %v831, %v850
        %v852 = vrcp.pop %v843
        %v853 = vmul.f32 %v833, %v852
        %v854 = vrcp.pop %v846
        %v855 = vmul.f32 %v835, %v854
        %v856 = vrcp.pop %v849
        %v857 = vmul.f32 %v837, %v856
        %858 = vrot.lane.b32.xlu0 %v288, 112
        %v859 = vpop.permute.xlu0 %858
        %v862 = vsel %vm504, %v851, 0
        %864 = vmatprep.subr.mxu0 0.0
        %865 = vmatpush1.msra.mxu0 0.0
        %866 = vmatprep.subr.mxu0 0.0
        %867 = vmatpush1.msra.mxu0 0.0
        %868 = vmatprep.subr.mxu0 0.0
        %869 = vmatpush1.msra.mxu0 0.0
        %870 = vmatprep.subr.mxu0 0.0
        %871 = vmatpush1.msra.mxu0 0.0
        %872 = vmatprep.subr.mxu0 0.0
        %873 = vmatpush1.msra.mxu0 0.0
        %874 = vmatprep.subr.mxu0 0.0
        %875 = vmatpush1.msra.mxu0 0.0
        %876 = vmatprep.subr.mxu0 0.0
        %877 = vmatpush1.msra.mxu0 0.0
        %878 = vmatprep.subr.mxu0 0.0
        %879 = vmatpush1.msra.mxu0 0.0
        %880 = vmatprep.subr.mxu0 0.0
        %881 = vmatpush1.msra.mxu0 0.0
        %882 = vmatprep.subr.mxu0 0.0
        %883 = vmatpush1.msra.mxu0 0.0
        %884 = vmatprep.subr.mxu0 0.0
        %885 = vmatpush1.msra.mxu0 0.0
        %886 = vmatprep.subr.mxu0 0.0
        %887 = vmatpush1.msra.mxu0 0.0
        %888 = vmatprep.subr.mxu0 0.0
        %889 = vmatpush1.msra.mxu0 0.0
        %890 = vmatprep.subr.mxu0 0.0
        %891 = vmatpush1.msra.mxu0 0.0
        %892 = vmatprep.subr.mxu0 0.0
        %893 = vmatpush1.msra.mxu0 0.0
        %894 = vmatprep.subr.mxu0 0.0
        %895 = vmatpush1.msra.mxu0 %v859
        %896 = vmatprep.subr.mxu0 0.0
        %897 = vmatpush2.msra.mxu0 0.0
        %898 = vmatprep.subr.mxu0 0.0
        %899 = vmatpush2.msra.mxu0 0.0
        %900 = vmatprep.subr.mxu0 0.0
        %901 = vmatpush2.msra.mxu0 0.0
        %902 = vmatprep.subr.mxu0 0.0
        %903 = vmatpush2.msra.mxu0 0.0
        %904 = vmatprep.subr.mxu0 0.0
        %905 = vmatpush2.msra.mxu0 0.0
        %906 = vmatprep.subr.mxu0 0.0
        %907 = vmatpush2.msra.mxu0 0.0
        %908 = vmatprep.subr.mxu0 0.0
        %909 = vmatpush2.msra.mxu0 0.0
        %910 = vmatprep.subr.mxu0 0.0
        %911 = vmatpush2.msra.mxu0 0.0
        %912 = vmatprep.subr.mxu0 0.0
        %913 = vmatpush2.msra.mxu0 0.0
        %914 = vmatprep.subr.mxu0 0.0
        %915 = vmatpush2.msra.mxu0 0.0
        %916 = vmatprep.subr.mxu0 0.0
        %917 = vmatpush2.msra.mxu0 0.0
        %918 = vmatprep.subr.mxu0 0.0
        %919 = vmatpush2.msra.mxu0 0.0
        %920 = vmatprep.subr.mxu0 0.0
        %921 = vmatpush2.msra.mxu0 0.0
        %922 = vmatprep.subr.mxu0 0.0
        %923 = vmatpush2.msra.mxu0 0.0
        %924 = vmatprep.subr.mxu0 0.0
        %925 = vmatpush2.msra.mxu0 0.0
        %926 = vmatprep.subr.mxu0 0.0
        %927 = vmatpush2.msra.mxu0 0.0
        %928 = vmatprep.mubr.f32.mxu0 0.0
        %929 = vmatmul.mubr.f32.gmra.mxu0 %v862
        %v930 = vpop.f32.mrf.mxu0
        %v931 = vadd.f32 0.0, %v930
        %v932 = vpop.f32.mrf.mxu0
        %933 = vdwg.mxu0
        %934 = vrot.lane.b32.xlu0 %v358, 112
        %v935 = vpop.permute.xlu0 %934
        %v938 = vsel %vm504, %v853, 0
        %940 = vmatprep.subr.mxu0 0.0
        %941 = vmatpush1.msra.mxu0 0.0
        %942 = vmatprep.subr.mxu0 0.0
        %943 = vmatpush1.msra.mxu0 0.0
        %944 = vmatprep.subr.mxu0 0.0
        %945 = vmatpush1.msra.mxu0 0.0
        %946 = vmatprep.subr.mxu0 0.0
        %947 = vmatpush1.msra.mxu0 0.0
        %948 = vmatprep.subr.mxu0 0.0
        %949 = vmatpush1.msra.mxu0 0.0
        %950 = vmatprep.subr.mxu0 0.0
        %951 = vmatpush1.msra.mxu0 0.0
        %952 = vmatprep.subr.mxu0 0.0
        %953 = vmatpush1.msra.mxu0 0.0
        %954 = vmatprep.subr.mxu0 0.0
        %955 = vmatpush1.msra.mxu0 0.0
        %956 = vmatprep.subr.mxu0 0.0
        %957 = vmatpush1.msra.mxu0 0.0
        %958 = vmatprep.subr.mxu0 0.0
        %959 = vmatpush1.msra.mxu0 0.0
        %960 = vmatprep.subr.mxu0 0.0
        %961 = vmatpush1.msra.mxu0 0.0
        %962 = vmatprep.subr.mxu0 0.0
        %963 = vmatpush1.msra.mxu0 0.0
        %964 = vmatprep.subr.mxu0 0.0
        %965 = vmatpush1.msra.mxu0 0.0
        %966 = vmatprep.subr.mxu0 0.0
        %967 = vmatpush1.msra.mxu0 0.0
        %968 = vmatprep.subr.mxu0 0.0
        %969 = vmatpush1.msra.mxu0 0.0
        %970 = vmatprep.subr.mxu0 0.0
        %971 = vmatpush1.msra.mxu0 %v935
        %972 = vmatprep.subr.mxu0 0.0
        %973 = vmatpush2.msra.mxu0 0.0
        %974 = vmatprep.subr.mxu0 0.0
        %975 = vmatpush2.msra.mxu0 0.0
        %976 = vmatprep.subr.mxu0 0.0
        %977 = vmatpush2.msra.mxu0 0.0
        %978 = vmatprep.subr.mxu0 0.0
        %979 = vmatpush2.msra.mxu0 0.0
        %980 = vmatprep.subr.mxu0 0.0
        %981 = vmatpush2.msra.mxu0 0.0
        %982 = vmatprep.subr.mxu0 0.0
        %983 = vmatpush2.msra.mxu0 0.0
        %984 = vmatprep.subr.mxu0 0.0
        %985 = vmatpush2.msra.mxu0 0.0
        %986 = vmatprep.subr.mxu0 0.0
        %987 = vmatpush2.msra.mxu0 0.0
        %988 = vmatprep.subr.mxu0 0.0
        %989 = vmatpush2.msra.mxu0 0.0
        %990 = vmatprep.subr.mxu0 0.0
        %991 = vmatpush2.msra.mxu0 0.0
        %992 = vmatprep.subr.mxu0 0.0
        %993 = vmatpush2.msra.mxu0 0.0
        %994 = vmatprep.subr.mxu0 0.0
        %995 = vmatpush2.msra.mxu0 0.0
        %996 = vmatprep.subr.mxu0 0.0
        %997 = vmatpush2.msra.mxu0 0.0
        %998 = vmatprep.subr.mxu0 0.0
        %999 = vmatpush2.msra.mxu0 0.0
        %1000 = vmatprep.subr.mxu0 0.0
        %1001 = vmatpush2.msra.mxu0 0.0
        %1002 = vmatprep.subr.mxu0 0.0
        %1003 = vmatpush2.msra.mxu0 0.0
        %1004 = vmatprep.mubr.f32.mxu0 0.0
        %1005 = vmatmul.mubr.f32.gmra.mxu0 %v938
        %v1006 = vpop.f32.mrf.mxu0
        %v1007 = vadd.f32 0.0, %v1006
        %v1008 = vpop.f32.mrf.mxu0
        %1009 = vdwg.mxu0
        %1010 = vrot.lane.b32.xlu0 %v428, 112
        %v1011 = vpop.permute.xlu0 %1010
        %v1014 = vsel %vm504, %v855, 0
        %1016 = vmatprep.subr.mxu0 0.0
        %1017 = vmatpush1.msra.mxu0 0.0
        %1018 = vmatprep.subr.mxu0 0.0
        %1019 = vmatpush1.msra.mxu0 0.0
        %1020 = vmatprep.subr.mxu0 0.0
        %1021 = vmatpush1.msra.mxu0 0.0
        %1022 = vmatprep.subr.mxu0 0.0
        %1023 = vmatpush1.msra.mxu0 0.0
        %1024 = vmatprep.subr.mxu0 0.0
        %1025 = vmatpush1.msra.mxu0 0.0
        %1026 = vmatprep.subr.mxu0 0.0
        %1027 = vmatpush1.msra.mxu0 0.0
        %1028 = vmatprep.subr.mxu0 0.0
        %1029 = vmatpush1.msra.mxu0 0.0
        %1030 = vmatprep.subr.mxu0 0.0
        %1031 = vmatpush1.msra.mxu0 0.0
        %1032 = vmatprep.subr.mxu0 0.0
        %1033 = vmatpush1.msra.mxu0 0.0
        %1034 = vmatprep.subr.mxu0 0.0
        %1035 = vmatpush1.msra.mxu0 0.0
        %1036 = vmatprep.subr.mxu0 0.0
        %1037 = vmatpush1.msra.mxu0 0.0
        %1038 = vmatprep.subr.mxu0 0.0
        %1039 = vmatpush1.msra.mxu0 0.0
        %1040 = vmatprep.subr.mxu0 0.0
        %1041 = vmatpush1.msra.mxu0 0.0
        %1042 = vmatprep.subr.mxu0 0.0
        %1043 = vmatpush1.msra.mxu0 0.0
        %1044 = vmatprep.subr.mxu0 0.0
        %1045 = vmatpush1.msra.mxu0 0.0
        %1046 = vmatprep.subr.mxu0 0.0
        %1047 = vmatpush1.msra.mxu0 %v1011
        %1048 = vmatprep.subr.mxu0 0.0
        %1049 = vmatpush2.msra.mxu0 0.0
        %1050 = vmatprep.subr.mxu0 0.0
        %1051 = vmatpush2.msra.mxu0 0.0
        %1052 = vmatprep.subr.mxu0 0.0
        %1053 = vmatpush2.msra.mxu0 0.0
        %1054 = vmatprep.subr.mxu0 0.0
        %1055 = vmatpush2.msra.mxu0 0.0
        %1056 = vmatprep.subr.mxu0 0.0
        %1057 = vmatpush2.msra.mxu0 0.0
        %1058 = vmatprep.subr.mxu0 0.0
        %1059 = vmatpush2.msra.mxu0 0.0
        %1060 = vmatprep.subr.mxu0 0.0
        %1061 = vmatpush2.msra.mxu0 0.0
        %1062 = vmatprep.subr.mxu0 0.0
        %1063 = vmatpush2.msra.mxu0 0.0
        %1064 = vmatprep.subr.mxu0 0.0
        %1065 = vmatpush2.msra.mxu0 0.0
        %1066 = vmatprep.subr.mxu0 0.0
        %1067 = vmatpush2.msra.mxu0 0.0
        %1068 = vmatprep.subr.mxu0 0.0
        %1069 = vmatpush2.msra.mxu0 0.0
        %1070 = vmatprep.subr.mxu0 0.0
        %1071 = vmatpush2.msra.mxu0 0.0
        %1072 = vmatprep.subr.mxu0 0.0
        %1073 = vmatpush2.msra.mxu0 0.0
        %1074 = vmatprep.subr.mxu0 0.0
        %1075 = vmatpush2.msra.mxu0 0.0
        %1076 = vmatprep.subr.mxu0 0.0
        %1077 = vmatpush2.msra.mxu0 0.0
        %1078 = vmatprep.subr.mxu0 0.0
        %1079 = vmatpush2.msra.mxu0 0.0
        %1080 = vmatprep.mubr.f32.mxu0 0.0
        %1081 = vmatmul.mubr.f32.gmra.mxu0 %v1014
        %v1082 = vpop.f32.mrf.mxu0
        %v1083 = vadd.f32 0.0, %v1082
        %v1084 = vpop.f32.mrf.mxu0
        %1085 = vdwg.mxu0
        %1086 = vrot.lane.b32.xlu0 %v498, 112
        %v1087 = vpop.permute.xlu0 %1086
        %v1090 = vsel %vm504, %v857, 0
        %1092 = vmatprep.subr.mxu0 0.0
        %1093 = vmatpush1.msra.mxu0 0.0
        %1094 = vmatprep.subr.mxu0 0.0
        %1095 = vmatpush1.msra.mxu0 0.0
        %1096 = vmatprep.subr.mxu0 0.0
        %1097 = vmatpush1.msra.mxu0 0.0
        %1098 = vmatprep.subr.mxu0 0.0
        %1099 = vmatpush1.msra.mxu0 0.0
        %1100 = vmatprep.subr.mxu0 0.0
        %1101 = vmatpush1.msra.mxu0 0.0
        %1102 = vmatprep.subr.mxu0 0.0
        %1103 = vmatpush1.msra.mxu0 0.0
        %1104 = vmatprep.subr.mxu0 0.0
        %1105 = vmatpush1.msra.mxu0 0.0
        %1106 = vmatprep.subr.mxu0 0.0
        %1107 = vmatpush1.msra.mxu0 0.0
        %1108 = vmatprep.subr.mxu0 0.0
        %1109 = vmatpush1.msra.mxu0 0.0
        %1110 = vmatprep.subr.mxu0 0.0
        %1111 = vmatpush1.msra.mxu0 0.0
        %1112 = vmatprep.subr.mxu0 0.0
        %1113 = vmatpush1.msra.mxu0 0.0
        %1114 = vmatprep.subr.mxu0 0.0
        %1115 = vmatpush1.msra.mxu0 0.0
        %1116 = vmatprep.subr.mxu0 0.0
        %1117 = vmatpush1.msra.mxu0 0.0
        %1118 = vmatprep.subr.mxu0 0.0
        %1119 = vmatpush1.msra.mxu0 0.0
        %1120 = vmatprep.subr.mxu0 0.0
        %1121 = vmatpush1.msra.mxu0 0.0
        %1122 = vmatprep.subr.mxu0 0.0
        %1123 = vmatpush1.msra.mxu0 %v1087
        %1124 = vmatprep.subr.mxu0 0.0
        %1125 = vmatpush2.msra.mxu0 0.0
        %1126 = vmatprep.subr.mxu0 0.0
        %1127 = vmatpush2.msra.mxu0 0.0
        %1128 = vmatprep.subr.mxu0 0.0
        %1129 = vmatpush2.msra.mxu0 0.0
        %1130 = vmatprep.subr.mxu0 0.0
        %1131 = vmatpush2.msra.mxu0 0.0
        %1132 = vmatprep.subr.mxu0 0.0
        %1133 = vmatpush2.msra.mxu0 0.0
        %1134 = vmatprep.subr.mxu0 0.0
        %1135 = vmatpush2.msra.mxu0 0.0
        %1136 = vmatprep.subr.mxu0 0.0
        %1137 = vmatpush2.msra.mxu0 0.0
        %1138 = vmatprep.subr.mxu0 0.0
        %1139 = vmatpush2.msra.mxu0 0.0
        %1140 = vmatprep.subr.mxu0 0.0
        %1141 = vmatpush2.msra.mxu0 0.0
        %1142 = vmatprep.subr.mxu0 0.0
        %1143 = vmatpush2.msra.mxu0 0.0
        %1144 = vmatprep.subr.mxu0 0.0
        %1145 = vmatpush2.msra.mxu0 0.0
        %1146 = vmatprep.subr.mxu0 0.0
        %1147 = vmatpush2.msra.mxu0 0.0
        %1148 = vmatprep.subr.mxu0 0.0
        %1149 = vmatpush2.msra.mxu0 0.0
        %1150 = vmatprep.subr.mxu0 0.0
        %1151 = vmatpush2.msra.mxu0 0.0
        %1152 = vmatprep.subr.mxu0 0.0
        %1153 = vmatpush2.msra.mxu0 0.0
        %1154 = vmatprep.subr.mxu0 0.0
        %1155 = vmatpush2.msra.mxu0 0.0
        %1156 = vmatprep.mubr.f32.mxu0 0.0
        %1157 = vmatmul.mubr.f32.gmra.mxu0 %v1090
        %v1158 = vpop.f32.mrf.mxu0
        %v1159 = vadd.f32 0.0, %v1158
        %v1160 = vpop.f32.mrf.mxu0
        %1161 = vdwg.mxu0
        %1163 = vrot.lane.b32.xlu0 %v1007, 8
        %v1164 = vpop.permute.xlu0 %1163
        %1167 = vrot.lane.b32.xlu0 %v1083, 16
        %v1168 = vpop.permute.xlu0 %1167
        %1171 = vrot.lane.b32.xlu0 %v1159, 24
        %v1172 = vpop.permute.xlu0 %1171
        %v1174 = vsel %vm504, %v931, %v1164
        %vm1175 = vcmask 130048
        %v1176 = vsel %vm1175, %v1174, %v1168
        %vm1177 = vcmask 195584
        %v1178 = vsel %vm1177, %v1176, %v1172
        %v1179 = vlaneseq
        %v1180 = vshrl.u32 %v1179, 7
        %v1181 = vsub.s32 0, %v1180
        %v1182 = vrot.slane %v198, %v1181
        %v1184 = vsel %vm217, %v1178, 0
        %1186 = vmatprep.subr.mxu0 0.0
        %1187 = vmatpush1.msra.mxu0 0.0
        %1188 = vmatprep.subr.mxu0 0.0
        %1189 = vmatpush1.msra.mxu0 0.0
        %1190 = vmatprep.subr.mxu0 0.0
        %1191 = vmatpush1.msra.mxu0 0.0
        %1192 = vmatprep.subr.mxu0 0.0
        %1193 = vmatpush1.msra.mxu0 0.0
        %1194 = vmatprep.subr.mxu0 0.0
        %1195 = vmatpush1.msra.mxu0 0.0
        %1196 = vmatprep.subr.mxu0 0.0
        %1197 = vmatpush1.msra.mxu0 0.0
        %1198 = vmatprep.subr.mxu0 0.0
        %1199 = vmatpush1.msra.mxu0 0.0
        %1200 = vmatprep.subr.mxu0 0.0
        %1201 = vmatpush1.msra.mxu0 0.0
        %1202 = vmatprep.subr.mxu0 0.0
        %1203 = vmatpush1.msra.mxu0 0.0
        %1204 = vmatprep.subr.mxu0 0.0
        %1205 = vmatpush1.msra.mxu0 0.0
        %1206 = vmatprep.subr.mxu0 0.0
        %1207 = vmatpush1.msra.mxu0 0.0
        %1208 = vmatprep.subr.mxu0 0.0
        %1209 = vmatpush1.msra.mxu0 0.0
        %1210 = vmatprep.subr.mxu0 0.0
        %1211 = vmatpush1.msra.mxu0 %v197
        %1212 = vmatprep.subr.mxu0 0.0
        %1213 = vmatpush1.msra.mxu0 %v196
        %1214 = vmatprep.subr.mxu0 0.0
        %1215 = vmatpush1.msra.mxu0 %v195
        %1216 = vmatprep.subr.mxu0 0.0
        %1217 = vmatpush1.msra.mxu0 %v194
        %1218 = vmatprep.subr.mxu0 0.0
        %1219 = vmatpush2.msra.mxu0 0.0
        %1220 = vmatprep.subr.mxu0 0.0
        %1221 = vmatpush2.msra.mxu0 0.0
        %1222 = vmatprep.subr.mxu0 0.0
        %1223 = vmatpush2.msra.mxu0 0.0
        %1224 = vmatprep.subr.mxu0 0.0
        %1225 = vmatpush2.msra.mxu0 0.0
        %1226 = vmatprep.subr.mxu0 0.0
        %1227 = vmatpush2.msra.mxu0 0.0
        %1228 = vmatprep.subr.mxu0 0.0
        %1229 = vmatpush2.msra.mxu0 0.0
        %1230 = vmatprep.subr.mxu0 0.0
        %1231 = vmatpush2.msra.mxu0 0.0
        %1232 = vmatprep.subr.mxu0 0.0
        %1233 = vmatpush2.msra.mxu0 0.0
        %1234 = vmatprep.subr.mxu0 0.0
        %1235 = vmatpush2.msra.mxu0 0.0
        %1236 = vmatprep.subr.mxu0 0.0
        %1237 = vmatpush2.msra.mxu0 0.0
        %1238 = vmatprep.subr.mxu0 0.0
        %1239 = vmatpush2.msra.mxu0 0.0
        %1240 = vmatprep.subr.mxu0 0.0
        %1241 = vmatpush2.msra.mxu0 0.0
        %1242 = vmatprep.subr.mxu0 0.0
        %1243 = vmatpush2.msra.mxu0 0.0
        %1244 = vmatprep.subr.mxu0 0.0
        %1245 = vmatpush2.msra.mxu0 0.0
        %1246 = vmatprep.subr.mxu0 0.0
        %1247 = vmatpush2.msra.mxu0 0.0
        %1248 = vmatprep.subr.mxu0 0.0
        %1249 = vmatpush2.msra.mxu0 0.0
        %1250 = vmatprep.mubr.f32.mxu0 0.0
        %1251 = vmatmul.mubr.f32.gmra.mxu0 %v1184
        %v1252 = vpop.f32.mrf.mxu0
        %v1253 = vadd.f32 %v1182, %v1252
        %v1254 = vpop.f32.mrf.mxu0
        %1255 = vdwg.mxu0
        %v1256 = vadd.f32 %v173, %v1253
        %v1257 = vsel %vm217, %v1256, 0.0
        %1258 = vadd.xlane.f32.xlu0 %v1257
        %v1259 = vpop.xlane.xlu0 %1258
        %v1260 = vrcp.pop 32.0
        %v1261 = vmul.f32 %v1259, %v1260
        %v1262 = vsub.f32 %v1256, %v1261
        %v1263 = vmul.f32 %v1262, %v1262
        %v1264 = vsel %vm217, %v1263, 0.0
        %1265 = vadd.xlane.f32.xlu0 %v1264
        %v1266 = vpop.xlane.xlu0 %1265
        %v1267 = vmul.f32 %v1266, %v1260
        %v1268 = vadd.f32 %v1267, 1e-05
        %v1269 = vrsqrt.pop %v1268
        %v1270 = vmul.f32 %v1262, %v1269
        %v1271 = vlaneseq
        %v1272 = vshrl.u32 %v1271, 7
        %v1273 = vsub.s32 0, %v1272
        %v1274 = vrot.slane %v199, %v1273
        %v1275 = vmul.f32 %v1270, %v1274
        %v1276 = vlaneseq
        %v1277 = vshrl.u32 %v1276, 7
        %v1278 = vsub.s32 0, %v1277
        %v1279 = vrot.slane %v200, %v1278
        %v1280 = vadd.f32 %v1275, %v1279
        %v1281 = vlaneseq
        %v1282 = vshrl.u32 %v1281, 7
        %v1283 = vsub.s32 0, %v1282
        %v1284 = vrot.slane %v205, %v1283
        %v1286 = vsel %vm217, %v1280, 0
        %1288 = vmatprep.subr.mxu0 0.0
        %1289 = vmatpush1.msra.mxu0 0.0
        %1290 = vmatprep.subr.mxu0 0.0
        %1291 = vmatpush1.msra.mxu0 0.0
        %1292 = vmatprep.subr.mxu0 0.0
        %1293 = vmatpush1.msra.mxu0 0.0
        %1294 = vmatprep.subr.mxu0 0.0
        %1295 = vmatpush1.msra.mxu0 0.0
        %1296 = vmatprep.subr.mxu0 0.0
        %1297 = vmatpush1.msra.mxu0 0.0
        %1298 = vmatprep.subr.mxu0 0.0
        %1299 = vmatpush1.msra.mxu0 0.0
        %1300 = vmatprep.subr.mxu0 0.0
        %1301 = vmatpush1.msra.mxu0 0.0
        %1302 = vmatprep.subr.mxu0 0.0
        %1303 = vmatpush1.msra.mxu0 0.0
        %1304 = vmatprep.subr.mxu0 0.0
        %1305 = vmatpush1.msra.mxu0 0.0
        %1306 = vmatprep.subr.mxu0 0.0
        %1307 = vmatpush1.msra.mxu0 0.0
        %1308 = vmatprep.subr.mxu0 0.0
        %1309 = vmatpush1.msra.mxu0 0.0
        %1310 = vmatprep.subr.mxu0 0.0
        %1311 = vmatpush1.msra.mxu0 0.0
        %1312 = vmatprep.subr.mxu0 0.0
        %1313 = vmatpush1.msra.mxu0 %v204
        %1314 = vmatprep.subr.mxu0 0.0
        %1315 = vmatpush1.msra.mxu0 %v203
        %1316 = vmatprep.subr.mxu0 0.0
        %1317 = vmatpush1.msra.mxu0 %v202
        %1318 = vmatprep.subr.mxu0 0.0
        %1319 = vmatpush1.msra.mxu0 %v201
        %1320 = vmatprep.subr.mxu0 0.0
        %1321 = vmatpush2.msra.mxu0 0.0
        %1322 = vmatprep.subr.mxu0 0.0
        %1323 = vmatpush2.msra.mxu0 0.0
        %1324 = vmatprep.subr.mxu0 0.0
        %1325 = vmatpush2.msra.mxu0 0.0
        %1326 = vmatprep.subr.mxu0 0.0
        %1327 = vmatpush2.msra.mxu0 0.0
        %1328 = vmatprep.subr.mxu0 0.0
        %1329 = vmatpush2.msra.mxu0 0.0
        %1330 = vmatprep.subr.mxu0 0.0
        %1331 = vmatpush2.msra.mxu0 0.0
        %1332 = vmatprep.subr.mxu0 0.0
        %1333 = vmatpush2.msra.mxu0 0.0
        %1334 = vmatprep.subr.mxu0 0.0
        %1335 = vmatpush2.msra.mxu0 0.0
        %1336 = vmatprep.subr.mxu0 0.0
        %1337 = vmatpush2.msra.mxu0 0.0
        %1338 = vmatprep.subr.mxu0 0.0
        %1339 = vmatpush2.msra.mxu0 0.0
        %1340 = vmatprep.subr.mxu0 0.0
        %1341 = vmatpush2.msra.mxu0 0.0
        %1342 = vmatprep.subr.mxu0 0.0
        %1343 = vmatpush2.msra.mxu0 0.0
        %1344 = vmatprep.subr.mxu0 0.0
        %1345 = vmatpush2.msra.mxu0 0.0
        %1346 = vmatprep.subr.mxu0 0.0
        %1347 = vmatpush2.msra.mxu0 0.0
        %1348 = vmatprep.subr.mxu0 0.0
        %1349 = vmatpush2.msra.mxu0 0.0
        %1350 = vmatprep.subr.mxu0 0.0
        %1351 = vmatpush2.msra.mxu0 0.0
        %1352 = vmatprep.mubr.f32.mxu0 0.0
        %1353 = vmatmul.mubr.f32.gmra.mxu0 %v1286
        %v1354 = vpop.f32.mrf.mxu0
        %v1355 = vadd.f32 %v1284, %v1354
        %v1356 = vpop.f32.mrf.mxu0
        %1357 = vdwg.mxu0
        %v1358 = vmul.f32 %v1355, 0.5
        %v1359 = vmul.f32 %v1355, 0.70710677
        %v1360 = vand.u32 2147483647, %v1359
        %v1361 = vmul.f32 %v1360, 0.3275911
        %v1362 = vadd.f32 %v1361, 1.0
        %v1363 = vrcp.pop %v1362
        %v1364 = vmul.f32 1.0, %v1363
        %v1365 = vmul.f32 %v1364, 1.0614054
        %v1366 = vadd.f32 %v1365, -1.4531521
        %v1367 = vmul.f32 %v1366, %v1364
        %v1368 = vadd.f32 %v1367, 1.4214138
        %v1369 = vmul.f32 %v1368, %v1364
        %v1370 = vadd.f32 %v1369, -0.28449672
        %v1371 = vmul.f32 %v1370, %v1364
        %v1372 = vadd.f32 %v1371, 0.2548296
        %v1373 = vmul.f32 %v1372, %v1364
        %v1374 = vsub.f32 0.0, %v1360
        %v1375 = vmul.f32 %v1374, %v1360
        %v1376 = vmul.f32 %v1375, 1.442695
        %v1377 = vpow.pop %v1376
        %v1378 = vmul.f32 %v1373, %v1377
        %v1379 = vsub.f32 1.0, %v1378
        %vm1380 = vcmp.lt.f32.partialorder %v1359, 0.0
        %v1381 = vsub.f32 0.0, %v1379
        %v1382 = vsel %vm1380, %v1381, %v1379
        %v1383 = vadd.f32 %v1382, 1.0
        %v1384 = vmul.f32 %v1358, %v1383
        %v1385 = vlaneseq
        %v1386 = vshrl.u32 %v1385, 7
        %v1387 = vsub.s32 0, %v1386
        %v1388 = vrot.slane %v214, %v1387
        %vm1389 = vcmask 523264
        %v1391 = vsel %vm1389, %v1384, 0
        %1393 = vmatprep.subr.mxu0 0.0
        %1394 = vmatpush1.msra.mxu0 0.0
        %1395 = vmatprep.subr.mxu0 0.0
        %1396 = vmatpush1.msra.mxu0 0.0
        %1397 = vmatprep.subr.mxu0 0.0
        %1398 = vmatpush1.msra.mxu0 0.0
        %1399 = vmatprep.subr.mxu0 0.0
        %1400 = vmatpush1.msra.mxu0 0.0
        %1401 = vmatprep.subr.mxu0 0.0
        %1402 = vmatpush1.msra.mxu0 0.0
        %1403 = vmatprep.subr.mxu0 0.0
        %1404 = vmatpush1.msra.mxu0 0.0
        %1405 = vmatprep.subr.mxu0 0.0
        %1406 = vmatpush1.msra.mxu0 0.0
        %1407 = vmatprep.subr.mxu0 0.0
        %1408 = vmatpush1.msra.mxu0 0.0
        %1409 = vmatprep.subr.mxu0 0.0
        %1410 = vmatpush1.msra.mxu0 %v213
        %1411 = vmatprep.subr.mxu0 0.0
        %1412 = vmatpush1.msra.mxu0 %v212
        %1413 = vmatprep.subr.mxu0 0.0
        %1414 = vmatpush1.msra.mxu0 %v211
        %1415 = vmatprep.subr.mxu0 0.0
        %1416 = vmatpush1.msra.mxu0 %v210
        %1417 = vmatprep.subr.mxu0 0.0
        %1418 = vmatpush1.msra.mxu0 %v209
        %1419 = vmatprep.subr.mxu0 0.0
        %1420 = vmatpush1.msra.mxu0 %v208
        %1421 = vmatprep.subr.mxu0 0.0
        %1422 = vmatpush1.msra.mxu0 %v207
        %1423 = vmatprep.subr.mxu0 0.0
        %1424 = vmatpush1.msra.mxu0 %v206
        %1425 = vmatprep.subr.mxu0 0.0
        %1426 = vmatpush2.msra.mxu0 0.0
        %1427 = vmatprep.subr.mxu0 0.0
        %1428 = vmatpush2.msra.mxu0 0.0
        %1429 = vmatprep.subr.mxu0 0.0
        %1430 = vmatpush2.msra.mxu0 0.0
        %1431 = vmatprep.subr.mxu0 0.0
        %1432 = vmatpush2.msra.mxu0 0.0
        %1433 = vmatprep.subr.mxu0 0.0
        %1434 = vmatpush2.msra.mxu0 0.0
        %1435 = vmatprep.subr.mxu0 0.0
        %1436 = vmatpush2.msra.mxu0 0.0
        %1437 = vmatprep.subr.mxu0 0.0
        %1438 = vmatpush2.msra.mxu0 0.0
        %1439 = vmatprep.subr.mxu0 0.0
        %1440 = vmatpush2.msra.mxu0 0.0
        %1441 = vmatprep.subr.mxu0 0.0
        %1442 = vmatpush2.msra.mxu0 0.0
        %1443 = vmatprep.subr.mxu0 0.0
        %1444 = vmatpush2.msra.mxu0 0.0
        %1445 = vmatprep.subr.mxu0 0.0
        %1446 = vmatpush2.msra.mxu0 0.0
        %1447 = vmatprep.subr.mxu0 0.0
        %1448 = vmatpush2.msra.mxu0 0.0
        %1449 = vmatprep.subr.mxu0 0.0
        %1450 = vmatpush2.msra.mxu0 0.0
        %1451 = vmatprep.subr.mxu0 0.0
        %1452 = vmatpush2.msra.mxu0 0.0
        %1453 = vmatprep.subr.mxu0 0.0
        %1454 = vmatpush2.msra.mxu0 0.0
        %1455 = vmatprep.subr.mxu0 0.0
        %1456 = vmatpush2.msra.mxu0 0.0
        %1457 = vmatprep.mubr.f32.mxu0 0.0
        %1458 = vmatmul.mubr.f32.gmra.mxu0 %v1391
        %v1459 = vpop.f32.mrf.mxu0
        %v1460 = vadd.f32 %v1388, %v1459
        %v1461 = vpop.f32.mrf.mxu0
        %1462 = vdwg.mxu0
        %v1463 = vadd.f32 %v1280, %v1460
        %v1464 = vsel %vm217, %v1463, 0.0
        %1465 = vadd.xlane.f32.xlu0 %v1464
        %v1466 = vpop.xlane.xlu0 %1465
        %v1467 = vmul.f32 %v1466, %v1260
        %v1468 = vsub.f32 %v1463, %v1467
        %v1469 = vmul.f32 %v1468, %v1468
        %v1470 = vsel %vm217, %v1469, 0.0
        %1471 = vadd.xlane.f32.xlu0 %v1470
        %v1472 = vpop.xlane.xlu0 %1471
        %v1473 = vmul.f32 %v1472, %v1260
        %v1474 = vadd.f32 %v1473, 1e-05
        %v1475 = vrsqrt.pop %v1474
        %v1476 = vmul.f32 %v1468, %v1475
        %v1477 = vlaneseq
        %v1478 = vshrl.u32 %v1477, 7
        %v1479 = vsub.s32 0, %v1478
        %v1480 = vrot.slane %v215, %v1479
        %v1481 = vmul.f32 %v1476, %v1480
        %v1482 = vlaneseq
        %v1483 = vshrl.u32 %v1482, 7
        %v1484 = vsub.s32 0, %v1483
        %v1485 = vrot.slane %v216, %v1484
        %v1486 = vadd.f32 %v1481, %v1485
        %v1487 = vld [vmem:[#allocation5 + $0x158] sm:$0xff]
        %v1488 = vld [vmem:[#allocation5 + $0x160] sm:$0xff]
        %v1489 = vld [vmem:[#allocation5 + $0x168] sm:$0xff]
        %v1490 = vld [vmem:[#allocation5 + $0x170] sm:$0xff]
        %v1491 = vld [vmem:[#allocation5 + $0x178] sm:$0xff]
        %v1492 = vld [vmem:[#allocation5 + $0x180] sm:$0xff]
        %v1493 = vld [vmem:[#allocation5 + $0x188] sm:$0xff]
        %v1494 = vld [vmem:[#allocation5 + $0x190] sm:$0xff]
        %v1495 = vld [vmem:[#allocation5 + $0x198] sm:$0xff]
        %v1496 = vld [vmem:[#allocation5 + $0x1a0] sm:$0xff]
        %v1497 = vld [vmem:[#allocation5 + $0x1a8] sm:$0xff]
        %v1498 = vld [vmem:[#allocation5 + $0x1b0] sm:$0xff]
        %v1499 = vld [vmem:[#allocation5 + $0x1b8] sm:$0xff]
        %v1500 = vld [vmem:[#allocation5 + $0x1c0] sm:$0xff]
        %v1501 = vld [vmem:[#allocation5 + $0x1c8] sm:$0xff]
        %v1502 = vld [vmem:[#allocation5 + $0x1d0] sm:$0xff]
        %v1503 = vld [vmem:[#allocation5 + $0x1d8] sm:$0xff]
        %v1504 = vld [vmem:[#allocation5 + $0x1e0] sm:$0xff]
        %v1505 = vld [vmem:[#allocation5 + $0x1e8] sm:$0xff]
        %v1506 = vld [vmem:[#allocation5 + $0x1f0] sm:$0xff]
        %v1507 = vld [vmem:[#allocation5 + $0x1f8] sm:$0xff]
        %v1508 = vld [vmem:[#allocation5 + $0x200] sm:$0xff]
        %v1509 = vld [vmem:[#allocation5 + $0x208] sm:$0xff]
        %v1510 = vld [vmem:[#allocation5 + $0x210] sm:$0xff]
        %v1511 = vld [vmem:[#allocation5 + $0x218] sm:$0x1]
        %v1512 = vld [vmem:[#allocation5 + $0x220] sm:$0x1]
        %v1513 = vld [vmem:[#allocation5 + $0x228] sm:$0x1]
        %v1514 = vld [vmem:[#allocation5 + $0x230] sm:$0xff]
        %v1515 = vld [vmem:[#allocation5 + $0x238] sm:$0xff]
        %v1516 = vld [vmem:[#allocation5 + $0x240] sm:$0xff]
        %v1517 = vld [vmem:[#allocation5 + $0x248] sm:$0xff]
        %v1518 = vld [vmem:[#allocation5 + $0x250] sm:$0x1]
        %v1519 = vld [vmem:[#allocation5 + $0x258] sm:$0xff]
        %v1520 = vld [vmem:[#allocation5 + $0x260] sm:$0xff]
        %v1521 = vld [vmem:[#allocation5 + $0x268] sm:$0xff]
        %v1522 = vld [vmem:[#allocation5 + $0x270] sm:$0xff]
        %v1523 = vld [vmem:[#allocation5 + $0x278] sm:$0xff]
        %v1524 = vld [vmem:[#allocation5 + $0x280] sm:$0xff]
        %v1525 = vld [vmem:[#allocation5 + $0x288] sm:$0xff]
        %v1526 = vld [vmem:[#allocation5 + $0x290] sm:$0xff]
        %v1527 = vld [vmem:[#allocation5 + $0x298] sm:$0x1]
        %v1528 = vld [vmem:[#allocation5 + $0x2a0] sm:$0x1]
        %v1529 = vld [vmem:[#allocation5 + $0x2a8] sm:$0x1]
        %v1531 = vsel %vm217, %v1486, 0
        %1533 = vmatprep.subr.mxu0 0.0
        %1534 = vmatpush1.msra.mxu0 0.0
        %1535 = vmatprep.subr.mxu0 0.0
        %1536 = vmatpush1.msra.mxu0 0.0
        %1537 = vmatprep.subr.mxu0 0.0
        %1538 = vmatpush1.msra.mxu0 0.0
        %1539 = vmatprep.subr.mxu0 0.0
        %1540 = vmatpush1.msra.mxu0 0.0
        %1541 = vmatprep.subr.mxu0 0.0
        %1542 = vmatpush1.msra.mxu0 0.0
        %1543 = vmatprep.subr.mxu0 0.0
        %1544 = vmatpush1.msra.mxu0 0.0
        %1545 = vmatprep.subr.mxu0 0.0
        %1546 = vmatpush1.msra.mxu0 0.0
        %1547 = vmatprep.subr.mxu0 0.0
        %1548 = vmatpush1.msra.mxu0 0.0
        %1549 = vmatprep.subr.mxu0 0.0
        %1550 = vmatpush1.msra.mxu0 0.0
        %1551 = vmatprep.subr.mxu0 0.0
        %1552 = vmatpush1.msra.mxu0 0.0
        %1553 = vmatprep.subr.mxu0 0.0
        %1554 = vmatpush1.msra.mxu0 0.0
        %1555 = vmatprep.subr.mxu0 0.0
        %1556 = vmatpush1.msra.mxu0 0.0
        %1557 = vmatprep.subr.mxu0 0.0
        %1558 = vmatpush1.msra.mxu0 %v1490
        %1559 = vmatprep.subr.mxu0 0.0
        %1560 = vmatpush1.msra.mxu0 %v1489
        %1561 = vmatprep.subr.mxu0 0.0
        %1562 = vmatpush1.msra.mxu0 %v1488
        %1563 = vmatprep.subr.mxu0 0.0
        %1564 = vmatpush1.msra.mxu0 %v1487
        %1565 = vmatprep.subr.mxu0 0.0
        %1566 = vmatpush2.msra.mxu0 0.0
        %1567 = vmatprep.subr.mxu0 0.0
        %1568 = vmatpush2.msra.mxu0 0.0
        %1569 = vmatprep.subr.mxu0 0.0
        %1570 = vmatpush2.msra.mxu0 0.0
        %1571 = vmatprep.subr.mxu0 0.0
        %1572 = vmatpush2.msra.mxu0 0.0
        %1573 = vmatprep.subr.mxu0 0.0
        %1574 = vmatpush2.msra.mxu0 0.0
        %1575 = vmatprep.subr.mxu0 0.0
        %1576 = vmatpush2.msra.mxu0 0.0
        %1577 = vmatprep.subr.mxu0 0.0
        %1578 = vmatpush2.msra.mxu0 0.0
        %1579 = vmatprep.subr.mxu0 0.0
        %1580 = vmatpush2.msra.mxu0 0.0
        %1581 = vmatprep.subr.mxu0 0.0
        %1582 = vmatpush2.msra.mxu0 0.0
        %1583 = vmatprep.subr.mxu0 0.0
        %1584 = vmatpush2.msra.mxu0 0.0
        %1585 = vmatprep.subr.mxu0 0.0
        %1586 = vmatpush2.msra.mxu0 0.0
        %1587 = vmatprep.subr.mxu0 0.0
        %1588 = vmatpush2.msra.mxu0 0.0
        %1589 = vmatprep.subr.mxu0 0.0
        %1590 = vmatpush2.msra.mxu0 0.0
        %1591 = vmatprep.subr.mxu0 0.0
        %1592 = vmatpush2.msra.mxu0 0.0
        %1593 = vmatprep.subr.mxu0 0.0
        %1594 = vmatpush2.msra.mxu0 0.0
        %1595 = vmatprep.subr.mxu0 0.0
        %1596 = vmatpush2.msra.mxu0 0.0
        %1597 = vmatprep.mubr.f32.mxu0 0.0
        %1598 = vmatmul.mubr.f32.gmra.mxu0 %v1531
        %v1599 = vpop.f32.mrf.mxu0
        %v1600 = vadd.f32 %v1503, %v1599
        %v1601 = vpop.f32.mrf.mxu0
        %1602 = vdwg.mxu0
        %1603 = vmatprep.subr.mxu0 0.0
        %1604 = vmatpush1.msra.mxu0 0.0
        %1605 = vmatprep.subr.mxu0 0.0
        %1606 = vmatpush1.msra.mxu0 0.0
        %1607 = vmatprep.subr.mxu0 0.0
        %1608 = vmatpush1.msra.mxu0 0.0
        %1609 = vmatprep.subr.mxu0 0.0
        %1610 = vmatpush1.msra.mxu0 0.0
        %1611 = vmatprep.subr.mxu0 0.0
        %1612 = vmatpush1.msra.mxu0 0.0
        %1613 = vmatprep.subr.mxu0 0.0
        %1614 = vmatpush1.msra.mxu0 0.0
        %1615 = vmatprep.subr.mxu0 0.0
        %1616 = vmatpush1.msra.mxu0 0.0
        %1617 = vmatprep.subr.mxu0 0.0
        %1618 = vmatpush1.msra.mxu0 0.0
        %1619 = vmatprep.subr.mxu0 0.0
        %1620 = vmatpush1.msra.mxu0 0.0
        %1621 = vmatprep.subr.mxu0 0.0
        %1622 = vmatpush1.msra.mxu0 0.0
        %1623 = vmatprep.subr.mxu0 0.0
        %1624 = vmatpush1.msra.mxu0 0.0
        %1625 = vmatprep.subr.mxu0 0.0
        %1626 = vmatpush1.msra.mxu0 0.0
        %1627 = vmatprep.subr.mxu0 0.0
        %1628 = vmatpush1.msra.mxu0 %v1494
        %1629 = vmatprep.subr.mxu0 0.0
        %1630 = vmatpush1.msra.mxu0 %v1493
        %1631 = vmatprep.subr.mxu0 0.0
        %1632 = vmatpush1.msra.mxu0 %v1492
        %1633 = vmatprep.subr.mxu0 0.0
        %1634 = vmatpush1.msra.mxu0 %v1491
        %1635 = vmatprep.subr.mxu0 0.0
        %1636 = vmatpush2.msra.mxu0 0.0
        %1637 = vmatprep.subr.mxu0 0.0
        %1638 = vmatpush2.msra.mxu0 0.0
        %1639 = vmatprep.subr.mxu0 0.0
        %1640 = vmatpush2.msra.mxu0 0.0
        %1641 = vmatprep.subr.mxu0 0.0
        %1642 = vmatpush2.msra.mxu0 0.0
        %1643 = vmatprep.subr.mxu0 0.0
        %1644 = vmatpush2.msra.mxu0 0.0
        %1645 = vmatprep.subr.mxu0 0.0
        %1646 = vmatpush2.msra.mxu0 0.0
        %1647 = vmatprep.subr.mxu0 0.0
        %1648 = vmatpush2.msra.mxu0 0.0
        %1649 = vmatprep.subr.mxu0 0.0
        %1650 = vmatpush2.msra.mxu0 0.0
        %1651 = vmatprep.subr.mxu0 0.0
        %1652 = vmatpush2.msra.mxu0 0.0
        %1653 = vmatprep.subr.mxu0 0.0
        %1654 = vmatpush2.msra.mxu0 0.0
        %1655 = vmatprep.subr.mxu0 0.0
        %1656 = vmatpush2.msra.mxu0 0.0
        %1657 = vmatprep.subr.mxu0 0.0
        %1658 = vmatpush2.msra.mxu0 0.0
        %1659 = vmatprep.subr.mxu0 0.0
        %1660 = vmatpush2.msra.mxu0 0.0
        %1661 = vmatprep.subr.mxu0 0.0
        %1662 = vmatpush2.msra.mxu0 0.0
        %1663 = vmatprep.subr.mxu0 0.0
        %1664 = vmatpush2.msra.mxu0 0.0
        %1665 = vmatprep.subr.mxu0 0.0
        %1666 = vmatpush2.msra.mxu0 0.0
        %1667 = vmatprep.mubr.f32.mxu0 0.0
        %1668 = vmatmul.mubr.f32.gmra.mxu0 %v1531
        %v1669 = vpop.f32.mrf.mxu0
        %v1670 = vadd.f32 %v1504, %v1669
        %v1671 = vpop.f32.mrf.mxu0
        %1672 = vdwg.mxu0
        %1673 = vmatprep.subr.mxu0 0.0
        %1674 = vmatpush1.msra.mxu0 0.0
        %1675 = vmatprep.subr.mxu0 0.0
        %1676 = vmatpush1.msra.mxu0 0.0
        %1677 = vmatprep.subr.mxu0 0.0
        %1678 = vmatpush1.msra.mxu0 0.0
        %1679 = vmatprep.subr.mxu0 0.0
        %1680 = vmatpush1.msra.mxu0 0.0
        %1681 = vmatprep.subr.mxu0 0.0
        %1682 = vmatpush1.msra.mxu0 0.0
        %1683 = vmatprep.subr.mxu0 0.0
        %1684 = vmatpush1.msra.mxu0 0.0
        %1685 = vmatprep.subr.mxu0 0.0
        %1686 = vmatpush1.msra.mxu0 0.0
        %1687 = vmatprep.subr.mxu0 0.0
        %1688 = vmatpush1.msra.mxu0 0.0
        %1689 = vmatprep.subr.mxu0 0.0
        %1690 = vmatpush1.msra.mxu0 0.0
        %1691 = vmatprep.subr.mxu0 0.0
        %1692 = vmatpush1.msra.mxu0 0.0
        %1693 = vmatprep.subr.mxu0 0.0
        %1694 = vmatpush1.msra.mxu0 0.0
        %1695 = vmatprep.subr.mxu0 0.0
        %1696 = vmatpush1.msra.mxu0 0.0
        %1697 = vmatprep.subr.mxu0 0.0
        %1698 = vmatpush1.msra.mxu0 %v1498
        %1699 = vmatprep.subr.mxu0 0.0
        %1700 = vmatpush1.msra.mxu0 %v1497
        %1701 = vmatprep.subr.mxu0 0.0
        %1702 = vmatpush1.msra.mxu0 %v1496
        %1703 = vmatprep.subr.mxu0 0.0
        %1704 = vmatpush1.msra.mxu0 %v1495
        %1705 = vmatprep.subr.mxu0 0.0
        %1706 = vmatpush2.msra.mxu0 0.0
        %1707 = vmatprep.subr.mxu0 0.0
        %1708 = vmatpush2.msra.mxu0 0.0
        %1709 = vmatprep.subr.mxu0 0.0
        %1710 = vmatpush2.msra.mxu0 0.0
        %1711 = vmatprep.subr.mxu0 0.0
        %1712 = vmatpush2.msra.mxu0 0.0
        %1713 = vmatprep.subr.mxu0 0.0
        %1714 = vmatpush2.msra.mxu0 0.0
        %1715 = vmatprep.subr.mxu0 0.0
        %1716 = vmatpush2.msra.mxu0 0.0
        %1717 = vmatprep.subr.mxu0 0.0
        %1718 = vmatpush2.msra.mxu0 0.0
        %1719 = vmatprep.subr.mxu0 0.0
        %1720 = vmatpush2.msra.mxu0 0.0
        %1721 = vmatprep.subr.mxu0 0.0
        %1722 = vmatpush2.msra.mxu0 0.0
        %1723 = vmatprep.subr.mxu0 0.0
        %1724 = vmatpush2.msra.mxu0 0.0
        %1725 = vmatprep.subr.mxu0 0.0
        %1726 = vmatpush2.msra.mxu0 0.0
        %1727 = vmatprep.subr.mxu0 0.0
        %1728 = vmatpush2.msra.mxu0 0.0
        %1729 = vmatprep.subr.mxu0 0.0
        %1730 = vmatpush2.msra.mxu0 0.0
        %1731 = vmatprep.subr.mxu0 0.0
        %1732 = vmatpush2.msra.mxu0 0.0
        %1733 = vmatprep.subr.mxu0 0.0
        %1734 = vmatpush2.msra.mxu0 0.0
        %1735 = vmatprep.subr.mxu0 0.0
        %1736 = vmatpush2.msra.mxu0 0.0
        %1737 = vmatprep.mubr.f32.mxu0 0.0
        %1738 = vmatmul.mubr.f32.gmra.mxu0 %v1531
        %v1739 = vpop.f32.mrf.mxu0
        %v1740 = vadd.f32 %v1505, %v1739
        %v1741 = vpop.f32.mrf.mxu0
        %1742 = vdwg.mxu0
        %1743 = vmatprep.subr.mxu0 0.0
        %1744 = vmatpush1.msra.mxu0 0.0
        %1745 = vmatprep.subr.mxu0 0.0
        %1746 = vmatpush1.msra.mxu0 0.0
        %1747 = vmatprep.subr.mxu0 0.0
        %1748 = vmatpush1.msra.mxu0 0.0
        %1749 = vmatprep.subr.mxu0 0.0
        %1750 = vmatpush1.msra.mxu0 0.0
        %1751 = vmatprep.subr.mxu0 0.0
        %1752 = vmatpush1.msra.mxu0 0.0
        %1753 = vmatprep.subr.mxu0 0.0
        %1754 = vmatpush1.msra.mxu0 0.0
        %1755 = vmatprep.subr.mxu0 0.0
        %1756 = vmatpush1.msra.mxu0 0.0
        %1757 = vmatprep.subr.mxu0 0.0
        %1758 = vmatpush1.msra.mxu0 0.0
        %1759 = vmatprep.subr.mxu0 0.0
        %1760 = vmatpush1.msra.mxu0 0.0
        %1761 = vmatprep.subr.mxu0 0.0
        %1762 = vmatpush1.msra.mxu0 0.0
        %1763 = vmatprep.subr.mxu0 0.0
        %1764 = vmatpush1.msra.mxu0 0.0
        %1765 = vmatprep.subr.mxu0 0.0
        %1766 = vmatpush1.msra.mxu0 0.0
        %1767 = vmatprep.subr.mxu0 0.0
        %1768 = vmatpush1.msra.mxu0 %v1502
        %1769 = vmatprep.subr.mxu0 0.0
        %1770 = vmatpush1.msra.mxu0 %v1501
        %1771 = vmatprep.subr.mxu0 0.0
        %1772 = vmatpush1.msra.mxu0 %v1500
        %1773 = vmatprep.subr.mxu0 0.0
        %1774 = vmatpush1.msra.mxu0 %v1499
        %1775 = vmatprep.subr.mxu0 0.0
        %1776 = vmatpush2.msra.mxu0 0.0
        %1777 = vmatprep.subr.mxu0 0.0
        %1778 = vmatpush2.msra.mxu0 0.0
        %1779 = vmatprep.subr.mxu0 0.0
        %1780 = vmatpush2.msra.mxu0 0.0
        %1781 = vmatprep.subr.mxu0 0.0
        %1782 = vmatpush2.msra.mxu0 0.0
        %1783 = vmatprep.subr.mxu0 0.0
        %1784 = vmatpush2.msra.mxu0 0.0
        %1785 = vmatprep.subr.mxu0 0.0
        %1786 = vmatpush2.msra.mxu0 0.0
        %1787 = vmatprep.subr.mxu0 0.0
        %1788 = vmatpush2.msra.mxu0 0.0
        %1789 = vmatprep.subr.mxu0 0.0
        %1790 = vmatpush2.msra.mxu0 0.0
        %1791 = vmatprep.subr.mxu0 0.0
        %1792 = vmatpush2.msra.mxu0 0.0
        %1793 = vmatprep.subr.mxu0 0.0
        %1794 = vmatpush2.msra.mxu0 0.0
        %1795 = vmatprep.subr.mxu0 0.0
        %1796 = vmatpush2.msra.mxu0 0.0
        %1797 = vmatprep.subr.mxu0 0.0
        %1798 = vmatpush2.msra.mxu0 0.0
        %1799 = vmatprep.subr.mxu0 0.0
        %1800 = vmatpush2.msra.mxu0 0.0
        %1801 = vmatprep.subr.mxu0 0.0
        %1802 = vmatpush2.msra.mxu0 0.0
        %1803 = vmatprep.subr.mxu0 0.0
        %1804 = vmatpush2.msra.mxu0 0.0
        %1805 = vmatprep.subr.mxu0 0.0
        %1806 = vmatpush2.msra.mxu0 0.0
        %1807 = vmatprep.mubr.f32.mxu0 0.0
        %1808 = vmatmul.mubr.f32.gmra.mxu0 %v1531
        %v1809 = vpop.f32.mrf.mxu0
        %v1810 = vadd.f32 %v1506, %v1809
        %v1811 = vpop.f32.mrf.mxu0
        %1812 = vdwg.mxu0
        %1814 = vrot.lane.b32.xlu0 %v1600, 120
        %v1815 = vpop.permute.xlu0 %1814
        %v1816 = vsel %vm504, %v1600, 0
        %v1818 = vsel %vm504, %v1815, 0
        %1820 = vmatprep.subr.mxu0 0.0
        %1821 = vmatpush1.xpose.msra.mxu0 0.0
        %1822 = vmatprep.subr.mxu0 0.0
        %1823 = vmatpush1.xpose.msra.mxu0 0.0
        %1824 = vmatprep.subr.mxu0 0.0
        %1825 = vmatpush1.xpose.msra.mxu0 0.0
        %1826 = vmatprep.subr.mxu0 0.0
        %1827 = vmatpush1.xpose.msra.mxu0 0.0
        %1828 = vmatprep.subr.mxu0 0.0
        %1829 = vmatpush1.xpose.msra.mxu0 0.0
        %1830 = vmatprep.subr.mxu0 0.0
        %1831 = vmatpush1.xpose.msra.mxu0 0.0
        %1832 = vmatprep.subr.mxu0 0.0
        %1833 = vmatpush1.xpose.msra.mxu0 0.0
        %1834 = vmatprep.subr.mxu0 0.0
        %1835 = vmatpush1.xpose.msra.mxu0 0.0
        %1836 = vmatprep.subr.mxu0 0.0
        %1837 = vmatpush1.xpose.msra.mxu0 0.0
        %1838 = vmatprep.subr.mxu0 0.0
        %1839 = vmatpush1.xpose.msra.mxu0 0.0
        %1840 = vmatprep.subr.mxu0 0.0
        %1841 = vmatpush1.xpose.msra.mxu0 0.0
        %1842 = vmatprep.subr.mxu0 0.0
        %1843 = vmatpush1.xpose.msra.mxu0 0.0
        %1844 = vmatprep.subr.mxu0 0.0
        %1845 = vmatpush1.xpose.msra.mxu0 0.0
        %1846 = vmatprep.subr.mxu0 0.0
        %1847 = vmatpush1.xpose.msra.mxu0 0.0
        %1848 = vmatprep.subr.mxu0 0.0
        %1849 = vmatpush1.xpose.msra.mxu0 0.0
        %1850 = vmatprep.subr.mxu0 0.0
        %1851 = vmatpush1.xpose.msra.mxu0 %v1818
        %1852 = vmatprep.subr.mxu0 0.0
        %1853 = vmatpush2.xpose.msra.mxu0 0.0
        %1854 = vmatprep.subr.mxu0 0.0
        %1855 = vmatpush2.xpose.msra.mxu0 0.0
        %1856 = vmatprep.subr.mxu0 0.0
        %1857 = vmatpush2.xpose.msra.mxu0 0.0
        %1858 = vmatprep.subr.mxu0 0.0
        %1859 = vmatpush2.xpose.msra.mxu0 0.0
        %1860 = vmatprep.subr.mxu0 0.0
        %1861 = vmatpush2.xpose.msra.mxu0 0.0
        %1862 = vmatprep.subr.mxu0 0.0
        %1863 = vmatpush2.xpose.msra.mxu0 0.0
        %1864 = vmatprep.subr.mxu0 0.0
        %1865 = vmatpush2.xpose.msra.mxu0 0.0
        %1866 = vmatprep.subr.mxu0 0.0
        %1867 = vmatpush2.xpose.msra.mxu0 0.0
        %1868 = vmatprep.subr.mxu0 0.0
        %1869 = vmatpush2.xpose.msra.mxu0 0.0
        %1870 = vmatprep.subr.mxu0 0.0
        %1871 = vmatpush2.xpose.msra.mxu0 0.0
        %1872 = vmatprep.subr.mxu0 0.0
        %1873 = vmatpush2.xpose.msra.mxu0 0.0
        %1874 = vmatprep.subr.mxu0 0.0
        %1875 = vmatpush2.xpose.msra.mxu0 0.0
        %1876 = vmatprep.subr.mxu0 0.0
        %1877 = vmatpush2.xpose.msra.mxu0 0.0
        %1878 = vmatprep.subr.mxu0 0.0
        %1879 = vmatpush2.xpose.msra.mxu0 0.0
        %1880 = vmatprep.subr.mxu0 0.0
        %1881 = vmatpush2.xpose.msra.mxu0 0.0
        %1882 = vmatprep.subr.mxu0 0.0
        %1883 = vmatpush2.xpose.msra.mxu0 0.0
        %1884 = vmatprep.mubr.f32.mxu0 0.0
        %1885 = vmatmul.mubr.f32.gmra.mxu0 %v1816
        %v1886 = vpop.f32.mrf.mxu0
        %v1887 = vadd.f32 0.0, %v1886
        %v1888 = vpop.f32.mrf.mxu0
        %1889 = vdwg.mxu0
        %1891 = vrot.lane.b32.xlu0 %v1670, 120
        %v1892 = vpop.permute.xlu0 %1891
        %v1893 = vsel %vm504, %v1670, 0
        %v1895 = vsel %vm504, %v1892, 0
        %1897 = vmatprep.subr.mxu0 0.0
        %1898 = vmatpush1.xpose.msra.mxu0 0.0
        %1899 = vmatprep.subr.mxu0 0.0
        %1900 = vmatpush1.xpose.msra.mxu0 0.0
        %1901 = vmatprep.subr.mxu0 0.0
        %1902 = vmatpush1.xpose.msra.mxu0 0.0
        %1903 = vmatprep.subr.mxu0 0.0
        %1904 = vmatpush1.xpose.msra.mxu0 0.0
        %1905 = vmatprep.subr.mxu0 0.0
        %1906 = vmatpush1.xpose.msra.mxu0 0.0
        %1907 = vmatprep.subr.mxu0 0.0
        %1908 = vmatpush1.xpose.msra.mxu0 0.0
        %1909 = vmatprep.subr.mxu0 0.0
        %1910 = vmatpush1.xpose.msra.mxu0 0.0
        %1911 = vmatprep.subr.mxu0 0.0
        %1912 = vmatpush1.xpose.msra.mxu0 0.0
        %1913 = vmatprep.subr.mxu0 0.0
        %1914 = vmatpush1.xpose.msra.mxu0 0.0
        %1915 = vmatprep.subr.mxu0 0.0
        %1916 = vmatpush1.xpose.msra.mxu0 0.0
        %1917 = vmatprep.subr.mxu0 0.0
        %1918 = vmatpush1.xpose.msra.mxu0 0.0
        %1919 = vmatprep.subr.mxu0 0.0
        %1920 = vmatpush1.xpose.msra.mxu0 0.0
        %1921 = vmatprep.subr.mxu0 0.0
        %1922 = vmatpush1.xpose.msra.mxu0 0.0
        %1923 = vmatprep.subr.mxu0 0.0
        %1924 = vmatpush1.xpose.msra.mxu0 0.0
        %1925 = vmatprep.subr.mxu0 0.0
        %1926 = vmatpush1.xpose.msra.mxu0 0.0
        %1927 = vmatprep.subr.mxu0 0.0
        %1928 = vmatpush1.xpose.msra.mxu0 %v1895
        %1929 = vmatprep.subr.mxu0 0.0
        %1930 = vmatpush2.xpose.msra.mxu0 0.0
        %1931 = vmatprep.subr.mxu0 0.0
        %1932 = vmatpush2.xpose.msra.mxu0 0.0
        %1933 = vmatprep.subr.mxu0 0.0
        %1934 = vmatpush2.xpose.msra.mxu0 0.0
        %1935 = vmatprep.subr.mxu0 0.0
        %1936 = vmatpush2.xpose.msra.mxu0 0.0
        %1937 = vmatprep.subr.mxu0 0.0
        %1938 = vmatpush2.xpose.msra.mxu0 0.0
        %1939 = vmatprep.subr.mxu0 0.0
        %1940 = vmatpush2.xpose.msra.mxu0 0.0
        %1941 = vmatprep.subr.mxu0 0.0
        %1942 = vmatpush2.xpose.msra.mxu0 0.0
        %1943 = vmatprep.subr.mxu0 0.0
        %1944 = vmatpush2.xpose.msra.mxu0 0.0
        %1945 = vmatprep.subr.mxu0 0.0
        %1946 = vmatpush2.xpose.msra.mxu0 0.0
        %1947 = vmatprep.subr.mxu0 0.0
        %1948 = vmatpush2.xpose.msra.mxu0 0.0
        %1949 = vmatprep.subr.mxu0 0.0
        %1950 = vmatpush2.xpose.msra.mxu0 0.0
        %1951 = vmatprep.subr.mxu0 0.0
        %1952 = vmatpush2.xpose.msra.mxu0 0.0
        %1953 = vmatprep.subr.mxu0 0.0
        %1954 = vmatpush2.xpose.msra.mxu0 0.0
        %1955 = vmatprep.subr.mxu0 0.0
        %1956 = vmatpush2.xpose.msra.mxu0 0.0
        %1957 = vmatprep.subr.mxu0 0.0
        %1958 = vmatpush2.xpose.msra.mxu0 0.0
        %1959 = vmatprep.subr.mxu0 0.0
        %1960 = vmatpush2.xpose.msra.mxu0 0.0
        %1961 = vmatprep.mubr.f32.mxu0 0.0
        %1962 = vmatmul.mubr.f32.gmra.mxu0 %v1893
        %v1963 = vpop.f32.mrf.mxu0
        %v1964 = vadd.f32 0.0, %v1963
        %v1965 = vpop.f32.mrf.mxu0
        %1966 = vdwg.mxu0
        %1968 = vrot.lane.b32.xlu0 %v1740, 120
        %v1969 = vpop.permute.xlu0 %1968
        %v1970 = vsel %vm504, %v1740, 0
        %v1972 = vsel %vm504, %v1969, 0
        %1974 = vmatprep.subr.mxu0 0.0
        %1975 = vmatpush1.xpose.msra.mxu0 0.0
        %1976 = vmatprep.subr.mxu0 0.0
        %1977 = vmatpush1.xpose.msra.mxu0 0.0
        %1978 = vmatprep.subr.mxu0 0.0
        %1979 = vmatpush1.xpose.msra.mxu0 0.0
        %1980 = vmatprep.subr.mxu0 0.0
        %1981 = vmatpush1.xpose.msra.mxu0 0.0
        %1982 = vmatprep.subr.mxu0 0.0
        %1983 = vmatpush1.xpose.msra.mxu0 0.0
        %1984 = vmatprep.subr.mxu0 0.0
        %1985 = vmatpush1.xpose.msra.mxu0 0.0
        %1986 = vmatprep.subr.mxu0 0.0
        %1987 = vmatpush1.xpose.msra.mxu0 0.0
        %1988 = vmatprep.subr.mxu0 0.0
        %1989 = vmatpush1.xpose.msra.mxu0 0.0
        %1990 = vmatprep.subr.mxu0 0.0
        %1991 = vmatpush1.xpose.msra.mxu0 0.0
        %1992 = vmatprep.subr.mxu0 0.0
        %1993 = vmatpush1.xpose.msra.mxu0 0.0
        %1994 = vmatprep.subr.mxu0 0.0
        %1995 = vmatpush1.xpose.msra.mxu0 0.0
        %1996 = vmatprep.subr.mxu0 0.0
        %1997 = vmatpush1.xpose.msra.mxu0 0.0
        %1998 = vmatprep.subr.mxu0 0.0
        %1999 = vmatpush1.xpose.msra.mxu0 0.0
        %2000 = vmatprep.subr.mxu0 0.0
        %2001 = vmatpush1.xpose.msra.mxu0 0.0
        %2002 = vmatprep.subr.mxu0 0.0
        %2003 = vmatpush1.xpose.msra.mxu0 0.0
        %2004 = vmatprep.subr.mxu0 0.0
        %2005 = vmatpush1.xpose.msra.mxu0 %v1972
        %2006 = vmatprep.subr.mxu0 0.0
        %2007 = vmatpush2.xpose.msra.mxu0 0.0
        %2008 = vmatprep.subr.mxu0 0.0
        %2009 = vmatpush2.xpose.msra.mxu0 0.0
        %2010 = vmatprep.subr.mxu0 0.0
        %2011 = vmatpush2.xpose.msra.mxu0 0.0
        %2012 = vmatprep.subr.mxu0 0.0
        %2013 = vmatpush2.xpose.msra.mxu0 0.0
        %2014 = vmatprep.subr.mxu0 0.0
        %2015 = vmatpush2.xpose.msra.mxu0 0.0
        %2016 = vmatprep.subr.mxu0 0.0
        %2017 = vmatpush2.xpose.msra.mxu0 0.0
        %2018 = vmatprep.subr.mxu0 0.0
        %2019 = vmatpush2.xpose.msra.mxu0 0.0
        %2020 = vmatprep.subr.mxu0 0.0
        %2021 = vmatpush2.xpose.msra.mxu0 0.0
        %2022 = vmatprep.subr.mxu0 0.0
        %2023 = vmatpush2.xpose.msra.mxu0 0.0
        %2024 = vmatprep.subr.mxu0 0.0
        %2025 = vmatpush2.xpose.msra.mxu0 0.0
        %2026 = vmatprep.subr.mxu0 0.0
        %2027 = vmatpush2.xpose.msra.mxu0 0.0
        %2028 = vmatprep.subr.mxu0 0.0
        %2029 = vmatpush2.xpose.msra.mxu0 0.0
        %2030 = vmatprep.subr.mxu0 0.0
        %2031 = vmatpush2.xpose.msra.mxu0 0.0
        %2032 = vmatprep.subr.mxu0 0.0
        %2033 = vmatpush2.xpose.msra.mxu0 0.0
        %2034 = vmatprep.subr.mxu0 0.0
        %2035 = vmatpush2.xpose.msra.mxu0 0.0
        %2036 = vmatprep.subr.mxu0 0.0
        %2037 = vmatpush2.xpose.msra.mxu0 0.0
        %2038 = vmatprep.mubr.f32.mxu0 0.0
        %2039 = vmatmul.mubr.f32.gmra.mxu0 %v1970
        %v2040 = vpop.f32.mrf.mxu0
        %v2041 = vadd.f32 0.0, %v2040
        %v2042 = vpop.f32.mrf.mxu0
        %2043 = vdwg.mxu0
        %2045 = vrot.lane.b32.xlu0 %v1810, 120
        %v2046 = vpop.permute.xlu0 %2045
        %v2047 = vsel %vm504, %v1810, 0
        %v2049 = vsel %vm504, %v2046, 0
        %2051 = vmatprep.subr.mxu0 0.0
        %2052 = vmatpush1.xpose.msra.mxu0 0.0
        %2053 = vmatprep.subr.mxu0 0.0
        %2054 = vmatpush1.xpose.msra.mxu0 0.0
        %2055 = vmatprep.subr.mxu0 0.0
        %2056 = vmatpush1.xpose.msra.mxu0 0.0
        %2057 = vmatprep.subr.mxu0 0.0
        %2058 = vmatpush1.xpose.msra.mxu0 0.0
        %2059 = vmatprep.subr.mxu0 0.0
        %2060 = vmatpush1.xpose.msra.mxu0 0.0
        %2061 = vmatprep.subr.mxu0 0.0
        %2062 = vmatpush1.xpose.msra.mxu0 0.0
        %2063 = vmatprep.subr.mxu0 0.0
        %2064 = vmatpush1.xpose.msra.mxu0 0.0
        %2065 = vmatprep.subr.mxu0 0.0
        %2066 = vmatpush1.xpose.msra.mxu0 0.0
        %2067 = vmatprep.subr.mxu0 0.0
        %2068 = vmatpush1.xpose.msra.mxu0 0.0
        %2069 = vmatprep.subr.mxu0 0.0
        %2070 = vmatpush1.xpose.msra.mxu0 0.0
        %2071 = vmatprep.subr.mxu0 0.0
        %2072 = vmatpush1.xpose.msra.mxu0 0.0
        %2073 = vmatprep.subr.mxu0 0.0
        %2074 = vmatpush1.xpose.msra.mxu0 0.0
        %2075 = vmatprep.subr.mxu0 0.0
        %2076 = vmatpush1.xpose.msra.mxu0 0.0
        %2077 = vmatprep.subr.mxu0 0.0
        %2078 = vmatpush1.xpose.msra.mxu0 0.0
        %2079 = vmatprep.subr.mxu0 0.0
        %2080 = vmatpush1.xpose.msra.mxu0 0.0
        %2081 = vmatprep.subr.mxu0 0.0
        %2082 = vmatpush1.xpose.msra.mxu0 %v2049
        %2083 = vmatprep.subr.mxu0 0.0
        %2084 = vmatpush2.xpose.msra.mxu0 0.0
        %2085 = vmatprep.subr.mxu0 0.0
        %2086 = vmatpush2.xpose.msra.mxu0 0.0
        %2087 = vmatprep.subr.mxu0 0.0
        %2088 = vmatpush2.xpose.msra.mxu0 0.0
        %2089 = vmatprep.subr.mxu0 0.0
        %2090 = vmatpush2.xpose.msra.mxu0 0.0
        %2091 = vmatprep.subr.mxu0 0.0
        %2092 = vmatpush2.xpose.msra.mxu0 0.0
        %2093 = vmatprep.subr.mxu0 0.0
        %2094 = vmatpush2.xpose.msra.mxu0 0.0
        %2095 = vmatprep.subr.mxu0 0.0
        %2096 = vmatpush2.xpose.msra.mxu0 0.0
        %2097 = vmatprep.subr.mxu0 0.0
        %2098 = vmatpush2.xpose.msra.mxu0 0.0
        %2099 = vmatprep.subr.mxu0 0.0
        %2100 = vmatpush2.xpose.msra.mxu0 0.0
        %2101 = vmatprep.subr.mxu0 0.0
        %2102 = vmatpush2.xpose.msra.mxu0 0.0
        %2103 = vmatprep.subr.mxu0 0.0
        %2104 = vmatpush2.xpose.msra.mxu0 0.0
        %2105 = vmatprep.subr.mxu0 0.0
        %2106 = vmatpush2.xpose.msra.mxu0 0.0
        %2107 = vmatprep.subr.mxu0 0.0
        %2108 = vmatpush2.xpose.msra.mxu0 0.0
        %2109 = vmatprep.subr.mxu0 0.0
        %2110 = vmatpush2.xpose.msra.mxu0 0.0
        %2111 = vmatprep.subr.mxu0 0.0
        %2112 = vmatpush2.xpose.msra.mxu0 0.0
        %2113 = vmatprep.subr.mxu0 0.0
        %2114 = vmatpush2.xpose.msra.mxu0 0.0
        %2115 = vmatprep.mubr.f32.mxu0 0.0
        %2116 = vmatmul.mubr.f32.gmra.mxu0 %v2047
        %v2117 = vpop.f32.mrf.mxu0
        %v2118 = vadd.f32 0.0, %v2117
        %v2119 = vpop.f32.mrf.mxu0
        %2120 = vdwg.mxu0
        %v2121 = vmul.f32 %v1887, 0.35355338
        %v2122 = vmul.f32 %v1964, 0.35355338
        %v2123 = vmul.f32 %v2041, 0.35355338
        %v2124 = vmul.f32 %v2118, 0.35355338
        %v2125 = vsel %vm504, %v2121, -inf
        %2126 = vmax.xlane.f32.xlu0 %v2125
        %v2127 = vpop.xlane.xlu0 %2126
        %v2128 = vsel %vm504, %v2122, -inf
        %2129 = vmax.xlane.f32.xlu0 %v2128
        %v2130 = vpop.xlane.xlu0 %2129
        %v2131 = vsel %vm504, %v2123, -inf
        %2132 = vmax.xlane.f32.xlu0 %v2131
        %v2133 = vpop.xlane.xlu0 %2132
        %v2134 = vsel %vm504, %v2124, -inf
        %2135 = vmax.xlane.f32.xlu0 %v2134
        %v2136 = vpop.xlane.xlu0 %2135
        %v2137 = vsub.f32 %v2121, %v2127
        %v2138 = vsub.f32 %v2122, %v2130
        %v2139 = vsub.f32 %v2123, %v2133
        %v2140 = vsub.f32 %v2124, %v2136
        %v2141 = vmul.f32 %v2137, 1.442695
        %v2142 = vpow.pop %v2141
        %v2143 = vmul.f32 %v2138, 1.442695
        %v2144 = vpow.pop %v2143
        %v2145 = vmul.f32 %v2139, 1.442695
        %v2146 = vpow.pop %v2145
        %v2147 = vmul.f32 %v2140, 1.442695
        %v2148 = vpow.pop %v2147
        %v2149 = vsel %vm504, %v2142, 0.0
        %2150 = vadd.xlane.f32.xlu0 %v2149
        %v2151 = vpop.xlane.xlu0 %2150
        %v2152 = vsel %vm504, %v2144, 0.0
        %2153 = vadd.xlane.f32.xlu0 %v2152
        %v2154 = vpop.xlane.xlu0 %2153
        %v2155 = vsel %vm504, %v2146, 0.0
        %2156 = vadd.xlane.f32.xlu0 %v2155
        %v2157 = vpop.xlane.xlu0 %2156
        %v2158 = vsel %vm504, %v2148, 0.0
        %2159 = vadd.xlane.f32.xlu0 %v2158
        %v2160 = vpop.xlane.xlu0 %2159
        %v2161 = vrcp.pop %v2151
        %v2162 = vmul.f32 %v2142, %v2161
        %v2163 = vrcp.pop %v2154
        %v2164 = vmul.f32 %v2144, %v2163
        %v2165 = vrcp.pop %v2157
        %v2166 = vmul.f32 %v2146, %v2165
        %v2167 = vrcp.pop %v2160
        %v2168 = vmul.f32 %v2148, %v2167
        %2169 = vrot.lane.b32.xlu0 %v1600, 112
        %v2170 = vpop.permute.xlu0 %2169
        %v2173 = vsel %vm504, %v2162, 0
        %2175 = vmatprep.subr.mxu0 0.0
        %2176 = vmatpush1.msra.mxu0 0.0
        %2177 = vmatprep.subr.mxu0 0.0
        %2178 = vmatpush1.msra.mxu0 0.0
        %2179 = vmatprep.subr.mxu0 0.0
        %2180 = vmatpush1.msra.mxu0 0.0
        %2181 = vmatprep.subr.mxu0 0.0
        %2182 = vmatpush1.msra.mxu0 0.0
        %2183 = vmatprep.subr.mxu0 0.0
        %2184 = vmatpush1.msra.mxu0 0.0
        %2185 = vmatprep.subr.mxu0 0.0
        %2186 = vmatpush1.msra.mxu0 0.0
        %2187 = vmatprep.subr.mxu0 0.0
        %2188 = vmatpush1.msra.mxu0 0.0
        %2189 = vmatprep.subr.mxu0 0.0
        %2190 = vmatpush1.msra.mxu0 0.0
        %2191 = vmatprep.subr.mxu0 0.0
        %2192 = vmatpush1.msra.mxu0 0.0
        %2193 = vmatprep.subr.mxu0 0.0
        %2194 = vmatpush1.msra.mxu0 0.0
        %2195 = vmatprep.subr.mxu0 0.0
        %2196 = vmatpush1.msra.mxu0 0.0
        %2197 = vmatprep.subr.mxu0 0.0
        %2198 = vmatpush1.msra.mxu0 0.0
        %2199 = vmatprep.subr.mxu0 0.0
        %2200 = vmatpush1.msra.mxu0 0.0
        %2201 = vmatprep.subr.mxu0 0.0
        %2202 = vmatpush1.msra.mxu0 0.0
        %2203 = vmatprep.subr.mxu0 0.0
        %2204 = vmatpush1.msra.mxu0 0.0
        %2205 = vmatprep.subr.mxu0 0.0
        %2206 = vmatpush1.msra.mxu0 %v2170
        %2207 = vmatprep.subr.mxu0 0.0
        %2208 = vmatpush2.msra.mxu0 0.0
        %2209 = vmatprep.subr.mxu0 0.0
        %2210 = vmatpush2.msra.mxu0 0.0
        %2211 = vmatprep.subr.mxu0 0.0
        %2212 = vmatpush2.msra.mxu0 0.0
        %2213 = vmatprep.subr.mxu0 0.0
        %2214 = vmatpush2.msra.mxu0 0.0
        %2215 = vmatprep.subr.mxu0 0.0
        %2216 = vmatpush2.msra.mxu0 0.0
        %2217 = vmatprep.subr.mxu0 0.0
        %2218 = vmatpush2.msra.mxu0 0.0
        %2219 = vmatprep.subr.mxu0 0.0
        %2220 = vmatpush2.msra.mxu0 0.0
        %2221 = vmatprep.subr.mxu0 0.0
        %2222 = vmatpush2.msra.mxu0 0.0
        %2223 = vmatprep.subr.mxu0 0.0
        %2224 = vmatpush2.msra.mxu0 0.0
        %2225 = vmatprep.subr.mxu0 0.0
        %2226 = vmatpush2.msra.mxu0 0.0
        %2227 = vmatprep.subr.mxu0 0.0
        %2228 = vmatpush2.msra.mxu0 0.0
        %2229 = vmatprep.subr.mxu0 0.0
        %2230 = vmatpush2.msra.mxu0 0.0
        %2231 = vmatprep.subr.mxu0 0.0
        %2232 = vmatpush2.msra.mxu0 0.0
        %2233 = vmatprep.subr.mxu0 0.0
        %2234 = vmatpush2.msra.mxu0 0.0
        %2235 = vmatprep.subr.mxu0 0.0
        %2236 = vmatpush2.msra.mxu0 0.0
        %2237 = vmatprep.subr.mxu0 0.0
        %2238 = vmatpush2.msra.mxu0 0.0
        %2239 = vmatprep.mubr.f32.mxu0 0.0
        %2240 = vmatmul.mubr.f32.gmra.mxu0 %v2173
        %v2241 = vpop.f32.mrf.mxu0
        %v2242 = vadd.f32 0.0, %v2241
        %v2243 = vpop.f32.mrf.mxu0
        %2244 = vdwg.mxu0
        %2245 = vrot.lane.b32.xlu0 %v1670, 112
        %v2246 = vpop.permute.xlu0 %2245
        %v2249 = vsel %vm504, %v2164, 0
        %2251 = vmatprep.subr.mxu0 0.0
        %2252 = vmatpush1.msra.mxu0 0.0
        %2253 = vmatprep.subr.mxu0 0.0
        %2254 = vmatpush1.msra.mxu0 0.0
        %2255 = vmatprep.subr.mxu0 0.0
        %2256 = vmatpush1.msra.mxu0 0.0
        %2257 = vmatprep.subr.mxu0 0.0
        %2258 = vmatpush1.msra.mxu0 0.0
        %2259 = vmatprep.subr.mxu0 0.0
        %2260 = vmatpush1.msra.mxu0 0.0
        %2261 = vmatprep.subr.mxu0 0.0
        %2262 = vmatpush1.msra.mxu0 0.0
        %2263 = vmatprep.subr.mxu0 0.0
        %2264 = vmatpush1.msra.mxu0 0.0
        %2265 = vmatprep.subr.mxu0 0.0
        %2266 = vmatpush1.msra.mxu0 0.0
        %2267 = vmatprep.subr.mxu0 0.0
        %2268 = vmatpush1.msra.mxu0 0.0
        %2269 = vmatprep.subr.mxu0 0.0
        %2270 = vmatpush1.msra.mxu0 0.0
        %2271 = vmatprep.subr.mxu0 0.0
        %2272 = vmatpush1.msra.mxu0 0.0
        %2273 = vmatprep.subr.mxu0 0.0
        %2274 = vmatpush1.msra.mxu0 0.0
        %2275 = vmatprep.subr.mxu0 0.0
        %2276 = vmatpush1.msra.mxu0 0.0
        %2277 = vmatprep.subr.mxu0 0.0
        %2278 = vmatpush1.msra.mxu0 0.0
        %2279 = vmatprep.subr.mxu0 0.0
        %2280 = vmatpush1.msra.mxu0 0.0
        %2281 = vmatprep.subr.mxu0 0.0
        %2282 = vmatpush1.msra.mxu0 %v2246
        %2283 = vmatprep.subr.mxu0 0.0
        %2284 = vmatpush2.msra.mxu0 0.0
        %2285 = vmatprep.subr.mxu0 0.0
        %2286 = vmatpush2.msra.mxu0 0.0
        %2287 = vmatprep.subr.mxu0 0.0
        %2288 = vmatpush2.msra.mxu0 0.0
        %2289 = vmatprep.subr.mxu0 0.0
        %2290 = vmatpush2.msra.mxu0 0.0
        %2291 = vmatprep.subr.mxu0 0.0
        %2292 = vmatpush2.msra.mxu0 0.0
        %2293 = vmatprep.subr.mxu0 0.0
        %2294 = vmatpush2.msra.mxu0 0.0
        %2295 = vmatprep.subr.mxu0 0.0
        %2296 = vmatpush2.msra.mxu0 0.0
        %2297 = vmatprep.subr.mxu0 0.0
        %2298 = vmatpush2.msra.mxu0 0.0
        %2299 = vmatprep.subr.mxu0 0.0
        %2300 = vmatpush2.msra.mxu0 0.0
        %2301 = vmatprep.subr.mxu0 0.0
        %2302 = vmatpush2.msra.mxu0 0.0
        %2303 = vmatprep.subr.mxu0 0.0
        %2304 = vmatpush2.msra.mxu0 0.0
        %2305 = vmatprep.subr.mxu0 0.0
        %2306 = vmatpush2.msra.mxu0 0.0
        %2307 = vmatprep.subr.mxu0 0.0
        %2308 = vmatpush2.msra.mxu0 0.0
        %2309 = vmatprep.subr.mxu0 0.0
        %2310 = vmatpush2.msra.mxu0 0.0
        %2311 = vmatprep.subr.mxu0 0.0
        %2312 = vmatpush2.msra.mxu0 0.0
        %2313 = vmatprep.subr.mxu0 0.0
        %2314 = vmatpush2.msra.mxu0 0.0
        %2315 = vmatprep.mubr.f32.mxu0 0.0
        %2316 = vmatmul.mubr.f32.gmra.mxu0 %v2249
        %v2317 = vpop.f32.mrf.mxu0
        %v2318 = vadd.f32 0.0, %v2317
        %v2319 = vpop.f32.mrf.mxu0
        %2320 = vdwg.mxu0
        %2321 = vrot.lane.b32.xlu0 %v1740, 112
        %v2322 = vpop.permute.xlu0 %2321
        %v2325 = vsel %vm504, %v2166, 0
        %2327 = vmatprep.subr.mxu0 0.0
        %2328 = vmatpush1.msra.mxu0 0.0
        %2329 = vmatprep.subr.mxu0 0.0
        %2330 = vmatpush1.msra.mxu0 0.0
        %2331 = vmatprep.subr.mxu0 0.0
        %2332 = vmatpush1.msra.mxu0 0.0
        %2333 = vmatprep.subr.mxu0 0.0
        %2334 = vmatpush1.msra.mxu0 0.0
        %2335 = vmatprep.subr.mxu0 0.0
        %2336 = vmatpush1.msra.mxu0 0.0
        %2337 = vmatprep.subr.mxu0 0.0
        %2338 = vmatpush1.msra.mxu0 0.0
        %2339 = vmatprep.subr.mxu0 0.0
        %2340 = vmatpush1.msra.mxu0 0.0
        %2341 = vmatprep.subr.mxu0 0.0
        %2342 = vmatpush1.msra.mxu0 0.0
        %2343 = vmatprep.subr.mxu0 0.0
        %2344 = vmatpush1.msra.mxu0 0.0
        %2345 = vmatprep.subr.mxu0 0.0
        %2346 = vmatpush1.msra.mxu0 0.0
        %2347 = vmatprep.subr.mxu0 0.0
        %2348 = vmatpush1.msra.mxu0 0.0
        %2349 = vmatprep.subr.mxu0 0.0
        %2350 = vmatpush1.msra.mxu0 0.0
        %2351 = vmatprep.subr.mxu0 0.0
        %2352 = vmatpush1.msra.mxu0 0.0
        %2353 = vmatprep.subr.mxu0 0.0
        %2354 = vmatpush1.msra.mxu0 0.0
        %2355 = vmatprep.subr.mxu0 0.0
        %2356 = vmatpush1.msra.mxu0 0.0
        %2357 = vmatprep.subr.mxu0 0.0
        %2358 = vmatpush1.msra.mxu0 %v2322
        %2359 = vmatprep.subr.mxu0 0.0
        %2360 = vmatpush2.msra.mxu0 0.0
        %2361 = vmatprep.subr.mxu0 0.0
        %2362 = vmatpush2.msra.mxu0 0.0
        %2363 = vmatprep.subr.mxu0 0.0
        %2364 = vmatpush2.msra.mxu0 0.0
        %2365 = vmatprep.subr.mxu0 0.0
        %2366 = vmatpush2.msra.mxu0 0.0
        %2367 = vmatprep.subr.mxu0 0.0
        %2368 = vmatpush2.msra.mxu0 0.0
        %2369 = vmatprep.subr.mxu0 0.0
        %2370 = vmatpush2.msra.mxu0 0.0
        %2371 = vmatprep.subr.mxu0 0.0
        %2372 = vmatpush2.msra.mxu0 0.0
        %2373 = vmatprep.subr.mxu0 0.0
        %2374 = vmatpush2.msra.mxu0 0.0
        %2375 = vmatprep.subr.mxu0 0.0
        %2376 = vmatpush2.msra.mxu0 0.0
        %2377 = vmatprep.subr.mxu0 0.0
        %2378 = vmatpush2.msra.mxu0 0.0
        %2379 = vmatprep.subr.mxu0 0.0
        %2380 = vmatpush2.msra.mxu0 0.0
        %2381 = vmatprep.subr.mxu0 0.0
        %2382 = vmatpush2.msra.mxu0 0.0
        %2383 = vmatprep.subr.mxu0 0.0
        %2384 = vmatpush2.msra.mxu0 0.0
        %2385 = vmatprep.subr.mxu0 0.0
        %2386 = vmatpush2.msra.mxu0 0.0
        %2387 = vmatprep.subr.mxu0 0.0
        %2388 = vmatpush2.msra.mxu0 0.0
        %2389 = vmatprep.subr.mxu0 0.0
        %2390 = vmatpush2.msra.mxu0 0.0
        %2391 = vmatprep.mubr.f32.mxu0 0.0
        %2392 = vmatmul.mubr.f32.gmra.mxu0 %v2325
        %v2393 = vpop.f32.mrf.mxu0
        %v2394 = vadd.f32 0.0, %v2393
        %v2395 = vpop.f32.mrf.mxu0
        %2396 = vdwg.mxu0
        %2397 = vrot.lane.b32.xlu0 %v1810, 112
        %v2398 = vpop.permute.xlu0 %2397
        %v2401 = vsel %vm504, %v2168, 0
        %2403 = vmatprep.subr.mxu0 0.0
        %2404 = vmatpush1.msra.mxu0 0.0
        %2405 = vmatprep.subr.mxu0 0.0
        %2406 = vmatpush1.msra.mxu0 0.0
        %2407 = vmatprep.subr.mxu0 0.0
        %2408 = vmatpush1.msra.mxu0 0.0
        %2409 = vmatprep.subr.mxu0 0.0
        %2410 = vmatpush1.msra.mxu0 0.0
        %2411 = vmatprep.subr.mxu0 0.0
        %2412 = vmatpush1.msra.mxu0 0.0
        %2413 = vmatprep.subr.mxu0 0.0
        %2414 = vmatpush1.msra.mxu0 0.0
        %2415 = vmatprep.subr.mxu0 0.0
        %2416 = vmatpush1.msra.mxu0 0.0
        %2417 = vmatprep.subr.mxu0 0.0
        %2418 = vmatpush1.msra.mxu0 0.0
        %2419 = vmatprep.subr.mxu0 0.0
        %2420 = vmatpush1.msra.mxu0 0.0
        %2421 = vmatprep.subr.mxu0 0.0
        %2422 = vmatpush1.msra.mxu0 0.0
        %2423 = vmatprep.subr.mxu0 0.0
        %2424 = vmatpush1.msra.mxu0 0.0
        %2425 = vmatprep.subr.mxu0 0.0
        %2426 = vmatpush1.msra.mxu0 0.0
        %2427 = vmatprep.subr.mxu0 0.0
        %2428 = vmatpush1.msra.mxu0 0.0
        %2429 = vmatprep.subr.mxu0 0.0
        %2430 = vmatpush1.msra.mxu0 0.0
        %2431 = vmatprep.subr.mxu0 0.0
        %2432 = vmatpush1.msra.mxu0 0.0
        %2433 = vmatprep.subr.mxu0 0.0
        %2434 = vmatpush1.msra.mxu0 %v2398
        %2435 = vmatprep.subr.mxu0 0.0
        %2436 = vmatpush2.msra.mxu0 0.0
        %2437 = vmatprep.subr.mxu0 0.0
        %2438 = vmatpush2.msra.mxu0 0.0
        %2439 = vmatprep.subr.mxu0 0.0
        %2440 = vmatpush2.msra.mxu0 0.0
        %2441 = vmatprep.subr.mxu0 0.0
        %2442 = vmatpush2.msra.mxu0 0.0
        %2443 = vmatprep.subr.mxu0 0.0
        %2444 = vmatpush2.msra.mxu0 0.0
        %2445 = vmatprep.subr.mxu0 0.0
        %2446 = vmatpush2.msra.mxu0 0.0
        %2447 = vmatprep.subr.mxu0 0.0
        %2448 = vmatpush2.msra.mxu0 0.0
        %2449 = vmatprep.subr.mxu0 0.0
        %2450 = vmatpush2.msra.mxu0 0.0
        %2451 = vmatprep.subr.mxu0 0.0
        %2452 = vmatpush2.msra.mxu0 0.0
        %2453 = vmatprep.subr.mxu0 0.0
        %2454 = vmatpush2.msra.mxu0 0.0
        %2455 = vmatprep.subr.mxu0 0.0
        %2456 = vmatpush2.msra.mxu0 0.0
        %2457 = vmatprep.subr.mxu0 0.0
        %2458 = vmatpush2.msra.mxu0 0.0
        %2459 = vmatprep.subr.mxu0 0.0
        %2460 = vmatpush2.msra.mxu0 0.0
        %2461 = vmatprep.subr.mxu0 0.0
        %2462 = vmatpush2.msra.mxu0 0.0
        %2463 = vmatprep.subr.mxu0 0.0
        %2464 = vmatpush2.msra.mxu0 0.0
        %2465 = vmatprep.subr.mxu0 0.0
        %2466 = vmatpush2.msra.mxu0 0.0
        %2467 = vmatprep.mubr.f32.mxu0 0.0
        %2468 = vmatmul.mubr.f32.gmra.mxu0 %v2401
        %v2469 = vpop.f32.mrf.mxu0
        %v2470 = vadd.f32 0.0, %v2469
        %v2471 = vpop.f32.mrf.mxu0
        %2472 = vdwg.mxu0
        %2474 = vrot.lane.b32.xlu0 %v2318, 8
        %v2475 = vpop.permute.xlu0 %2474
        %2478 = vrot.lane.b32.xlu0 %v2394, 16
        %v2479 = vpop.permute.xlu0 %2478
        %2482 = vrot.lane.b32.xlu0 %v2470, 24
        %v2483 = vpop.permute.xlu0 %2482
        %v2485 = vsel %vm504, %v2242, %v2475
        %v2486 = vsel %vm1175, %v2485, %v2479
        %v2487 = vsel %vm1177, %v2486, %v2483
        %v2488 = vlaneseq
        %v2489 = vshrl.u32 %v2488, 7
        %v2490 = vsub.s32 0, %v2489
        %v2491 = vrot.slane %v1511, %v2490
        %v2493 = vsel %vm217, %v2487, 0
        %2495 = vmatprep.subr.mxu0 0.0
        %2496 = vmatpush1.msra.mxu0 0.0
        %2497 = vmatprep.subr.mxu0 0.0
        %2498 = vmatpush1.msra.mxu0 0.0
        %2499 = vmatprep.subr.mxu0 0.0
        %2500 = vmatpush1.msra.mxu0 0.0
        %2501 = vmatprep.subr.mxu0 0.0
        %2502 = vmatpush1.msra.mxu0 0.0
        %2503 = vmatprep.subr.mxu0 0.0
        %2504 = vmatpush1.msra.mxu0 0.0
        %2505 = vmatprep.subr.mxu0 0.0
        %2506 = vmatpush1.msra.mxu0 0.0
        %2507 = vmatprep.subr.mxu0 0.0
        %2508 = vmatpush1.msra.mxu0 0.0
        %2509 = vmatprep.subr.mxu0 0.0
        %2510 = vmatpush1.msra.mxu0 0.0
        %2511 = vmatprep.subr.mxu0 0.0
        %2512 = vmatpush1.msra.mxu0 0.0
        %2513 = vmatprep.subr.mxu0 0.0
        %2514 = vmatpush1.msra.mxu0 0.0
        %2515 = vmatprep.subr.mxu0 0.0
        %2516 = vmatpush1.msra.mxu0 0.0
        %2517 = vmatprep.subr.mxu0 0.0
        %2518 = vmatpush1.msra.mxu0 0.0
        %2519 = vmatprep.subr.mxu0 0.0
        %2520 = vmatpush1.msra.mxu0 %v1510
        %2521 = vmatprep.subr.mxu0 0.0
        %2522 = vmatpush1.msra.mxu0 %v1509
        %2523 = vmatprep.subr.mxu0 0.0
        %2524 = vmatpush1.msra.mxu0 %v1508
        %2525 = vmatprep.subr.mxu0 0.0
        %2526 = vmatpush1.msra.mxu0 %v1507
        %2527 = vmatprep.subr.mxu0 0.0
        %2528 = vmatpush2.msra.mxu0 0.0
        %2529 = vmatprep.subr.mxu0 0.0
        %2530 = vmatpush2.msra.mxu0 0.0
        %2531 = vmatprep.subr.mxu0 0.0
        %2532 = vmatpush2.msra.mxu0 0.0
        %2533 = vmatprep.subr.mxu0 0.0
        %2534 = vmatpush2.msra.mxu0 0.0
        %2535 = vmatprep.subr.mxu0 0.0
        %2536 = vmatpush2.msra.mxu0 0.0
        %2537 = vmatprep.subr.mxu0 0.0
        %2538 = vmatpush2.msra.mxu0 0.0
        %2539 = vmatprep.subr.mxu0 0.0
        %2540 = vmatpush2.msra.mxu0 0.0
        %2541 = vmatprep.subr.mxu0 0.0
        %2542 = vmatpush2.msra.mxu0 0.0
        %2543 = vmatprep.subr.mxu0 0.0
        %2544 = vmatpush2.msra.mxu0 0.0
        %2545 = vmatprep.subr.mxu0 0.0
        %2546 = vmatpush2.msra.mxu0 0.0
        %2547 = vmatprep.subr.mxu0 0.0
        %2548 = vmatpush2.msra.mxu0 0.0
        %2549 = vmatprep.subr.mxu0 0.0
        %2550 = vmatpush2.msra.mxu0 0.0
        %2551 = vmatprep.subr.mxu0 0.0
        %2552 = vmatpush2.msra.mxu0 0.0
        %2553 = vmatprep.subr.mxu0 0.0
        %2554 = vmatpush2.msra.mxu0 0.0
        %2555 = vmatprep.subr.mxu0 0.0
        %2556 = vmatpush2.msra.mxu0 0.0
        %2557 = vmatprep.subr.mxu0 0.0
        %2558 = vmatpush2.msra.mxu0 0.0
        %2559 = vmatprep.mubr.f32.mxu0 0.0
        %2560 = vmatmul.mubr.f32.gmra.mxu0 %v2493
        %v2561 = vpop.f32.mrf.mxu0
        %v2562 = vadd.f32 %v2491, %v2561
        %v2563 = vpop.f32.mrf.mxu0
        %2564 = vdwg.mxu0
        %v2565 = vadd.f32 %v1486, %v2562
        %v2566 = vsel %vm217, %v2565, 0.0
        %2567 = vadd.xlane.f32.xlu0 %v2566
        %v2568 = vpop.xlane.xlu0 %2567
        %v2569 = vmul.f32 %v2568, %v1260
        %v2570 = vsub.f32 %v2565, %v2569
        %v2571 = vmul.f32 %v2570, %v2570
        %v2572 = vsel %vm217, %v2571, 0.0
        %2573 = vadd.xlane.f32.xlu0 %v2572
        %v2574 = vpop.xlane.xlu0 %2573
        %v2575 = vmul.f32 %v2574, %v1260
        %v2576 = vadd.f32 %v2575, 1e-05
        %v2577 = vrsqrt.pop %v2576
        %v2578 = vmul.f32 %v2570, %v2577
        %v2579 = vlaneseq
        %v2580 = vshrl.u32 %v2579, 7
        %v2581 = vsub.s32 0, %v2580
        %v2582 = vrot.slane %v1512, %v2581
        %v2583 = vmul.f32 %v2578, %v2582
        %v2584 = vlaneseq
        %v2585 = vshrl.u32 %v2584, 7
        %v2586 = vsub.s32 0, %v2585
        %v2587 = vrot.slane %v1513, %v2586
        %v2588 = vadd.f32 %v2583, %v2587
        %v2589 = vlaneseq
        %v2590 = vshrl.u32 %v2589, 7
        %v2591 = vsub.s32 0, %v2590
        %v2592 = vrot.slane %v1518, %v2591
        %v2594 = vsel %vm217, %v2588, 0
        %2596 = vmatprep.subr.mxu0 0.0
        %2597 = vmatpush1.msra.mxu0 0.0
        %2598 = vmatprep.subr.mxu0 0.0
        %2599 = vmatpush1.msra.mxu0 0.0
        %2600 = vmatprep.subr.mxu0 0.0
        %2601 = vmatpush1.msra.mxu0 0.0
        %2602 = vmatprep.subr.mxu0 0.0
        %2603 = vmatpush1.msra.mxu0 0.0
        %2604 = vmatprep.subr.mxu0 0.0
        %2605 = vmatpush1.msra.mxu0 0.0
        %2606 = vmatprep.subr.mxu0 0.0
        %2607 = vmatpush1.msra.mxu0 0.0
        %2608 = vmatprep.subr.mxu0 0.0
        %2609 = vmatpush1.msra.mxu0 0.0
        %2610 = vmatprep.subr.mxu0 0.0
        %2611 = vmatpush1.msra.mxu0 0.0
        %2612 = vmatprep.subr.mxu0 0.0
        %2613 = vmatpush1.msra.mxu0 0.0
        %2614 = vmatprep.subr.mxu0 0.0
        %2615 = vmatpush1.msra.mxu0 0.0
        %2616 = vmatprep.subr.mxu0 0.0
        %2617 = vmatpush1.msra.mxu0 0.0
        %2618 = vmatprep.subr.mxu0 0.0
        %2619 = vmatpush1.msra.mxu0 0.0
        %2620 = vmatprep.subr.mxu0 0.0
        %2621 = vmatpush1.msra.mxu0 %v1517
        %2622 = vmatprep.subr.mxu0 0.0
        %2623 = vmatpush1.msra.mxu0 %v1516
        %2624 = vmatprep.subr.mxu0 0.0
        %2625 = vmatpush1.msra.mxu0 %v1515
        %2626 = vmatprep.subr.mxu0 0.0
        %2627 = vmatpush1.msra.mxu0 %v1514
        %2628 = vmatprep.subr.mxu0 0.0
        %2629 = vmatpush2.msra.mxu0 0.0
        %2630 = vmatprep.subr.mxu0 0.0
        %2631 = vmatpush2.msra.mxu0 0.0
        %2632 = vmatprep.subr.mxu0 0.0
        %2633 = vmatpush2.msra.mxu0 0.0
        %2634 = vmatprep.subr.mxu0 0.0
        %2635 = vmatpush2.msra.mxu0 0.0
        %2636 = vmatprep.subr.mxu0 0.0
        %2637 = vmatpush2.msra.mxu0 0.0
        %2638 = vmatprep.subr.mxu0 0.0
        %2639 = vmatpush2.msra.mxu0 0.0
        %2640 = vmatprep.subr.mxu0 0.0
        %2641 = vmatpush2.msra.mxu0 0.0
        %2642 = vmatprep.subr.mxu0 0.0
        %2643 = vmatpush2.msra.mxu0 0.0
        %2644 = vmatprep.subr.mxu0 0.0
        %2645 = vmatpush2.msra.mxu0 0.0
        %2646 = vmatprep.subr.mxu0 0.0
        %2647 = vmatpush2.msra.mxu0 0.0
        %2648 = vmatprep.subr.mxu0 0.0
        %2649 = vmatpush2.msra.mxu0 0.0
        %2650 = vmatprep.subr.mxu0 0.0
        %2651 = vmatpush2.msra.mxu0 0.0
        %2652 = vmatprep.subr.mxu0 0.0
        %2653 = vmatpush2.msra.mxu0 0.0
        %2654 = vmatprep.subr.mxu0 0.0
        %2655 = vmatpush2.msra.mxu0 0.0
        %2656 = vmatprep.subr.mxu0 0.0
        %2657 = vmatpush2.msra.mxu0 0.0
        %2658 = vmatprep.subr.mxu0 0.0
        %2659 = vmatpush2.msra.mxu0 0.0
        %2660 = vmatprep.mubr.f32.mxu0 0.0
        %2661 = vmatmul.mubr.f32.gmra.mxu0 %v2594
        %v2662 = vpop.f32.mrf.mxu0
        %v2663 = vadd.f32 %v2592, %v2662
        %v2664 = vpop.f32.mrf.mxu0
        %2665 = vdwg.mxu0
        %v2666 = vmul.f32 %v2663, 0.5
        %v2667 = vmul.f32 %v2663, 0.70710677
        %v2668 = vand.u32 2147483647, %v2667
        %v2669 = vmul.f32 %v2668, 0.3275911
        %v2670 = vadd.f32 %v2669, 1.0
        %v2671 = vrcp.pop %v2670
        %v2672 = vmul.f32 1.0, %v2671
        %v2673 = vmul.f32 %v2672, 1.0614054
        %v2674 = vadd.f32 %v2673, -1.4531521
        %v2675 = vmul.f32 %v2674, %v2672
        %v2676 = vadd.f32 %v2675, 1.4214138
        %v2677 = vmul.f32 %v2676, %v2672
        %v2678 = vadd.f32 %v2677, -0.28449672
        %v2679 = vmul.f32 %v2678, %v2672
        %v2680 = vadd.f32 %v2679, 0.2548296
        %v2681 = vmul.f32 %v2680, %v2672
        %v2682 = vsub.f32 0.0, %v2668
        %v2683 = vmul.f32 %v2682, %v2668
        %v2684 = vmul.f32 %v2683, 1.442695
        %v2685 = vpow.pop %v2684
        %v2686 = vmul.f32 %v2681, %v2685
        %v2687 = vsub.f32 1.0, %v2686
        %vm2688 = vcmp.lt.f32.partialorder %v2667, 0.0
        %v2689 = vsub.f32 0.0, %v2687
        %v2690 = vsel %vm2688, %v2689, %v2687
        %v2691 = vadd.f32 %v2690, 1.0
        %v2692 = vmul.f32 %v2666, %v2691
        %v2693 = vlaneseq
        %v2694 = vshrl.u32 %v2693, 7
        %v2695 = vsub.s32 0, %v2694
        %v2696 = vrot.slane %v1527, %v2695
        %v2698 = vsel %vm1389, %v2692, 0
        %2700 = vmatprep.subr.mxu0 0.0
        %2701 = vmatpush1.msra.mxu0 0.0
        %2702 = vmatprep.subr.mxu0 0.0
        %2703 = vmatpush1.msra.mxu0 0.0
        %2704 = vmatprep.subr.mxu0 0.0
        %2705 = vmatpush1.msra.mxu0 0.0
        %2706 = vmatprep.subr.mxu0 0.0
        %2707 = vmatpush1.msra.mxu0 0.0
        %2708 = vmatprep.subr.mxu0 0.0
        %2709 = vmatpush1.msra.mxu0 0.0
        %2710 = vmatprep.subr.mxu0 0.0
        %2711 = vmatpush1.msra.mxu0 0.0
        %2712 = vmatprep.subr.mxu0 0.0
        %2713 = vmatpush1.msra.mxu0 0.0
        %2714 = vmatprep.subr.mxu0 0.0
        %2715 = vmatpush1.msra.mxu0 0.0
        %2716 = vmatprep.subr.mxu0 0.0
        %2717 = vmatpush1.msra.mxu0 %v1526
        %2718 = vmatprep.subr.mxu0 0.0
        %2719 = vmatpush1.msra.mxu0 %v1525
        %2720 = vmatprep.subr.mxu0 0.0
        %2721 = vmatpush1.msra.mxu0 %v1524
        %2722 = vmatprep.subr.mxu0 0.0
        %2723 = vmatpush1.msra.mxu0 %v1523
        %2724 = vmatprep.subr.mxu0 0.0
        %2725 = vmatpush1.msra.mxu0 %v1522
        %2726 = vmatprep.subr.mxu0 0.0
        %2727 = vmatpush1.msra.mxu0 %v1521
        %2728 = vmatprep.subr.mxu0 0.0
        %2729 = vmatpush1.msra.mxu0 %v1520
        %2730 = vmatprep.subr.mxu0 0.0
        %2731 = vmatpush1.msra.mxu0 %v1519
        %2732 = vmatprep.subr.mxu0 0.0
        %2733 = vmatpush2.msra.mxu0 0.0
        %2734 = vmatprep.subr.mxu0 0.0
        %2735 = vmatpush2.msra.mxu0 0.0
        %2736 = vmatprep.subr.mxu0 0.0
        %2737 = vmatpush2.msra.mxu0 0.0
        %2738 = vmatprep.subr.mxu0 0.0
        %2739 = vmatpush2.msra.mxu0 0.0
        %2740 = vmatprep.subr.mxu0 0.0
        %2741 = vmatpush2.msra.mxu0 0.0
        %2742 = vmatprep.subr.mxu0 0.0
        %2743 = vmatpush2.msra.mxu0 0.0
        %2744 = vmatprep.subr.mxu0 0.0
        %2745 = vmatpush2.msra.mxu0 0.0
        %2746 = vmatprep.subr.mxu0 0.0
        %2747 = vmatpush2.msra.mxu0 0.0
        %2748 = vmatprep.subr.mxu0 0.0
        %2749 = vmatpush2.msra.mxu0 0.0
        %2750 = vmatprep.subr.mxu0 0.0
        %2751 = vmatpush2.msra.mxu0 0.0
        %2752 = vmatprep.subr.mxu0 0.0
        %2753 = vmatpush2.msra.mxu0 0.0
        %2754 = vmatprep.subr.mxu0 0.0
        %2755 = vmatpush2.msra.mxu0 0.0
        %2756 = vmatprep.subr.mxu0 0.0
        %2757 = vmatpush2.msra.mxu0 0.0
        %2758 = vmatprep.subr.mxu0 0.0
        %2759 = vmatpush2.msra.mxu0 0.0
        %2760 = vmatprep.subr.mxu0 0.0
        %2761 = vmatpush2.msra.mxu0 0.0
        %2762 = vmatprep.subr.mxu0 0.0
        %2763 = vmatpush2.msra.mxu0 0.0
        %2764 = vmatprep.mubr.f32.mxu0 0.0
        %2765 = vmatmul.mubr.f32.gmra.mxu0 %v2698
        %v2766 = vpop.f32.mrf.mxu0
        %v2767 = vadd.f32 %v2696, %v2766
        %v2768 = vpop.f32.mrf.mxu0
        %2769 = vdwg.mxu0
        %v2770 = vadd.f32 %v2588, %v2767
        %v2771 = vsel %vm217, %v2770, 0.0
        %2772 = vadd.xlane.f32.xlu0 %v2771
        %v2773 = vpop.xlane.xlu0 %2772
        %v2774 = vmul.f32 %v2773, %v1260
        %v2775 = vsub.f32 %v2770, %v2774
        %v2776 = vmul.f32 %v2775, %v2775
        %v2777 = vsel %vm217, %v2776, 0.0
        %2778 = vadd.xlane.f32.xlu0 %v2777
        %v2779 = vpop.xlane.xlu0 %2778
        %v2780 = vmul.f32 %v2779, %v1260
        %v2781 = vadd.f32 %v2780, 1e-05
        %v2782 = vrsqrt.pop %v2781
        %v2783 = vmul.f32 %v2775, %v2782
        %v2784 = vlaneseq
        %v2785 = vshrl.u32 %v2784, 7
        %v2786 = vsub.s32 0, %v2785
        %v2787 = vrot.slane %v1528, %v2786
        %v2788 = vmul.f32 %v2783, %v2787
        %v2789 = vlaneseq
        %v2790 = vshrl.u32 %v2789, 7
        %v2791 = vsub.s32 0, %v2790
        %v2792 = vrot.slane %v1529, %v2791
        %v2793 = vadd.f32 %v2788, %v2792
        %v2794 = vld [vmem:[#allocation5 + $0x2b0] sm:$0xff]
        %v2795 = vld [vmem:[#allocation5 + $0x2b8] sm:$0xff]
        %v2796 = vld [vmem:[#allocation5 + $0x2c0] sm:$0xff]
        %v2797 = vld [vmem:[#allocation5 + $0x2c8] sm:$0xff]
        %v2798 = vld [vmem:[#allocation5 + $0x2d0] sm:$0x1]
        %v2799 = vlaneseq
        %v2800 = vshrl.u32 %v2799, 7
        %v2801 = vsub.s32 0, %v2800
        %v2802 = vrot.slane %v2798, %v2801
        %v2804 = vsel %vm217, %v2793, 0
        %2806 = vmatprep.subr.mxu0 0.0
        %2807 = vmatpush1.msra.mxu0 0.0
        %2808 = vmatprep.subr.mxu0 0.0
        %2809 = vmatpush1.msra.mxu0 0.0
        %2810 = vmatprep.subr.mxu0 0.0
        %2811 = vmatpush1.msra.mxu0 0.0
        %2812 = vmatprep.subr.mxu0 0.0
        %2813 = vmatpush1.msra.mxu0 0.0
        %2814 = vmatprep.subr.mxu0 0.0
        %2815 = vmatpush1.msra.mxu0 0.0
        %2816 = vmatprep.subr.mxu0 0.0
        %2817 = vmatpush1.msra.mxu0 0.0
        %2818 = vmatprep.subr.mxu0 0.0
        %2819 = vmatpush1.msra.mxu0 0.0
        %2820 = vmatprep.subr.mxu0 0.0
        %2821 = vmatpush1.msra.mxu0 0.0
        %2822 = vmatprep.subr.mxu0 0.0
        %2823 = vmatpush1.msra.mxu0 0.0
        %2824 = vmatprep.subr.mxu0 0.0
        %2825 = vmatpush1.msra.mxu0 0.0
        %2826 = vmatprep.subr.mxu0 0.0
        %2827 = vmatpush1.msra.mxu0 0.0
        %2828 = vmatprep.subr.mxu0 0.0
        %2829 = vmatpush1.msra.mxu0 0.0
        %2830 = vmatprep.subr.mxu0 0.0
        %2831 = vmatpush1.msra.mxu0 %v2797
        %2832 = vmatprep.subr.mxu0 0.0
        %2833 = vmatpush1.msra.mxu0 %v2796
        %2834 = vmatprep.subr.mxu0 0.0
        %2835 = vmatpush1.msra.mxu0 %v2795
        %2836 = vmatprep.subr.mxu0 0.0
        %2837 = vmatpush1.msra.mxu0 %v2794
        %2838 = vmatprep.subr.mxu0 0.0
        %2839 = vmatpush2.msra.mxu0 0.0
        %2840 = vmatprep.subr.mxu0 0.0
        %2841 = vmatpush2.msra.mxu0 0.0
        %2842 = vmatprep.subr.mxu0 0.0
        %2843 = vmatpush2.msra.mxu0 0.0
        %2844 = vmatprep.subr.mxu0 0.0
        %2845 = vmatpush2.msra.mxu0 0.0
        %2846 = vmatprep.subr.mxu0 0.0
        %2847 = vmatpush2.msra.mxu0 0.0
        %2848 = vmatprep.subr.mxu0 0.0
        %2849 = vmatpush2.msra.mxu0 0.0
        %2850 = vmatprep.subr.mxu0 0.0
        %2851 = vmatpush2.msra.mxu0 0.0
        %2852 = vmatprep.subr.mxu0 0.0
        %2853 = vmatpush2.msra.mxu0 0.0
        %2854 = vmatprep.subr.mxu0 0.0
        %2855 = vmatpush2.msra.mxu0 0.0
        %2856 = vmatprep.subr.mxu0 0.0
        %2857 = vmatpush2.msra.mxu0 0.0
        %2858 = vmatprep.subr.mxu0 0.0
        %2859 = vmatpush2.msra.mxu0 0.0
        %2860 = vmatprep.subr.mxu0 0.0
        %2861 = vmatpush2.msra.mxu0 0.0
        %2862 = vmatprep.subr.mxu0 0.0
        %2863 = vmatpush2.msra.mxu0 0.0
        %2864 = vmatprep.subr.mxu0 0.0
        %2865 = vmatpush2.msra.mxu0 0.0
        %2866 = vmatprep.subr.mxu0 0.0
        %2867 = vmatpush2.msra.mxu0 0.0
        %2868 = vmatprep.subr.mxu0 0.0
        %2869 = vmatpush2.msra.mxu0 0.0
        %2870 = vmatprep.mubr.f32.mxu0 0.0
        %2871 = vmatmul.mubr.f32.gmra.mxu0 %v2804
        %v2872 = vpop.f32.mrf.mxu0
        %v2873 = vadd.f32 %v2802, %v2872
        %v2874 = vpop.f32.mrf.mxu0
        %2875 = vdwg.mxu0
        %v2876 = vld [vmem:[#allocation5 + $0x2d8] sm:$0x1]
        %v2877 = vld [vmem:[#allocation5 + $0x2e0] sm:$0x1]
        %2879 = vset.pattern.permute.xlu0 0
        %2880 = vperm.xlu0 %2879, %v2877
        %v2881 = vpop.permute.xlu0 %2880
        %vm2883 = vcmask 392192
        %v2885 = vsel %vm2883, %v2876, 0
        %v2888 = vsel %vm2883, %v2873, 0
        %2890 = vmatprep.subr.mxu0 0.0
        %2891 = vmatpush1.xpose.msra.mxu0 0.0
        %2892 = vmatprep.subr.mxu0 0.0
        %2893 = vmatpush1.xpose.msra.mxu0 0.0
        %2894 = vmatprep.subr.mxu0 0.0
        %2895 = vmatpush1.xpose.msra.mxu0 0.0
        %2896 = vmatprep.subr.mxu0 0.0
        %2897 = vmatpush1.xpose.msra.mxu0 0.0
        %2898 = vmatprep.subr.mxu0 0.0
        %2899 = vmatpush1.xpose.msra.mxu0 0.0
        %2900 = vmatprep.subr.mxu0 0.0
        %2901 = vmatpush1.xpose.msra.mxu0 0.0
        %2902 = vmatprep.subr.mxu0 0.0
        %2903 = vmatpush1.xpose.msra.mxu0 0.0
        %2904 = vmatprep.subr.mxu0 0.0
        %2905 = vmatpush1.xpose.msra.mxu0 0.0
        %2906 = vmatprep.subr.mxu0 0.0
        %2907 = vmatpush1.xpose.msra.mxu0 0.0
        %2908 = vmatprep.subr.mxu0 0.0
        %2909 = vmatpush1.xpose.msra.mxu0 0.0
        %2910 = vmatprep.subr.mxu0 0.0
        %2911 = vmatpush1.xpose.msra.mxu0 0.0
        %2912 = vmatprep.subr.mxu0 0.0
        %2913 = vmatpush1.xpose.msra.mxu0 0.0
        %2914 = vmatprep.subr.mxu0 0.0
        %2915 = vmatpush1.xpose.msra.mxu0 0.0
        %2916 = vmatprep.subr.mxu0 0.0
        %2917 = vmatpush1.xpose.msra.mxu0 0.0
        %2918 = vmatprep.subr.mxu0 0.0
        %2919 = vmatpush1.xpose.msra.mxu0 0.0
        %2920 = vmatprep.subr.mxu0 0.0
        %2921 = vmatpush1.xpose.msra.mxu0 %v2888
        %2922 = vmatprep.subr.mxu0 0.0
        %2923 = vmatpush2.xpose.msra.mxu0 0.0
        %2924 = vmatprep.subr.mxu0 0.0
        %2925 = vmatpush2.xpose.msra.mxu0 0.0
        %2926 = vmatprep.subr.mxu0 0.0
        %2927 = vmatpush2.xpose.msra.mxu0 0.0
        %2928 = vmatprep.subr.mxu0 0.0
        %2929 = vmatpush2.xpose.msra.mxu0 0.0
        %2930 = vmatprep.subr.mxu0 0.0
        %2931 = vmatpush2.xpose.msra.mxu0 0.0
        %2932 = vmatprep.subr.mxu0 0.0
        %2933 = vmatpush2.xpose.msra.mxu0 0.0
        %2934 = vmatprep.subr.mxu0 0.0
        %2935 = vmatpush2.xpose.msra.mxu0 0.0
        %2936 = vmatprep.subr.mxu0 0.0
        %2937 = vmatpush2.xpose.msra.mxu0 0.0
        %2938 = vmatprep.subr.mxu0 0.0
        %2939 = vmatpush2.xpose.msra.mxu0 0.0
        %2940 = vmatprep.subr.mxu0 0.0
        %2941 = vmatpush2.xpose.msra.mxu0 0.0
        %2942 = vmatprep.subr.mxu0 0.0
        %2943 = vmatpush2.xpose.msra.mxu0 0.0
        %2944 = vmatprep.subr.mxu0 0.0
        %2945 = vmatpush2.xpose.msra.mxu0 0.0
        %2946 = vmatprep.subr.mxu0 0.0
        %2947 = vmatpush2.xpose.msra.mxu0 0.0
        %2948 = vmatprep.subr.mxu0 0.0
        %2949 = vmatpush2.xpose.msra.mxu0 0.0
        %2950 = vmatprep.subr.mxu0 0.0
        %2951 = vmatpush2.xpose.msra.mxu0 0.0
        %2952 = vmatprep.subr.mxu0 0.0
        %2953 = vmatpush2.xpose.msra.mxu0 0.0
        %2954 = vmatprep.mubr.f32.mxu0 0.0
        %2955 = vmatmul.mubr.f32.gmra.mxu0 %v2885
        %v2956 = vpop.f32.mrf.mxu0
        %v2957 = vadd.f32 %v2881, %v2956
        %v2958 = vpop.f32.mrf.mxu0
        %2959 = vdwg.mxu0
        %vm2960 = vcmask 57344
        %2961 = vst.msk [vmem:[%s172] sm:$0x1] %vm2960, %v2957
        %s2962 = sand.u32 %s75, 1
        %s2963 = scalar_lea.sflag [#allocation4], %s2962
        %s2964 = sand.u32 %s75, 1
        %s2965 = scalar_lea.vmem [#allocation7], %s2964
        // Predicated region
        $region37: #{tpu_custom_call.1} parent=27 // pred_check
          %p2966 = pneg %p85
        $region38: #{tpu_custom_call.1} parent=27 // pred_check_branch
          %2968 = sbr.rel (%p2966) target = $region40
        $region39: #{tpu_custom_call.1} parent=27 // pred_region
          %s2970 = ssub.s32 16, 16
          %2971 = vsyncadd %s2963, %s2970
          %s2972 = smul.addr %s20, 16
          %s2973 = scalar_lea.hbm %s2, %s2972
          %s2975 = sshll.u32 %s2965, 4
          %s2976 = int_to_ptr.vmem [resolvable:$true] %s2975
          %2978 = dma.vmem_to_hbm [thread:$0]  %s2976, 16, %s2973, %s2963
        $region40: #{tpu_custom_call.1} parent=27 // pred_fallthru
          _
      $region28: #{tpu_custom_call.1} parent=5 // pred_fallthru
        _
      %p2979 = scmp.le.s32.totalorder 2, %s15
      // Predicated region
      $region41: #{tpu_custom_call.1} parent=5 // pred_check
        %p2980 = pneg %p2979
      $region42: #{tpu_custom_call.1} parent=5 // pred_check_branch
        %2982 = sbr.rel (%p2980) target = $region44
      $region43: #{tpu_custom_call.1} parent=5 // pred_region
        %s2983 = ssub.s32 %s15, 2
        // Predicated region
        $region45: #{tpu_custom_call.1} parent=43 // pred_check
          %p2984 = pneg %p91
        $region46: #{tpu_custom_call.1} parent=43 // pred_check_branch
          %2986 = sbr.rel (%p2984) target = $region48
        $region47: #{tpu_custom_call.1} parent=43 // pred_region
          %s2987 = sand.u32 %s76, 1
          %s2988 = scalar_lea.sflag [#allocation4], %s2987
          %s2989 = sand.u32 %s76, 1
          %s2990 = scalar_lea.vmem [#allocation7], %s2989
          %2991 = dma.done %s2988, 16
        $region48: #{tpu_custom_call.1} parent=43 // pred_fallthru
          _
      $region44: #{tpu_custom_call.1} parent=5 // pred_fallthru
        _
    $region6: #{tpu_custom_call.1} parent=1 // loop_footer
      %s19 = sadd.s32 1, %s15
    $region7: #{tpu_custom_call.1} parent=1 // loop_footer_branch
      %14 = sbr.rel target = $region3
    $region8: #{tpu_custom_call.1} parent=1 // loop_exit
      _
    %2992 = vsyncpa [#allocation3], 1
    %s2993 = scalar_lea.sflag [#allocation3], 1
    %2994 = vsyncpa %s2993, 1
    %2995 = vsyncpa [#allocation6], 1
    %2996 = vsyncpa [#allocation4], 1
    %s2997 = scalar_lea.sflag [#allocation4], 1
    %2998 = vsyncpa %s2997, 1

</llo_original>
